<compile_context>
chip_gen: v5e
topology: v5e:2x2
jax: 0.10.0
libtpu: 0.0.40
codegen_flags: <defaults>
</compile_context>

<pallas_src>
import jax
import jax.numpy as jnp
from jax.experimental import pallas as pl
from jax.experimental.pallas import tpu as pltpu


def _round_up(x, m):
    return ((x + m - 1) // m) * m


def _make_rnn_kernel(L, TB, Bc, Hp, compute_dtype):
    """Kernel refs: x, h0, wx[0..L-1], wh_all, b_all | hs | h_state, act0, act1."""

    def kernel(*refs):
        x_ref, h0_ref = refs[0], refs[1]
        wx_refs = refs[2:2 + L]          # per-layer (in_l_p, Hp)
        wh_ref = refs[2 + L]             # (L, Hp, Hp)
        b_ref = refs[3 + L]              # (L, 1, Hp)
        hs_ref = refs[4 + L]             # (Bc, TB, Hp) output block
        h_state = refs[5 + L]            # (L, Bc, Hp) f32 scratch (carried over time)
        act = (refs[6 + L], refs[7 + L]) # ping-pong (Bc, TB, Hp) inter-layer activations

        tb = pl.program_id(1)

        @pl.when(tb == 0)
        def _():
            h_state[...] = h0_ref[...]

        for layer in range(L):
            if layer == 0:
                cur = x_ref[...]                         # (Bc, TB, Ep)
            else:
                cur = act[(layer - 1) % 2][...]          # (Bc, TB, Hp)

            # One big MXU matmul for the whole time block:
            #   concat([x, h]) @ W.T + b == x @ Wx.T + h @ Wh.T + b
            flat = cur.reshape(Bc * TB, cur.shape[-1]).astype(compute_dtype)
            wx = wx_refs[layer][...].astype(compute_dtype)
            xproj = jnp.dot(flat, wx, preferred_element_type=jnp.float32)
            xproj = xproj + b_ref[layer]                 # (Bc*TB, Hp) + (1, Hp)
            xproj = xproj.reshape(Bc, TB, Hp)

            wh = wh_ref[layer].astype(compute_dtype)     # (Hp, Hp)
            dst = hs_ref if layer == L - 1 else act[layer % 2]

            h = h_state[layer]                           # (Bc, Hp) f32
            for i in range(TB):                          # sequential recurrence
                z = xproj[:, i, :] + jnp.dot(h.astype(compute_dtype), wh,
                                             preferred_element_type=jnp.float32)
                h = jnp.tanh(z)
                dst[:, pl.ds(i, 1), :] = h[:, None, :].astype(dst.dtype)
            h_state[layer] = h                           # carry to next time block

    return kernel


def rnn_forward_pallas(x, h0, weights, biases, *, time_block=16, batch_block=8,
                       compute_dtype=jnp.float32):
    """x: (B, S, E) f32; h0: (L, B, H) f32 (PyTorch pre-permute convention);
    weights[l]: (H, in_l + H) nn.Linear layout; biases[l]: (H,).
    Returns (hidden_states (B, S, H), ht (B, 1, H)) — matches the PyTorch module."""
    B, S, E = x.shape
    L, _, H = h0.shape
    assert batch_block % 8 == 0 and time_block % 8 == 0

    Bc, TB = batch_block, time_block
    Bp = _round_up(B, Bc)
    Sp = _round_up(S, TB)
    Ep = _round_up(E, 128)
    Hp = _round_up(H, 128)

    # Zero padding is inert: padded hidden lanes stay exactly 0 through tanh,
    # padded batch rows / time steps are sliced off below.
    x_p = jnp.zeros((Bp, Sp, Ep), jnp.float32).at[:B, :S, :E].set(x.astype(jnp.float32))
    h0_p = jnp.zeros((L, Bp, Hp), jnp.float32).at[:, :B, :H].set(h0.astype(jnp.float32))

    wx_p, wh_list, b_list = [], [], []
    for l, (W, b) in enumerate(zip(weights, biases)):
        in_dim = E if l == 0 else H
        in_dim_p = Ep if l == 0 else Hp
        wx = jnp.zeros((in_dim_p, Hp), jnp.float32).at[:in_dim, :H].set(
            jnp.transpose(W[:, :in_dim]))
        wh = jnp.zeros((Hp, Hp), jnp.float32).at[:H, :H].set(
            jnp.transpose(W[:, in_dim:]))
        bb = jnp.zeros((1, Hp), jnp.float32).at[0, :H].set(b)
        wx_p.append(wx)
        wh_list.append(wh)
        b_list.append(bb)
    wh_all = jnp.stack(wh_list)   # (L, Hp, Hp)
    b_all = jnp.stack(b_list)     # (L, 1, Hp)

    grid = (Bp // Bc, Sp // TB)   # (parallel batch blocks, sequential time blocks)

    in_specs = [
        pl.BlockSpec((Bc, TB, Ep), lambda bi, tb: (bi, tb, 0)),   # x block
        pl.BlockSpec((L, Bc, Hp), lambda bi, tb: (0, bi, 0)),     # h0 (per batch block)
    ]
    for arr in wx_p:
        in_specs.append(pl.BlockSpec(arr.shape, lambda bi, tb: (0, 0)))
    in_specs.append(pl.BlockSpec((L, Hp, Hp), lambda bi, tb: (0, 0, 0)))
    in_specs.append(pl.BlockSpec((L, 1, Hp), lambda bi, tb: (0, 0, 0)))

    out_spec = pl.BlockSpec((Bc, TB, Hp), lambda bi, tb: (bi, tb, 0))

    hs_p = pl.pallas_call(
        _make_rnn_kernel(L, TB, Bc, Hp, compute_dtype),
        out_shape=jax.ShapeDtypeStruct((Bp, Sp, Hp), jnp.float32),
        grid_spec=pltpu.PrefetchScalarGridSpec(
            num_scalar_prefetch=0,
            grid=grid,
            in_specs=in_specs,
            out_specs=out_spec,
            scratch_shapes=[
                pltpu.VMEM((L, Bc, Hp), jnp.float32),    # carried hidden state
                pltpu.VMEM((Bc, TB, Hp), jnp.float32),   # inter-layer activations (ping)
                pltpu.VMEM((Bc, TB, Hp), jnp.float32),   # inter-layer activations (pong)
            ]),
        compiler_params=pltpu.CompilerParams(
            dimension_semantics=("parallel", "arbitrary")),
        # NOTE: at large H on v7x (64 MiB VMEM), also pass compute_dtype=jnp.bfloat16
        # and set vmem_limit_bytes / tile the H dimension of the weights.
    )(x_p, h0_p, *wx_p, wh_all, b_all)

    hidden_states = hs_p[:B, :S, :H]
    ht = hidden_states[:, S - 1:S, :]     # module's ht == last layer at last time step
    return hidden_states, ht


def rnn_forward_ref(x, h0, weights, biases):
    """Pure-JAX reference mirroring the PyTorch forward (unidirectional)."""
    B, S, E = x.shape
    L, _, H = h0.shape
    h = jnp.transpose(h0, (1, 0, 2))      # (B, L, H)
    hs = []
    ht = None
    for t in range(S):
        x_t = x[:, t, :]
        for l in range(L):
            cat = jnp.concatenate([x_t, h[:, l, :]], axis=-1)
            ht = jnp.tanh(cat @ weights[l].T + biases[l])
            x_t = ht
            h = h.at[:, l, :].set(ht)
        hs.append(ht)
    return jnp.stack(hs, axis=1), ht[:, None, :]


if __name__ == "__main__":
    # TODO(synk): bidirectional=True branch not implemented (module default is False);
    # it would be a second kernel invocation over reversed time with its own weights.
    B, S, E, H, L = 12, 40, 48, 96, 2   # deliberately unaligned: exercises padding path

    key = jax.random.PRNGKey(0)
    keys = jax.random.split(key, 2 + 2 * L)
    x = jax.random.normal(keys[0], (B, S, E), dtype=jnp.float32)
    h0 = jax.random.normal(keys[1], (L, B, H), dtype=jnp.float32)

    weights, biases = [], []
    for l in range(L):
        in_features = (E if l == 0 else H) + H
        bound = float(1.0 / (in_features ** 0.5))    # nn.Linear default init range
        W = jax.random.uniform(keys[2 + 2 * l], (H, in_features),
                               dtype=jnp.float32, minval=-bound, maxval=bound)
        b = jax.random.uniform(keys[3 + 2 * l], (H,),
                               dtype=jnp.float32, minval=-bound, maxval=bound)
        weights.append(W)
        biases.append(b)

    hs, ht = rnn_forward_pallas(x, h0, weights, biases,
                                time_block=16, batch_block=8)
    jax.block_until_ready((hs, ht))

    hs_ref, ht_ref = rnn_forward_ref(x, h0, weights, biases)
    assert hs.shape == (B, S, H) and ht.shape == (B, 1, H)
    assert jnp.allclose(hs, hs_ref, atol=2e-3, rtol=2e-3)
    assert jnp.allclose(ht, ht_ref, atol=2e-3, rtol=2e-3)

    print("KERNEL_OK")
</pallas_src>

<mosaic_0001>
module attributes {stable_mosaic.version = 11 : i64} {
  func.func @kernel(%arg0: i32, %arg1: i32, %arg2: memref<8x16x128xf32, #tpu.memory_space<vmem>>, %arg3: memref<2x8x128xf32, #tpu.memory_space<vmem>>, %arg4: memref<128x128xf32, #tpu.memory_space<vmem>>, %arg5: memref<128x128xf32, #tpu.memory_space<vmem>>, %arg6: memref<2x128x128xf32, #tpu.memory_space<vmem>>, %arg7: memref<2x1x128xf32, #tpu.memory_space<vmem>>, %arg8: memref<8x16x128xf32, #tpu.memory_space<vmem>>, %arg9: memref<2x8x128xf32, #tpu.memory_space<vmem>>, %arg10: memref<8x16x128xf32, #tpu.memory_space<vmem>>, %arg11: memref<8x16x128xf32, #tpu.memory_space<vmem>>) attributes {dimension_semantics = [#tpu.dimension_semantics<parallel>, #tpu.dimension_semantics<arbitrary>], iteration_bounds = array<i64: 2, 3>, scalar_prefetch = 0 : i64, scratch_operands = 3 : i64, tpu.core_type = #tpu.core_type<tc>, window_params = [{transform_indices = @transform_0, window_bounds = array<i64: 8, 16, 128>}, {transform_indices = @transform_1, window_bounds = array<i64: 2, 8, 128>}, {pipeline_mode = #tpu.pipeline_mode<synchronous>, transform_indices = @transform_2, window_bounds = array<i64: 128, 128>}, {pipeline_mode = #tpu.pipeline_mode<synchronous>, transform_indices = @transform_3, window_bounds = array<i64: 128, 128>}, {pipeline_mode = #tpu.pipeline_mode<synchronous>, transform_indices = @transform_4, window_bounds = array<i64: 2, 128, 128>}, {pipeline_mode = #tpu.pipeline_mode<synchronous>, transform_indices = @transform_5, window_bounds = array<i64: 2, 1, 128>}, {transform_indices = @transform_6, window_bounds = array<i64: 8, 16, 128>}]} {
    %c0_i32 = arith.constant 0 : i32
    %0 = arith.cmpi eq, %arg1, %c0_i32 : i32
    %1 = arith.extui %0 : i1 to i32
    %c0_i32_0 = arith.constant 0 : i32
    %2 = arith.cmpi ne, %1, %c0_i32_0 : i32
    scf.if %2 {
      %c0_148 = arith.constant 0 : index
      %c0_149 = arith.constant 0 : index
      %c0_150 = arith.constant 0 : index
      %259 = vector.load %arg3[%c0_148, %c0_149, %c0_150] : memref<2x8x128xf32, #tpu.memory_space<vmem>>, vector<2x8x128xf32>
      %c0_151 = arith.constant 0 : index
      %c0_152 = arith.constant 0 : index
      %c0_153 = arith.constant 0 : index
      %260 = vector.load %arg9[%c0_151, %c0_152, %c0_153] : memref<2x8x128xf32, #tpu.memory_space<vmem>>, vector<2x8x128xf32>
      tpu.vector_store %arg9[%c0_151, %c0_152, %c0_153], %259 {strides = array<i32>} : memref<2x8x128xf32, #tpu.memory_space<vmem>>, vector<2x8x128xf32>,
    } else {
    }
    %c0 = arith.constant 0 : index
    %c0_1 = arith.constant 0 : index
    %c0_2 = arith.constant 0 : index
    %3 = vector.load %arg2[%c0, %c0_1, %c0_2] : memref<8x16x128xf32, #tpu.memory_space<vmem>>, vector<8x16x128xf32>
    %4 = vector.shape_cast %3 : vector<8x16x128xf32> to vector<128x128xf32>
    %c0_3 = arith.constant 0 : index
    %c0_4 = arith.constant 0 : index
    %5 = vector.load %arg4[%c0_3, %c0_4] : memref<128x128xf32, #tpu.memory_space<vmem>>, vector<128x128xf32>
    %cst = arith.constant dense<0.000000e+00> : vector<128x128xf32>
    %6 = tpu.matmul %4, %5, %cst {dimension_numbers = #tpu.dot_dimension_numbers<[1], [0], [0], [1], [0, 0, 1, 1], [], []>} : vector<128x128xf32>, vector<128x128xf32>, vector<128x128xf32> -> vector<128x128xf32>
    %c0_5 = arith.constant 0 : index
    %c0_6 = arith.constant 0 : index
    %c0_7 = arith.constant 0 : index
    %7 = vector.load %arg7[%c0_5, %c0_6, %c0_7] : memref<2x1x128xf32, #tpu.memory_space<vmem>>, vector<1x1x128xf32>
    %8 = vector.shape_cast %7 : vector<1x1x128xf32> to vector<1x128xf32>
    %9 = vector.broadcast %8 : vector<1x128xf32> to vector<128x128xf32>
    %10 = arith.addf %6, %9 : vector<128x128xf32>
    %11 = vector.shape_cast %10 : vector<128x128xf32> to vector<8x16x128xf32>
    %c0_8 = arith.constant 0 : index
    %c0_9 = arith.constant 0 : index
    %c0_10 = arith.constant 0 : index
    %12 = vector.load %arg6[%c0_8, %c0_9, %c0_10] : memref<2x128x128xf32, #tpu.memory_space<vmem>>, vector<1x128x128xf32>
    %13 = vector.shape_cast %12 : vector<1x128x128xf32> to vector<128x128xf32>
    %c0_11 = arith.constant 0 : index
    %c0_12 = arith.constant 0 : index
    %c0_13 = arith.constant 0 : index
    %14 = vector.load %arg9[%c0_11, %c0_12, %c0_13] : memref<2x8x128xf32, #tpu.memory_space<vmem>>, vector<1x8x128xf32>
    %15 = vector.shape_cast %14 : vector<1x8x128xf32> to vector<8x128xf32>
    %16 = vector.extract_strided_slice %11 {offsets = [0, 0, 0], sizes = [8, 1, 128], strides = [1, 1, 1]} : vector<8x16x128xf32> to vector<8x1x128xf32>
    %17 = vector.shape_cast %16 : vector<8x1x128xf32> to vector<8x128xf32>
    %cst_14 = arith.constant dense<0.000000e+00> : vector<8x128xf32>
    %18 = tpu.matmul %15, %13, %cst_14 {dimension_numbers = #tpu.dot_dimension_numbers<[1], [0], [0], [1], [0, 0, 1, 1], [], []>} : vector<8x128xf32>, vector<128x128xf32>, vector<8x128xf32> -> vector<8x128xf32>
    %19 = arith.addf %17, %18 : vector<8x128xf32>
    %20 = math.tanh %19 : vector<8x128xf32>
    %21 = vector.shape_cast %20 : vector<8x128xf32> to vector<8x1x128xf32>
    %c0_15 = arith.constant 0 : index
    %c0_16 = arith.constant 0 : index
    %c0_17 = arith.constant 0 : index
    %22 = vector.load %arg10[%c0_15, %c0_16, %c0_17] : memref<8x16x128xf32, #tpu.memory_space<vmem>>, vector<8x1x128xf32>
    tpu.vector_store %arg10[%c0_15, %c0_16, %c0_17], %21 {strides = array<i32>} : memref<8x16x128xf32, #tpu.memory_space<vmem>>, vector<8x1x128xf32>,
    %23 = vector.extract_strided_slice %11 {offsets = [0, 1, 0], sizes = [8, 1, 128], strides = [1, 1, 1]} : vector<8x16x128xf32> to vector<8x1x128xf32>
    %24 = vector.shape_cast %23 : vector<8x1x128xf32> to vector<8x128xf32>
    %cst_18 = arith.constant dense<0.000000e+00> : vector<8x128xf32>
    %25 = tpu.matmul %20, %13, %cst_18 {dimension_numbers = #tpu.dot_dimension_numbers<[1], [0], [0], [1], [0, 0, 1, 1], [], []>} : vector<8x128xf32>, vector<128x128xf32>, vector<8x128xf32> -> vector<8x128xf32>
    %26 = arith.addf %24, %25 : vector<8x128xf32>
    %27 = math.tanh %26 : vector<8x128xf32>
    %28 = vector.shape_cast %27 : vector<8x128xf32> to vector<8x1x128xf32>
    %c0_19 = arith.constant 0 : index
    %c1 = arith.constant 1 : index
    %c0_20 = arith.constant 0 : index
    %29 = vector.load %arg10[%c0_19, %c1, %c0_20] : memref<8x16x128xf32, #tpu.memory_space<vmem>>, vector<8x1x128xf32>
    tpu.vector_store %arg10[%c0_19, %c1, %c0_20], %28 {strides = array<i32>} : memref<8x16x128xf32, #tpu.memory_space<vmem>>, vector<8x1x128xf32>,
    %30 = vector.extract_strided_slice %11 {offsets = [0, 2, 0], sizes = [8, 1, 128], strides = [1, 1, 1]} : vector<8x16x128xf32> to vector<8x1x128xf32>
    %31 = vector.shape_cast %30 : vector<8x1x128xf32> to vector<8x128xf32>
    %cst_21 = arith.constant dense<0.000000e+00> : vector<8x128xf32>
    %32 = tpu.matmul %27, %13, %cst_21 {dimension_numbers = #tpu.dot_dimension_numbers<[1], [0], [0], [1], [0, 0, 1, 1], [], []>} : vector<8x128xf32>, vector<128x128xf32>, vector<8x128xf32> -> vector<8x128xf32>
    %33 = arith.addf %31, %32 : vector<8x128xf32>
    %34 = math.tanh %33 : vector<8x128xf32>
    %35 = vector.shape_cast %34 : vector<8x128xf32> to vector<8x1x128xf32>
    %c0_22 = arith.constant 0 : index
    %c2 = arith.constant 2 : index
    %c0_23 = arith.constant 0 : index
    %36 = vector.load %arg10[%c0_22, %c2, %c0_23] : memref<8x16x128xf32, #tpu.memory_space<vmem>>, vector<8x1x128xf32>
    tpu.vector_store %arg10[%c0_22, %c2, %c0_23], %35 {strides = array<i32>} : memref<8x16x128xf32, #tpu.memory_space<vmem>>, vector<8x1x128xf32>,
    %37 = vector.extract_strided_slice %11 {offsets = [0, 3, 0], sizes = [8, 1, 128], strides = [1, 1, 1]} : vector<8x16x128xf32> to vector<8x1x128xf32>
    %38 = vector.shape_cast %37 : vector<8x1x128xf32> to vector<8x128xf32>
    %cst_24 = arith.constant dense<0.000000e+00> : vector<8x128xf32>
    %39 = tpu.matmul %34, %13, %cst_24 {dimension_numbers = #tpu.dot_dimension_numbers<[1], [0], [0], [1], [0, 0, 1, 1], [], []>} : vector<8x128xf32>, vector<128x128xf32>, vector<8x128xf32> -> vector<8x128xf32>
    %40 = arith.addf %38, %39 : vector<8x128xf32>
    %41 = math.tanh %40 : vector<8x128xf32>
    %42 = vector.shape_cast %41 : vector<8x128xf32> to vector<8x1x128xf32>
    %c0_25 = arith.constant 0 : index
    %c3 = arith.constant 3 : index
    %c0_26 = arith.constant 0 : index
    %43 = vector.load %arg10[%c0_25, %c3, %c0_26] : memref<8x16x128xf32, #tpu.memory_space<vmem>>, vector<8x1x128xf32>
    tpu.vector_store %arg10[%c0_25, %c3, %c0_26], %42 {strides = array<i32>} : memref<8x16x128xf32, #tpu.memory_space<vmem>>, vector<8x1x128xf32>,
    %44 = vector.extract_strided_slice %11 {offsets = [0, 4, 0], sizes = [8, 1, 128], strides = [1, 1, 1]} : vector<8x16x128xf32> to vector<8x1x128xf32>
    %45 = vector.shape_cast %44 : vector<8x1x128xf32> to vector<8x128xf32>
    %cst_27 = arith.constant dense<0.000000e+00> : vector<8x128xf32>
    %46 = tpu.matmul %41, %13, %cst_27 {dimension_numbers = #tpu.dot_dimension_numbers<[1], [0], [0], [1], [0, 0, 1, 1], [], []>} : vector<8x128xf32>, vector<128x128xf32>, vector<8x128xf32> -> vector<8x128xf32>
    %47 = arith.addf %45, %46 : vector<8x128xf32>
    %48 = math.tanh %47 : vector<8x128xf32>
    %49 = vector.shape_cast %48 : vector<8x128xf32> to vector<8x1x128xf32>
    %c0_28 = arith.constant 0 : index
    %c4 = arith.constant 4 : index
    %c0_29 = arith.constant 0 : index
    %50 = vector.load %arg10[%c0_28, %c4, %c0_29] : memref<8x16x128xf32, #tpu.memory_space<vmem>>, vector<8x1x128xf32>
    tpu.vector_store %arg10[%c0_28, %c4, %c0_29], %49 {strides = array<i32>} : memref<8x16x128xf32, #tpu.memory_space<vmem>>, vector<8x1x128xf32>,
    %51 = vector.extract_strided_slice %11 {offsets = [0, 5, 0], sizes = [8, 1, 128], strides = [1, 1, 1]} : vector<8x16x128xf32> to vector<8x1x128xf32>
    %52 = vector.shape_cast %51 : vector<8x1x128xf32> to vector<8x128xf32>
    %cst_30 = arith.constant dense<0.000000e+00> : vector<8x128xf32>
    %53 = tpu.matmul %48, %13, %cst_30 {dimension_numbers = #tpu.dot_dimension_numbers<[1], [0], [0], [1], [0, 0, 1, 1], [], []>} : vector<8x128xf32>, vector<128x128xf32>, vector<8x128xf32> -> vector<8x128xf32>
    %54 = arith.addf %52, %53 : vector<8x128xf32>
    %55 = math.tanh %54 : vector<8x128xf32>
    %56 = vector.shape_cast %55 : vector<8x128xf32> to vector<8x1x128xf32>
    %c0_31 = arith.constant 0 : index
    %c5 = arith.constant 5 : index
    %c0_32 = arith.constant 0 : index
    %57 = vector.load %arg10[%c0_31, %c5, %c0_32] : memref<8x16x128xf32, #tpu.memory_space<vmem>>, vector<8x1x128xf32>
    tpu.vector_store %arg10[%c0_31, %c5, %c0_32], %56 {strides = array<i32>} : memref<8x16x128xf32, #tpu.memory_space<vmem>>, vector<8x1x128xf32>,
    %58 = vector.extract_strided_slice %11 {offsets = [0, 6, 0], sizes = [8, 1, 128], strides = [1, 1, 1]} : vector<8x16x128xf32> to vector<8x1x128xf32>
    %59 = vector.shape_cast %58 : vector<8x1x128xf32> to vector<8x128xf32>
    %cst_33 = arith.constant dense<0.000000e+00> : vector<8x128xf32>
    %60 = tpu.matmul %55, %13, %cst_33 {dimension_numbers = #tpu.dot_dimension_numbers<[1], [0], [0], [1], [0, 0, 1, 1], [], []>} : vector<8x128xf32>, vector<128x128xf32>, vector<8x128xf32> -> vector<8x128xf32>
    %61 = arith.addf %59, %60 : vector<8x128xf32>
    %62 = math.tanh %61 : vector<8x128xf32>
    %63 = vector.shape_cast %62 : vector<8x128xf32> to vector<8x1x128xf32>
    %c0_34 = arith.constant 0 : index
    %c6 = arith.constant 6 : index
    %c0_35 = arith.constant 0 : index
    %64 = vector.load %arg10[%c0_34, %c6, %c0_35] : memref<8x16x128xf32, #tpu.memory_space<vmem>>, vector<8x1x128xf32>
    tpu.vector_store %arg10[%c0_34, %c6, %c0_35], %63 {strides = array<i32>} : memref<8x16x128xf32, #tpu.memory_space<vmem>>, vector<8x1x128xf32>,
    %65 = vector.extract_strided_slice %11 {offsets = [0, 7, 0], sizes = [8, 1, 128], strides = [1, 1, 1]} : vector<8x16x128xf32> to vector<8x1x128xf32>
    %66 = vector.shape_cast %65 : vector<8x1x128xf32> to vector<8x128xf32>
    %cst_36 = arith.constant dense<0.000000e+00> : vector<8x128xf32>
    %67 = tpu.matmul %62, %13, %cst_36 {dimension_numbers = #tpu.dot_dimension_numbers<[1], [0], [0], [1], [0, 0, 1, 1], [], []>} : vector<8x128xf32>, vector<128x128xf32>, vector<8x128xf32> -> vector<8x128xf32>
    %68 = arith.addf %66, %67 : vector<8x128xf32>
    %69 = math.tanh %68 : vector<8x128xf32>
    %70 = vector.shape_cast %69 : vector<8x128xf32> to vector<8x1x128xf32>
    %c0_37 = arith.constant 0 : index
    %c7 = arith.constant 7 : index
    %c0_38 = arith.constant 0 : index
    %71 = vector.load %arg10[%c0_37, %c7, %c0_38] : memref<8x16x128xf32, #tpu.memory_space<vmem>>, vector<8x1x128xf32>
    tpu.vector_store %arg10[%c0_37, %c7, %c0_38], %70 {strides = array<i32>} : memref<8x16x128xf32, #tpu.memory_space<vmem>>, vector<8x1x128xf32>,
    %72 = vector.extract_strided_slice %11 {offsets = [0, 8, 0], sizes = [8, 1, 128], strides = [1, 1, 1]} : vector<8x16x128xf32> to vector<8x1x128xf32>
    %73 = vector.shape_cast %72 : vector<8x1x128xf32> to vector<8x128xf32>
    %cst_39 = arith.constant dense<0.000000e+00> : vector<8x128xf32>
    %74 = tpu.matmul %69, %13, %cst_39 {dimension_numbers = #tpu.dot_dimension_numbers<[1], [0], [0], [1], [0, 0, 1, 1], [], []>} : vector<8x128xf32>, vector<128x128xf32>, vector<8x128xf32> -> vector<8x128xf32>
    %75 = arith.addf %73, %74 : vector<8x128xf32>
    %76 = math.tanh %75 : vector<8x128xf32>
    %77 = vector.shape_cast %76 : vector<8x128xf32> to vector<8x1x128xf32>
    %c0_40 = arith.constant 0 : index
    %c8 = arith.constant 8 : index
    %c0_41 = arith.constant 0 : index
    %78 = vector.load %arg10[%c0_40, %c8, %c0_41] : memref<8x16x128xf32, #tpu.memory_space<vmem>>, vector<8x1x128xf32>
    tpu.vector_store %arg10[%c0_40, %c8, %c0_41], %77 {strides = array<i32>} : memref<8x16x128xf32, #tpu.memory_space<vmem>>, vector<8x1x128xf32>,
    %79 = vector.extract_strided_slice %11 {offsets = [0, 9, 0], sizes = [8, 1, 128], strides = [1, 1, 1]} : vector<8x16x128xf32> to vector<8x1x128xf32>
    %80 = vector.shape_cast %79 : vector<8x1x128xf32> to vector<8x128xf32>
    %cst_42 = arith.constant dense<0.000000e+00> : vector<8x128xf32>
    %81 = tpu.matmul %76, %13, %cst_42 {dimension_numbers = #tpu.dot_dimension_numbers<[1], [0], [0], [1], [0, 0, 1, 1], [], []>} : vector<8x128xf32>, vector<128x128xf32>, vector<8x128xf32> -> vector<8x128xf32>
    %82 = arith.addf %80, %81 : vector<8x128xf32>
    %83 = math.tanh %82 : vector<8x128xf32>
    %84 = vector.shape_cast %83 : vector<8x128xf32> to vector<8x1x128xf32>
    %c0_43 = arith.constant 0 : index
    %c9 = arith.constant 9 : index
    %c0_44 = arith.constant 0 : index
    %85 = vector.load %arg10[%c0_43, %c9, %c0_44] : memref<8x16x128xf32, #tpu.memory_space<vmem>>, vector<8x1x128xf32>
    tpu.vector_store %arg10[%c0_43, %c9, %c0_44], %84 {strides = array<i32>} : memref<8x16x128xf32, #tpu.memory_space<vmem>>, vector<8x1x128xf32>,
    %86 = vector.extract_strided_slice %11 {offsets = [0, 10, 0], sizes = [8, 1, 128], strides = [1, 1, 1]} : vector<8x16x128xf32> to vector<8x1x128xf32>
    %87 = vector.shape_cast %86 : vector<8x1x128xf32> to vector<8x128xf32>
    %cst_45 = arith.constant dense<0.000000e+00> : vector<8x128xf32>
    %88 = tpu.matmul %83, %13, %cst_45 {dimension_numbers = #tpu.dot_dimension_numbers<[1], [0], [0], [1], [0, 0, 1, 1], [], []>} : vector<8x128xf32>, vector<128x128xf32>, vector<8x128xf32> -> vector<8x128xf32>
    %89 = arith.addf %87, %88 : vector<8x128xf32>
    %90 = math.tanh %89 : vector<8x128xf32>
    %91 = vector.shape_cast %90 : vector<8x128xf32> to vector<8x1x128xf32>
    %c0_46 = arith.constant 0 : index
    %c10 = arith.constant 10 : index
    %c0_47 = arith.constant 0 : index
    %92 = vector.load %arg10[%c0_46, %c10, %c0_47] : memref<8x16x128xf32, #tpu.memory_space<vmem>>, vector<8x1x128xf32>
    tpu.vector_store %arg10[%c0_46, %c10, %c0_47], %91 {strides = array<i32>} : memref<8x16x128xf32, #tpu.memory_space<vmem>>, vector<8x1x128xf32>,
    %93 = vector.extract_strided_slice %11 {offsets = [0, 11, 0], sizes = [8, 1, 128], strides = [1, 1, 1]} : vector<8x16x128xf32> to vector<8x1x128xf32>
    %94 = vector.shape_cast %93 : vector<8x1x128xf32> to vector<8x128xf32>
    %cst_48 = arith.constant dense<0.000000e+00> : vector<8x128xf32>
    %95 = tpu.matmul %90, %13, %cst_48 {dimension_numbers = #tpu.dot_dimension_numbers<[1], [0], [0], [1], [0, 0, 1, 1], [], []>} : vector<8x128xf32>, vector<128x128xf32>, vector<8x128xf32> -> vector<8x128xf32>
    %96 = arith.addf %94, %95 : vector<8x128xf32>
    %97 = math.tanh %96 : vector<8x128xf32>
    %98 = vector.shape_cast %97 : vector<8x128xf32> to vector<8x1x128xf32>
    %c0_49 = arith.constant 0 : index
    %c11 = arith.constant 11 : index
    %c0_50 = arith.constant 0 : index
    %99 = vector.load %arg10[%c0_49, %c11, %c0_50] : memref<8x16x128xf32, #tpu.memory_space<vmem>>, vector<8x1x128xf32>
    tpu.vector_store %arg10[%c0_49, %c11, %c0_50], %98 {strides = array<i32>} : memref<8x16x128xf32, #tpu.memory_space<vmem>>, vector<8x1x128xf32>,
    %100 = vector.extract_strided_slice %11 {offsets = [0, 12, 0], sizes = [8, 1, 128], strides = [1, 1, 1]} : vector<8x16x128xf32> to vector<8x1x128xf32>
    %101 = vector.shape_cast %100 : vector<8x1x128xf32> to vector<8x128xf32>
    %cst_51 = arith.constant dense<0.000000e+00> : vector<8x128xf32>
    %102 = tpu.matmul %97, %13, %cst_51 {dimension_numbers = #tpu.dot_dimension_numbers<[1], [0], [0], [1], [0, 0, 1, 1], [], []>} : vector<8x128xf32>, vector<128x128xf32>, vector<8x128xf32> -> vector<8x128xf32>
    %103 = arith.addf %101, %102 : vector<8x128xf32>
    %104 = math.tanh %103 : vector<8x128xf32>
    %105 = vector.shape_cast %104 : vector<8x128xf32> to vector<8x1x128xf32>
    %c0_52 = arith.constant 0 : index
    %c12 = arith.constant 12 : index
    %c0_53 = arith.constant 0 : index
    %106 = vector.load %arg10[%c0_52, %c12, %c0_53] : memref<8x16x128xf32, #tpu.memory_space<vmem>>, vector<8x1x128xf32>
    tpu.vector_store %arg10[%c0_52, %c12, %c0_53], %105 {strides = array<i32>} : memref<8x16x128xf32, #tpu.memory_space<vmem>>, vector<8x1x128xf32>,
    %107 = vector.extract_strided_slice %11 {offsets = [0, 13, 0], sizes = [8, 1, 128], strides = [1, 1, 1]} : vector<8x16x128xf32> to vector<8x1x128xf32>
    %108 = vector.shape_cast %107 : vector<8x1x128xf32> to vector<8x128xf32>
    %cst_54 = arith.constant dense<0.000000e+00> : vector<8x128xf32>
    %109 = tpu.matmul %104, %13, %cst_54 {dimension_numbers = #tpu.dot_dimension_numbers<[1], [0], [0], [1], [0, 0, 1, 1], [], []>} : vector<8x128xf32>, vector<128x128xf32>, vector<8x128xf32> -> vector<8x128xf32>
    %110 = arith.addf %108, %109 : vector<8x128xf32>
    %111 = math.tanh %110 : vector<8x128xf32>
    %112 = vector.shape_cast %111 : vector<8x128xf32> to vector<8x1x128xf32>
    %c0_55 = arith.constant 0 : index
    %c13 = arith.constant 13 : index
    %c0_56 = arith.constant 0 : index
    %113 = vector.load %arg10[%c0_55, %c13, %c0_56] : memref<8x16x128xf32, #tpu.memory_space<vmem>>, vector<8x1x128xf32>
    tpu.vector_store %arg10[%c0_55, %c13, %c0_56], %112 {strides = array<i32>} : memref<8x16x128xf32, #tpu.memory_space<vmem>>, vector<8x1x128xf32>,
    %114 = vector.extract_strided_slice %11 {offsets = [0, 14, 0], sizes = [8, 1, 128], strides = [1, 1, 1]} : vector<8x16x128xf32> to vector<8x1x128xf32>
    %115 = vector.shape_cast %114 : vector<8x1x128xf32> to vector<8x128xf32>
    %cst_57 = arith.constant dense<0.000000e+00> : vector<8x128xf32>
    %116 = tpu.matmul %111, %13, %cst_57 {dimension_numbers = #tpu.dot_dimension_numbers<[1], [0], [0], [1], [0, 0, 1, 1], [], []>} : vector<8x128xf32>, vector<128x128xf32>, vector<8x128xf32> -> vector<8x128xf32>
    %117 = arith.addf %115, %116 : vector<8x128xf32>
    %118 = math.tanh %117 : vector<8x128xf32>
    %119 = vector.shape_cast %118 : vector<8x128xf32> to vector<8x1x128xf32>
    %c0_58 = arith.constant 0 : index
    %c14 = arith.constant 14 : index
    %c0_59 = arith.constant 0 : index
    %120 = vector.load %arg10[%c0_58, %c14, %c0_59] : memref<8x16x128xf32, #tpu.memory_space<vmem>>, vector<8x1x128xf32>
    tpu.vector_store %arg10[%c0_58, %c14, %c0_59], %119 {strides = array<i32>} : memref<8x16x128xf32, #tpu.memory_space<vmem>>, vector<8x1x128xf32>,
    %121 = vector.extract_strided_slice %11 {offsets = [0, 15, 0], sizes = [8, 1, 128], strides = [1, 1, 1]} : vector<8x16x128xf32> to vector<8x1x128xf32>
    %122 = vector.shape_cast %121 : vector<8x1x128xf32> to vector<8x128xf32>
    %cst_60 = arith.constant dense<0.000000e+00> : vector<8x128xf32>
    %123 = tpu.matmul %118, %13, %cst_60 {dimension_numbers = #tpu.dot_dimension_numbers<[1], [0], [0], [1], [0, 0, 1, 1], [], []>} : vector<8x128xf32>, vector<128x128xf32>, vector<8x128xf32> -> vector<8x128xf32>
    %124 = arith.addf %122, %123 : vector<8x128xf32>
    %125 = math.tanh %124 : vector<8x128xf32>
    %126 = vector.shape_cast %125 : vector<8x128xf32> to vector<8x1x128xf32>
    %c0_61 = arith.constant 0 : index
    %c15 = arith.constant 15 : index
    %c0_62 = arith.constant 0 : index
    %127 = vector.load %arg10[%c0_61, %c15, %c0_62] : memref<8x16x128xf32, #tpu.memory_space<vmem>>, vector<8x1x128xf32>
    tpu.vector_store %arg10[%c0_61, %c15, %c0_62], %126 {strides = array<i32>} : memref<8x16x128xf32, #tpu.memory_space<vmem>>, vector<8x1x128xf32>,
    %c0_63 = arith.constant 0 : index
    %c0_64 = arith.constant 0 : index
    %c0_65 = arith.constant 0 : index
    %128 = vector.load %arg9[%c0_63, %c0_64, %c0_65] : memref<2x8x128xf32, #tpu.memory_space<vmem>>, vector<1x8x128xf32>
    %129 = vector.shape_cast %128 : vector<1x8x128xf32> to vector<8x128xf32>
    %130 = vector.shape_cast %125 : vector<8x128xf32> to vector<1x8x128xf32>
    tpu.vector_store %arg9[%c0_63, %c0_64, %c0_65], %130 {strides = array<i32>} : memref<2x8x128xf32, #tpu.memory_space<vmem>>, vector<1x8x128xf32>,
    %c0_66 = arith.constant 0 : index
    %c0_67 = arith.constant 0 : index
    %c0_68 = arith.constant 0 : index
    %131 = vector.load %arg10[%c0_66, %c0_67, %c0_68] : memref<8x16x128xf32, #tpu.memory_space<vmem>>, vector<8x16x128xf32>
    %132 = vector.shape_cast %131 : vector<8x16x128xf32> to vector<128x128xf32>
    %c0_69 = arith.constant 0 : index
    %c0_70 = arith.constant 0 : index
    %133 = vector.load %arg5[%c0_69, %c0_70] : memref<128x128xf32, #tpu.memory_space<vmem>>, vector<128x128xf32>
    %cst_71 = arith.constant dense<0.000000e+00> : vector<128x128xf32>
    %134 = tpu.matmul %132, %133, %cst_71 {dimension_numbers = #tpu.dot_dimension_numbers<[1], [0], [0], [1], [0, 0, 1, 1], [], []>} : vector<128x128xf32>, vector<128x128xf32>, vector<128x128xf32> -> vector<128x128xf32>
    %c1_72 = arith.constant 1 : index
    %c0_73 = arith.constant 0 : index
    %c0_74 = arith.constant 0 : index
    %135 = vector.load %arg7[%c1_72, %c0_73, %c0_74] : memref<2x1x128xf32, #tpu.memory_space<vmem>>, vector<1x1x128xf32>
    %136 = vector.shape_cast %135 : vector<1x1x128xf32> to vector<1x128xf32>
    %137 = vector.broadcast %136 : vector<1x128xf32> to vector<128x128xf32>
    %138 = arith.addf %134, %137 : vector<128x128xf32>
    %139 = vector.shape_cast %138 : vector<128x128xf32> to vector<8x16x128xf32>
    %c1_75 = arith.constant 1 : index
    %c0_76 = arith.constant 0 : index
    %c0_77 = arith.constant 0 : index
    %140 = vector.load %arg6[%c1_75, %c0_76, %c0_77] : memref<2x128x128xf32, #tpu.memory_space<vmem>>, vector<1x128x128xf32>
    %141 = vector.shape_cast %140 : vector<1x128x128xf32> to vector<128x128xf32>
    %c1_78 = arith.constant 1 : index
    %c0_79 = arith.constant 0 : index
    %c0_80 = arith.constant 0 : index
    %142 = vector.load %arg9[%c1_78, %c0_79, %c0_80] : memref<2x8x128xf32, #tpu.memory_space<vmem>>, vector<1x8x128xf32>
    %143 = vector.shape_cast %142 : vector<1x8x128xf32> to vector<8x128xf32>
    %144 = vector.extract_strided_slice %139 {offsets = [0, 0, 0], sizes = [8, 1, 128], strides = [1, 1, 1]} : vector<8x16x128xf32> to vector<8x1x128xf32>
    %145 = vector.shape_cast %144 : vector<8x1x128xf32> to vector<8x128xf32>
    %cst_81 = arith.constant dense<0.000000e+00> : vector<8x128xf32>
    %146 = tpu.matmul %143, %141, %cst_81 {dimension_numbers = #tpu.dot_dimension_numbers<[1], [0], [0], [1], [0, 0, 1, 1], [], []>} : vector<8x128xf32>, vector<128x128xf32>, vector<8x128xf32> -> vector<8x128xf32>
    %147 = arith.addf %145, %146 : vector<8x128xf32>
    %148 = math.tanh %147 : vector<8x128xf32>
    %149 = vector.shape_cast %148 : vector<8x128xf32> to vector<8x1x128xf32>
    %c0_82 = arith.constant 0 : index
    %c0_83 = arith.constant 0 : index
    %c0_84 = arith.constant 0 : index
    %150 = vector.load %arg8[%c0_82, %c0_83, %c0_84] : memref<8x16x128xf32, #tpu.memory_space<vmem>>, vector<8x1x128xf32>
    tpu.vector_store %arg8[%c0_82, %c0_83, %c0_84], %149 {strides = array<i32>} : memref<8x16x128xf32, #tpu.memory_space<vmem>>, vector<8x1x128xf32>,
    %151 = vector.extract_strided_slice %139 {offsets = [0, 1, 0], sizes = [8, 1, 128], strides = [1, 1, 1]} : vector<8x16x128xf32> to vector<8x1x128xf32>
    %152 = vector.shape_cast %151 : vector<8x1x128xf32> to vector<8x128xf32>
    %cst_85 = arith.constant dense<0.000000e+00> : vector<8x128xf32>
    %153 = tpu.matmul %148, %141, %cst_85 {dimension_numbers = #tpu.dot_dimension_numbers<[1], [0], [0], [1], [0, 0, 1, 1], [], []>} : vector<8x128xf32>, vector<128x128xf32>, vector<8x128xf32> -> vector<8x128xf32>
    %154 = arith.addf %152, %153 : vector<8x128xf32>
    %155 = math.tanh %154 : vector<8x128xf32>
    %156 = vector.shape_cast %155 : vector<8x128xf32> to vector<8x1x128xf32>
    %c0_86 = arith.constant 0 : index
    %c1_87 = arith.constant 1 : index
    %c0_88 = arith.constant 0 : index
    %157 = vector.load %arg8[%c0_86, %c1_87, %c0_88] : memref<8x16x128xf32, #tpu.memory_space<vmem>>, vector<8x1x128xf32>
    tpu.vector_store %arg8[%c0_86, %c1_87, %c0_88], %156 {strides = array<i32>} : memref<8x16x128xf32, #tpu.memory_space<vmem>>, vector<8x1x128xf32>,
    %158 = vector.extract_strided_slice %139 {offsets = [0, 2, 0], sizes = [8, 1, 128], strides = [1, 1, 1]} : vector<8x16x128xf32> to vector<8x1x128xf32>
    %159 = vector.shape_cast %158 : vector<8x1x128xf32> to vector<8x128xf32>
    %cst_89 = arith.constant dense<0.000000e+00> : vector<8x128xf32>
    %160 = tpu.matmul %155, %141, %cst_89 {dimension_numbers = #tpu.dot_dimension_numbers<[1], [0], [0], [1], [0, 0, 1, 1], [], []>} : vector<8x128xf32>, vector<128x128xf32>, vector<8x128xf32> -> vector<8x128xf32>
    %161 = arith.addf %159, %160 : vector<8x128xf32>
    %162 = math.tanh %161 : vector<8x128xf32>
    %163 = vector.shape_cast %162 : vector<8x128xf32> to vector<8x1x128xf32>
    %c0_90 = arith.constant 0 : index
    %c2_91 = arith.constant 2 : index
    %c0_92 = arith.constant 0 : index
    %164 = vector.load %arg8[%c0_90, %c2_91, %c0_92] : memref<8x16x128xf32, #tpu.memory_space<vmem>>, vector<8x1x128xf32>
    tpu.vector_store %arg8[%c0_90, %c2_91, %c0_92], %163 {strides = array<i32>} : memref<8x16x128xf32, #tpu.memory_space<vmem>>, vector<8x1x128xf32>,
    %165 = vector.extract_strided_slice %139 {offsets = [0, 3, 0], sizes = [8, 1, 128], strides = [1, 1, 1]} : vector<8x16x128xf32> to vector<8x1x128xf32>
    %166 = vector.shape_cast %165 : vector<8x1x128xf32> to vector<8x128xf32>
    %cst_93 = arith.constant dense<0.000000e+00> : vector<8x128xf32>
    %167 = tpu.matmul %162, %141, %cst_93 {dimension_numbers = #tpu.dot_dimension_numbers<[1], [0], [0], [1], [0, 0, 1, 1], [], []>} : vector<8x128xf32>, vector<128x128xf32>, vector<8x128xf32> -> vector<8x128xf32>
    %168 = arith.addf %166, %167 : vector<8x128xf32>
    %169 = math.tanh %168 : vector<8x128xf32>
    %170 = vector.shape_cast %169 : vector<8x128xf32> to vector<8x1x128xf32>
    %c0_94 = arith.constant 0 : index
    %c3_95 = arith.constant 3 : index
    %c0_96 = arith.constant 0 : index
    %171 = vector.load %arg8[%c0_94, %c3_95, %c0_96] : memref<8x16x128xf32, #tpu.memory_space<vmem>>, vector<8x1x128xf32>
    tpu.vector_store %arg8[%c0_94, %c3_95, %c0_96], %170 {strides = array<i32>} : memref<8x16x128xf32, #tpu.memory_space<vmem>>, vector<8x1x128xf32>,
    %172 = vector.extract_strided_slice %139 {offsets = [0, 4, 0], sizes = [8, 1, 128], strides = [1, 1, 1]} : vector<8x16x128xf32> to vector<8x1x128xf32>
    %173 = vector.shape_cast %172 : vector<8x1x128xf32> to vector<8x128xf32>
    %cst_97 = arith.constant dense<0.000000e+00> : vector<8x128xf32>
    %174 = tpu.matmul %169, %141, %cst_97 {dimension_numbers = #tpu.dot_dimension_numbers<[1], [0], [0], [1], [0, 0, 1, 1], [], []>} : vector<8x128xf32>, vector<128x128xf32>, vector<8x128xf32> -> vector<8x128xf32>
    %175 = arith.addf %173, %174 : vector<8x128xf32>
    %176 = math.tanh %175 : vector<8x128xf32>
    %177 = vector.shape_cast %176 : vector<8x128xf32> to vector<8x1x128xf32>
    %c0_98 = arith.constant 0 : index
    %c4_99 = arith.constant 4 : index
    %c0_100 = arith.constant 0 : index
    %178 = vector.load %arg8[%c0_98, %c4_99, %c0_100] : memref<8x16x128xf32, #tpu.memory_space<vmem>>, vector<8x1x128xf32>
    tpu.vector_store %arg8[%c0_98, %c4_99, %c0_100], %177 {strides = array<i32>} : memref<8x16x128xf32, #tpu.memory_space<vmem>>, vector<8x1x128xf32>,
    %179 = vector.extract_strided_slice %139 {offsets = [0, 5, 0], sizes = [8, 1, 128], strides = [1, 1, 1]} : vector<8x16x128xf32> to vector<8x1x128xf32>
    %180 = vector.shape_cast %179 : vector<8x1x128xf32> to vector<8x128xf32>
    %cst_101 = arith.constant dense<0.000000e+00> : vector<8x128xf32>
    %181 = tpu.matmul %176, %141, %cst_101 {dimension_numbers = #tpu.dot_dimension_numbers<[1], [0], [0], [1], [0, 0, 1, 1], [], []>} : vector<8x128xf32>, vector<128x128xf32>, vector<8x128xf32> -> vector<8x128xf32>
    %182 = arith.addf %180, %181 : vector<8x128xf32>
    %183 = math.tanh %182 : vector<8x128xf32>
    %184 = vector.shape_cast %183 : vector<8x128xf32> to vector<8x1x128xf32>
    %c0_102 = arith.constant 0 : index
    %c5_103 = arith.constant 5 : index
    %c0_104 = arith.constant 0 : index
    %185 = vector.load %arg8[%c0_102, %c5_103, %c0_104] : memref<8x16x128xf32, #tpu.memory_space<vmem>>, vector<8x1x128xf32>
    tpu.vector_store %arg8[%c0_102, %c5_103, %c0_104], %184 {strides = array<i32>} : memref<8x16x128xf32, #tpu.memory_space<vmem>>, vector<8x1x128xf32>,
    %186 = vector.extract_strided_slice %139 {offsets = [0, 6, 0], sizes = [8, 1, 128], strides = [1, 1, 1]} : vector<8x16x128xf32> to vector<8x1x128xf32>
    %187 = vector.shape_cast %186 : vector<8x1x128xf32> to vector<8x128xf32>
    %cst_105 = arith.constant dense<0.000000e+00> : vector<8x128xf32>
    %188 = tpu.matmul %183, %141, %cst_105 {dimension_numbers = #tpu.dot_dimension_numbers<[1], [0], [0], [1], [0, 0, 1, 1], [], []>} : vector<8x128xf32>, vector<128x128xf32>, vector<8x128xf32> -> vector<8x128xf32>
    %189 = arith.addf %187, %188 : vector<8x128xf32>
    %190 = math.tanh %189 : vector<8x128xf32>
    %191 = vector.shape_cast %190 : vector<8x128xf32> to vector<8x1x128xf32>
    %c0_106 = arith.constant 0 : index
    %c6_107 = arith.constant 6 : index
    %c0_108 = arith.constant 0 : index
    %192 = vector.load %arg8[%c0_106, %c6_107, %c0_108] : memref<8x16x128xf32, #tpu.memory_space<vmem>>, vector<8x1x128xf32>
    tpu.vector_store %arg8[%c0_106, %c6_107, %c0_108], %191 {strides = array<i32>} : memref<8x16x128xf32, #tpu.memory_space<vmem>>, vector<8x1x128xf32>,
    %193 = vector.extract_strided_slice %139 {offsets = [0, 7, 0], sizes = [8, 1, 128], strides = [1, 1, 1]} : vector<8x16x128xf32> to vector<8x1x128xf32>
    %194 = vector.shape_cast %193 : vector<8x1x128xf32> to vector<8x128xf32>
    %cst_109 = arith.constant dense<0.000000e+00> : vector<8x128xf32>
    %195 = tpu.matmul %190, %141, %cst_109 {dimension_numbers = #tpu.dot_dimension_numbers<[1], [0], [0], [1], [0, 0, 1, 1], [], []>} : vector<8x128xf32>, vector<128x128xf32>, vector<8x128xf32> -> vector<8x128xf32>
    %196 = arith.addf %194, %195 : vector<8x128xf32>
    %197 = math.tanh %196 : vector<8x128xf32>
    %198 = vector.shape_cast %197 : vector<8x128xf32> to vector<8x1x128xf32>
    %c0_110 = arith.constant 0 : index
    %c7_111 = arith.constant 7 : index
    %c0_112 = arith.constant 0 : index
    %199 = vector.load %arg8[%c0_110, %c7_111, %c0_112] : memref<8x16x128xf32, #tpu.memory_space<vmem>>, vector<8x1x128xf32>
    tpu.vector_store %arg8[%c0_110, %c7_111, %c0_112], %198 {strides = array<i32>} : memref<8x16x128xf32, #tpu.memory_space<vmem>>, vector<8x1x128xf32>,
    %200 = vector.extract_strided_slice %139 {offsets = [0, 8, 0], sizes = [8, 1, 128], strides = [1, 1, 1]} : vector<8x16x128xf32> to vector<8x1x128xf32>
    %201 = vector.shape_cast %200 : vector<8x1x128xf32> to vector<8x128xf32>
    %cst_113 = arith.constant dense<0.000000e+00> : vector<8x128xf32>
    %202 = tpu.matmul %197, %141, %cst_113 {dimension_numbers = #tpu.dot_dimension_numbers<[1], [0], [0], [1], [0, 0, 1, 1], [], []>} : vector<8x128xf32>, vector<128x128xf32>, vector<8x128xf32> -> vector<8x128xf32>
    %203 = arith.addf %201, %202 : vector<8x128xf32>
    %204 = math.tanh %203 : vector<8x128xf32>
    %205 = vector.shape_cast %204 : vector<8x128xf32> to vector<8x1x128xf32>
    %c0_114 = arith.constant 0 : index
    %c8_115 = arith.constant 8 : index
    %c0_116 = arith.constant 0 : index
    %206 = vector.load %arg8[%c0_114, %c8_115, %c0_116] : memref<8x16x128xf32, #tpu.memory_space<vmem>>, vector<8x1x128xf32>
    tpu.vector_store %arg8[%c0_114, %c8_115, %c0_116], %205 {strides = array<i32>} : memref<8x16x128xf32, #tpu.memory_space<vmem>>, vector<8x1x128xf32>,
    %207 = vector.extract_strided_slice %139 {offsets = [0, 9, 0], sizes = [8, 1, 128], strides = [1, 1, 1]} : vector<8x16x128xf32> to vector<8x1x128xf32>
    %208 = vector.shape_cast %207 : vector<8x1x128xf32> to vector<8x128xf32>
    %cst_117 = arith.constant dense<0.000000e+00> : vector<8x128xf32>
    %209 = tpu.matmul %204, %141, %cst_117 {dimension_numbers = #tpu.dot_dimension_numbers<[1], [0], [0], [1], [0, 0, 1, 1], [], []>} : vector<8x128xf32>, vector<128x128xf32>, vector<8x128xf32> -> vector<8x128xf32>
    %210 = arith.addf %208, %209 : vector<8x128xf32>
    %211 = math.tanh %210 : vector<8x128xf32>
    %212 = vector.shape_cast %211 : vector<8x128xf32> to vector<8x1x128xf32>
    %c0_118 = arith.constant 0 : index
    %c9_119 = arith.constant 9 : index
    %c0_120 = arith.constant 0 : index
    %213 = vector.load %arg8[%c0_118, %c9_119, %c0_120] : memref<8x16x128xf32, #tpu.memory_space<vmem>>, vector<8x1x128xf32>
    tpu.vector_store %arg8[%c0_118, %c9_119, %c0_120], %212 {strides = array<i32>} : memref<8x16x128xf32, #tpu.memory_space<vmem>>, vector<8x1x128xf32>,
    %214 = vector.extract_strided_slice %139 {offsets = [0, 10, 0], sizes = [8, 1, 128], strides = [1, 1, 1]} : vector<8x16x128xf32> to vector<8x1x128xf32>
    %215 = vector.shape_cast %214 : vector<8x1x128xf32> to vector<8x128xf32>
    %cst_121 = arith.constant dense<0.000000e+00> : vector<8x128xf32>
    %216 = tpu.matmul %211, %141, %cst_121 {dimension_numbers = #tpu.dot_dimension_numbers<[1], [0], [0], [1], [0, 0, 1, 1], [], []>} : vector<8x128xf32>, vector<128x128xf32>, vector<8x128xf32> -> vector<8x128xf32>
    %217 = arith.addf %215, %216 : vector<8x128xf32>
    %218 = math.tanh %217 : vector<8x128xf32>
    %219 = vector.shape_cast %218 : vector<8x128xf32> to vector<8x1x128xf32>
    %c0_122 = arith.constant 0 : index
    %c10_123 = arith.constant 10 : index
    %c0_124 = arith.constant 0 : index
    %220 = vector.load %arg8[%c0_122, %c10_123, %c0_124] : memref<8x16x128xf32, #tpu.memory_space<vmem>>, vector<8x1x128xf32>
    tpu.vector_store %arg8[%c0_122, %c10_123, %c0_124], %219 {strides = array<i32>} : memref<8x16x128xf32, #tpu.memory_space<vmem>>, vector<8x1x128xf32>,
    %221 = vector.extract_strided_slice %139 {offsets = [0, 11, 0], sizes = [8, 1, 128], strides = [1, 1, 1]} : vector<8x16x128xf32> to vector<8x1x128xf32>
    %222 = vector.shape_cast %221 : vector<8x1x128xf32> to vector<8x128xf32>
    %cst_125 = arith.constant dense<0.000000e+00> : vector<8x128xf32>
    %223 = tpu.matmul %218, %141, %cst_125 {dimension_numbers = #tpu.dot_dimension_numbers<[1], [0], [0], [1], [0, 0, 1, 1], [], []>} : vector<8x128xf32>, vector<128x128xf32>, vector<8x128xf32> -> vector<8x128xf32>
    %224 = arith.addf %222, %223 : vector<8x128xf32>
    %225 = math.tanh %224 : vector<8x128xf32>
    %226 = vector.shape_cast %225 : vector<8x128xf32> to vector<8x1x128xf32>
    %c0_126 = arith.constant 0 : index
    %c11_127 = arith.constant 11 : index
    %c0_128 = arith.constant 0 : index
    %227 = vector.load %arg8[%c0_126, %c11_127, %c0_128] : memref<8x16x128xf32, #tpu.memory_space<vmem>>, vector<8x1x128xf32>
    tpu.vector_store %arg8[%c0_126, %c11_127, %c0_128], %226 {strides = array<i32>} : memref<8x16x128xf32, #tpu.memory_space<vmem>>, vector<8x1x128xf32>,
    %228 = vector.extract_strided_slice %139 {offsets = [0, 12, 0], sizes = [8, 1, 128], strides = [1, 1, 1]} : vector<8x16x128xf32> to vector<8x1x128xf32>
    %229 = vector.shape_cast %228 : vector<8x1x128xf32> to vector<8x128xf32>
    %cst_129 = arith.constant dense<0.000000e+00> : vector<8x128xf32>
    %230 = tpu.matmul %225, %141, %cst_129 {dimension_numbers = #tpu.dot_dimension_numbers<[1], [0], [0], [1], [0, 0, 1, 1], [], []>} : vector<8x128xf32>, vector<128x128xf32>, vector<8x128xf32> -> vector<8x128xf32>
    %231 = arith.addf %229, %230 : vector<8x128xf32>
    %232 = math.tanh %231 : vector<8x128xf32>
    %233 = vector.shape_cast %232 : vector<8x128xf32> to vector<8x1x128xf32>
    %c0_130 = arith.constant 0 : index
    %c12_131 = arith.constant 12 : index
    %c0_132 = arith.constant 0 : index
    %234 = vector.load %arg8[%c0_130, %c12_131, %c0_132] : memref<8x16x128xf32, #tpu.memory_space<vmem>>, vector<8x1x128xf32>
    tpu.vector_store %arg8[%c0_130, %c12_131, %c0_132], %233 {strides = array<i32>} : memref<8x16x128xf32, #tpu.memory_space<vmem>>, vector<8x1x128xf32>,
    %235 = vector.extract_strided_slice %139 {offsets = [0, 13, 0], sizes = [8, 1, 128], strides = [1, 1, 1]} : vector<8x16x128xf32> to vector<8x1x128xf32>
    %236 = vector.shape_cast %235 : vector<8x1x128xf32> to vector<8x128xf32>
    %cst_133 = arith.constant dense<0.000000e+00> : vector<8x128xf32>
    %237 = tpu.matmul %232, %141, %cst_133 {dimension_numbers = #tpu.dot_dimension_numbers<[1], [0], [0], [1], [0, 0, 1, 1], [], []>} : vector<8x128xf32>, vector<128x128xf32>, vector<8x128xf32> -> vector<8x128xf32>
    %238 = arith.addf %236, %237 : vector<8x128xf32>
    %239 = math.tanh %238 : vector<8x128xf32>
    %240 = vector.shape_cast %239 : vector<8x128xf32> to vector<8x1x128xf32>
    %c0_134 = arith.constant 0 : index
    %c13_135 = arith.constant 13 : index
    %c0_136 = arith.constant 0 : index
    %241 = vector.load %arg8[%c0_134, %c13_135, %c0_136] : memref<8x16x128xf32, #tpu.memory_space<vmem>>, vector<8x1x128xf32>
    tpu.vector_store %arg8[%c0_134, %c13_135, %c0_136], %240 {strides = array<i32>} : memref<8x16x128xf32, #tpu.memory_space<vmem>>, vector<8x1x128xf32>,
    %242 = vector.extract_strided_slice %139 {offsets = [0, 14, 0], sizes = [8, 1, 128], strides = [1, 1, 1]} : vector<8x16x128xf32> to vector<8x1x128xf32>
    %243 = vector.shape_cast %242 : vector<8x1x128xf32> to vector<8x128xf32>
    %cst_137 = arith.constant dense<0.000000e+00> : vector<8x128xf32>
    %244 = tpu.matmul %239, %141, %cst_137 {dimension_numbers = #tpu.dot_dimension_numbers<[1], [0], [0], [1], [0, 0, 1, 1], [], []>} : vector<8x128xf32>, vector<128x128xf32>, vector<8x128xf32> -> vector<8x128xf32>
    %245 = arith.addf %243, %244 : vector<8x128xf32>
    %246 = math.tanh %245 : vector<8x128xf32>
    %247 = vector.shape_cast %246 : vector<8x128xf32> to vector<8x1x128xf32>
    %c0_138 = arith.constant 0 : index
    %c14_139 = arith.constant 14 : index
    %c0_140 = arith.constant 0 : index
    %248 = vector.load %arg8[%c0_138, %c14_139, %c0_140] : memref<8x16x128xf32, #tpu.memory_space<vmem>>, vector<8x1x128xf32>
    tpu.vector_store %arg8[%c0_138, %c14_139, %c0_140], %247 {strides = array<i32>} : memref<8x16x128xf32, #tpu.memory_space<vmem>>, vector<8x1x128xf32>,
    %249 = vector.extract_strided_slice %139 {offsets = [0, 15, 0], sizes = [8, 1, 128], strides = [1, 1, 1]} : vector<8x16x128xf32> to vector<8x1x128xf32>
    %250 = vector.shape_cast %249 : vector<8x1x128xf32> to vector<8x128xf32>
    %cst_141 = arith.constant dense<0.000000e+00> : vector<8x128xf32>
    %251 = tpu.matmul %246, %141, %cst_141 {dimension_numbers = #tpu.dot_dimension_numbers<[1], [0], [0], [1], [0, 0, 1, 1], [], []>} : vector<8x128xf32>, vector<128x128xf32>, vector<8x128xf32> -> vector<8x128xf32>
    %252 = arith.addf %250, %251 : vector<8x128xf32>
    %253 = math.tanh %252 : vector<8x128xf32>
    %254 = vector.shape_cast %253 : vector<8x128xf32> to vector<8x1x128xf32>
    %c0_142 = arith.constant 0 : index
    %c15_143 = arith.constant 15 : index
    %c0_144 = arith.constant 0 : index
    %255 = vector.load %arg8[%c0_142, %c15_143, %c0_144] : memref<8x16x128xf32, #tpu.memory_space<vmem>>, vector<8x1x128xf32>
    tpu.vector_store %arg8[%c0_142, %c15_143, %c0_144], %254 {strides = array<i32>} : memref<8x16x128xf32, #tpu.memory_space<vmem>>, vector<8x1x128xf32>,
    %c1_145 = arith.constant 1 : index
    %c0_146 = arith.constant 0 : index
    %c0_147 = arith.constant 0 : index
    %256 = vector.load %arg9[%c1_145, %c0_146, %c0_147] : memref<2x8x128xf32, #tpu.memory_space<vmem>>, vector<1x8x128xf32>
    %257 = vector.shape_cast %256 : vector<1x8x128xf32> to vector<8x128xf32>
    %258 = vector.shape_cast %253 : vector<8x128xf32> to vector<1x8x128xf32>
    tpu.vector_store %arg9[%c1_145, %c0_146, %c0_147], %258 {strides = array<i32>} : memref<2x8x128xf32, #tpu.memory_space<vmem>>, vector<1x8x128xf32>,
    return
  }
  func.func @transform_0(%arg0: i32, %arg1: i32) -> (i32, i32, i32) {
    %c0_i32 = arith.constant 0 : i32
    %c0_i32_0 = arith.constant 0 : i32
    return %arg0, %arg1, %c0_i32 : i32, i32, i32
  }
  func.func @transform_1(%arg0: i32, %arg1: i32) -> (i32, i32, i32) {
    %c0_i32 = arith.constant 0 : i32
    %c0_i32_0 = arith.constant 0 : i32
    %c0_i32_1 = arith.constant 0 : i32
    return %c0_i32, %arg0, %c0_i32_0 : i32, i32, i32
  }
  func.func @transform_2(%arg0: i32, %arg1: i32) -> (i32, i32) {
    %c0_i32 = arith.constant 0 : i32
    %c0_i32_0 = arith.constant 0 : i32
    %c0_i32_1 = arith.constant 0 : i32
    return %c0_i32, %c0_i32_0 : i32, i32
  }
  func.func @transform_3(%arg0: i32, %arg1: i32) -> (i32, i32) {
    %c0_i32 = arith.constant 0 : i32
    %c0_i32_0 = arith.constant 0 : i32
    %c0_i32_1 = arith.constant 0 : i32
    return %c0_i32, %c0_i32_0 : i32, i32
  }
  func.func @transform_4(%arg0: i32, %arg1: i32) -> (i32, i32, i32) {
    %c0_i32 = arith.constant 0 : i32
    %c0_i32_0 = arith.constant 0 : i32
    %c0_i32_1 = arith.constant 0 : i32
    %c0_i32_2 = arith.constant 0 : i32
    return %c0_i32, %c0_i32_0, %c0_i32_1 : i32, i32, i32
  }
  func.func @transform_5(%arg0: i32, %arg1: i32) -> (i32, i32, i32) {
    %c0_i32 = arith.constant 0 : i32
    %c0_i32_0 = arith.constant 0 : i32
    %c0_i32_1 = arith.constant 0 : i32
    %c0_i32_2 = arith.constant 0 : i32
    return %c0_i32, %c0_i32_0, %c0_i32_1 : i32, i32, i32
  }
  func.func @transform_6(%arg0: i32, %arg1: i32) -> (i32, i32, i32) {
    %c0_i32 = arith.constant 0 : i32
    %c0_i32_0 = arith.constant 0 : i32
    return %arg0, %arg1, %c0_i32 : i32, i32, i32
  }
}

</mosaic_0001>

<llo_original>
// kernel: tpu_custom_call.1
$region0: #{tpu_custom_call.1}
  #allocation0 [shape = 'u32[]', space=smem, size = 0x4, offset = 0x4, fixed_abs, tag = 'smem constant byte address 0x4 - core index']
  #allocation1 [shape = 'u32[72,128]{1,0:T(1,128)}', space=vmem, size = 0x9000, scoped, tag = 'internal scratch']
  #allocation2 [shape = 'f32[2,8,128]{2,1,0:T(8,128)}', space=vmem, size = 0x2000, scoped, tag = 'scratch operand']
  #allocation3 [shape = 'f32[8,16,128]{2,1,0:T(8,128)}', space=vmem, size = 0x10000, scoped, tag = 'scratch operand']
  #allocation4 [shape = 'f32[8,16,128]{2,1,0:T(8,128)}', space=vmem, size = 0x10000, scoped, tag = 'scratch operand']
  #allocation15 [shape = 's32[]', space=sflag, size = 0x4, offset = 0, fixed_abs, tag = 'sflag constant byte address 0x0 - dummy sync flag']
  #allocation17 [shape = 's32[]', space=sflag, size = 0x4, offset = 0, fixed_abs, tag = 'sflag constant byte address 0x0 - dummy sync flag']
  %s0 = inlined_call_operand.hbm [shape: f32[16,48,128], index: 0, kind: input, shape index: {}]
  %s1 = inlined_call_operand.hbm [shape: f32[2,16,128], index: 1, kind: input, shape index: {}]
  %s2 = inlined_call_operand.hbm [shape: f32[128,128], index: 2, kind: input, shape index: {}]
  %s3 = inlined_call_operand.hbm [shape: f32[128,128], index: 3, kind: input, shape index: {}]
  %s4 = inlined_call_operand.hbm [shape: f32[2,128,128], index: 4, kind: input, shape index: {}]
  %s5 = inlined_call_operand.vmem [shape: f32[2,1,128], index: 5, kind: input, shape index: {}]
  %s6 = inlined_call_operand.hbm [shape: f32[16,48,128], index: 6, kind: output, shape index: {}]
  %s7 = sld [smem:[#allocation0]]
  $region81: #{tpu_custom_call.1} parent=0
    _
  %s9 = ssub.s32 1, %s7
  %s10 = scalar_select 0, %s9, %s7
  $region1: #{tpu_custom_call.1} parent=0
    #allocation5 [shape = 'u8[131072]{0}', space=vmem, size = 0x20000, scoped, tag = 'input window, operand 0']
    #allocation6 [shape = 's32[2]{0}', space=sflag, size = 0x8, scoped, tag = 'scoped memory for tpu_custom_call.1']
    #allocation7 [shape = 's32[2]{0}', space=sflag, size = 0x8, scoped, tag = 'scoped memory for tpu_custom_call.1']
    #allocation8 [shape = 'u8[16384]{0}', space=vmem, size = 0x4000, scoped, tag = 'input window, operand 1']
    #allocation9 [shape = 's32[2]{0}', space=sflag, size = 0x8, scoped, tag = 'scoped memory for tpu_custom_call.1']
    #allocation10 [shape = 'u8[65536]{0}', space=vmem, size = 0x10000, scoped, tag = 'input window, operand 2, single buffered']
    #allocation11 [shape = 'u8[65536]{0}', space=vmem, size = 0x10000, scoped, tag = 'input window, operand 3, single buffered']
    #allocation12 [shape = 's32[1]{0}', space=sflag, size = 0x4, scoped, tag = 'scoped memory for tpu_custom_call.1']
    #allocation13 [shape = 'u8[131072]{0}', space=vmem, size = 0x20000, scoped, tag = 'input window, operand 4, single buffered']
    #allocation14 [shape = 'u8[131072]{0}', space=vmem, size = 0x20000, scoped, tag = 'output window, operand 0']
    %11 = vsyncpa [#allocation6], 0
    %s12 = scalar_lea.sflag [#allocation6], 1
    %13 = vsyncpa %s12, 0
    %14 = vsyncpa [#allocation9], 0
    %s15 = scalar_lea.sflag [#allocation9], 1
    %16 = vsyncpa %s15, 0
    %17 = vsyncpa [#allocation12], 0
    %18 = vsyncpa [#allocation7], 0
    %s19 = scalar_lea.sflag [#allocation7], 1
    %20 = vsyncpa %s19, 0
    loop: start=0, step=1, limit=8
    $region2: #{tpu_custom_call.1} parent=1 // loop_pre_header
      _
    $region3: #{tpu_custom_call.1} parent=1 // loop_header
      %s22 = sphi 0, %s26
      %p23 = scmp.ge.s32.totalorder %s22, 8
      %s29 = sphi 0, %s41
      %s30 = sphi 0, %s37
      %s31 = sphi 0, %s29
      %s32 = sphi 0, %s30
      %s33 = sphi 0, %s31
      %s34 = sphi 0, %s32
      %s46 = sphi 0, %s48
      %s49 = sphi 0, %s46
      %s50 = sphi 0, %s49
      %s66 = sphi 0, %s50
      %s72 = sphi 0, %s74
      %s75 = sphi 0, %s72
      %s76 = sphi 0, %s75
      %s92 = sphi 0, %s76
      %s96 = sphi 0, %s96
      %s98 = sphi 0, %s96
      %s99 = sphi 0, %s98
      %s113 = sphi 0, %s99
      %s117 = sphi 0, %s117
      %s119 = sphi 0, %s117
      %s120 = sphi 0, %s119
      %s134 = sphi 0, %s120
      %s138 = sphi 0, %s138
      %s140 = sphi 0, %s138
      %s141 = sphi 0, %s140
      %s155 = sphi 0, %s141
      %s159 = sphi 0, %s159
      %s161 = sphi 0, %s159
      %s162 = sphi 0, %s161
      %s176 = sphi 0, %s162
      %s184 = sphi 0, %s186
      %s187 = sphi 0, %s184
      %s188 = sphi 0, %s187
      %s204 = sphi 0, %s188
    $region4: #{tpu_custom_call.1} parent=1 // loop_header_branch
      %25 = sbr.rel (%p23) target = $region8
    $region5: #{tpu_custom_call.1} parent=1 // loop_body
      %s27 = ssub.s32 %s22, 1
      %s28 = ssub.s32 %s22, 2
      %s35 = sadd.s32 1, %s30
      %p36 = scmp.ge.s32.totalorder %s35, 3
      %s37 = scalar_select %p36, 0, %s35
      %s38 = sadd.s32 1, %s29
      %s39 = scalar_select %p36, %s38, %s29
      %p40 = scmp.ge.s32.totalorder %s39, 2
      %s41 = scalar_select %p40, 0, %s39
      %s42 = ssub.s32 %s29, %s41
      %s43 = ssub.s32 %s30, %s37
      %s44 = sor.u32 %s42, %s43
      %p45 = scmp.eq.s32.totalorder %s44, 0
      %s47 = sadd.s32 %s46, 1
      %s48 = scalar_select %p45, %s46, %s47
      %p51 = pneg %p45
      %p52 = scmp.eq.s32.totalorder %s22, 5
      %p53 = por %p51, %p52
      %p54 = scmp.ne.s32.totalorder %s46, %s49
      %p55 = scmp.eq.s32.totalorder %s22, 0
      %p56 = por %p54, %p55
      %p57 = scmp.ne.s32.totalorder %s46, %s49
      %p58 = scmp.eq.s32.totalorder %s27, 5
      %p59 = por %p57, %p58
      %p60 = scmp.ne.s32.totalorder %s49, %s50
      %p61 = scmp.eq.s32.totalorder %s27, 0
      %p62 = por %p60, %p61
      %p63 = scmp.ne.s32.totalorder %s49, %s50
      %p64 = scmp.eq.s32.totalorder %s28, 5
      %p65 = por %p63, %p64
      %p67 = scmp.ne.s32.totalorder %s50, %s66
      %p68 = scmp.eq.s32.totalorder %s28, 0
      %p69 = por %p67, %p68
      %s70 = ssub.s32 %s29, %s41
      %p71 = scmp.eq.s32.totalorder %s70, 0
      %s73 = sadd.s32 %s72, 1
      %s74 = scalar_select %p71, %s72, %s73
      %p77 = pneg %p71
      %p78 = scmp.eq.s32.totalorder %s22, 5
      %p79 = por %p77, %p78
      %p80 = scmp.ne.s32.totalorder %s72, %s75
      %p81 = scmp.eq.s32.totalorder %s22, 0
      %p82 = por %p80, %p81
      %p83 = scmp.ne.s32.totalorder %s72, %s75
      %p84 = scmp.eq.s32.totalorder %s27, 5
      %p85 = por %p83, %p84
      %p86 = scmp.ne.s32.totalorder %s75, %s76
      %p87 = scmp.eq.s32.totalorder %s27, 0
      %p88 = por %p86, %p87
      %p89 = scmp.ne.s32.totalorder %s75, %s76
      %p90 = scmp.eq.s32.totalorder %s28, 5
      %p91 = por %p89, %p90
      %p93 = scmp.ne.s32.totalorder %s76, %s92
      %p94 = scmp.eq.s32.totalorder %s28, 0
      %p95 = por %p93, %p94
      %s97 = sadd.s32 %s96, 1
      %p100 = scmp.eq.s32.totalorder %s22, 5
      %p101 = scmp.ne.s32.totalorder %s96, %s98
      %p102 = scmp.eq.s32.totalorder %s22, 0
      %p103 = por %p101, %p102
      %p104 = scmp.ne.s32.totalorder %s96, %s98
      %p105 = scmp.eq.s32.totalorder %s27, 5
      %p106 = por %p104, %p105
      %p107 = scmp.ne.s32.totalorder %s98, %s99
      %p108 = scmp.eq.s32.totalorder %s27, 0
      %p109 = por %p107, %p108
      %p110 = scmp.ne.s32.totalorder %s98, %s99
      %p111 = scmp.eq.s32.totalorder %s28, 5
      %p112 = por %p110, %p111
      %p114 = scmp.ne.s32.totalorder %s99, %s113
      %p115 = scmp.eq.s32.totalorder %s28, 0
      %p116 = por %p114, %p115
      %s118 = sadd.s32 %s117, 1
      %p121 = scmp.eq.s32.totalorder %s22, 5
      %p122 = scmp.ne.s32.totalorder %s117, %s119
      %p123 = scmp.eq.s32.totalorder %s22, 0
      %p124 = por %p122, %p123
      %p125 = scmp.ne.s32.totalorder %s117, %s119
      %p126 = scmp.eq.s32.totalorder %s27, 5
      %p127 = por %p125, %p126
      %p128 = scmp.ne.s32.totalorder %s119, %s120
      %p129 = scmp.eq.s32.totalorder %s27, 0
      %p130 = por %p128, %p129
      %p131 = scmp.ne.s32.totalorder %s119, %s120
      %p132 = scmp.eq.s32.totalorder %s28, 5
      %p133 = por %p131, %p132
      %p135 = scmp.ne.s32.totalorder %s120, %s134
      %p136 = scmp.eq.s32.totalorder %s28, 0
      %p137 = por %p135, %p136
      %s139 = sadd.s32 %s138, 1
      %p142 = scmp.eq.s32.totalorder %s22, 5
      %p143 = scmp.ne.s32.totalorder %s138, %s140
      %p144 = scmp.eq.s32.totalorder %s22, 0
      %p145 = por %p143, %p144
      %p146 = scmp.ne.s32.totalorder %s138, %s140
      %p147 = scmp.eq.s32.totalorder %s27, 5
      %p148 = por %p146, %p147
      %p149 = scmp.ne.s32.totalorder %s140, %s141
      %p150 = scmp.eq.s32.totalorder %s27, 0
      %p151 = por %p149, %p150
      %p152 = scmp.ne.s32.totalorder %s140, %s141
      %p153 = scmp.eq.s32.totalorder %s28, 5
      %p154 = por %p152, %p153
      %p156 = scmp.ne.s32.totalorder %s141, %s155
      %p157 = scmp.eq.s32.totalorder %s28, 0
      %p158 = por %p156, %p157
      %s160 = sadd.s32 %s159, 1
      %p163 = scmp.eq.s32.totalorder %s22, 5
      %p164 = scmp.ne.s32.totalorder %s159, %s161
      %p165 = scmp.eq.s32.totalorder %s22, 0
      %p166 = por %p164, %p165
      %p167 = scmp.ne.s32.totalorder %s159, %s161
      %p168 = scmp.eq.s32.totalorder %s27, 5
      %p169 = por %p167, %p168
      %p170 = scmp.ne.s32.totalorder %s161, %s162
      %p171 = scmp.eq.s32.totalorder %s27, 0
      %p172 = por %p170, %p171
      %p173 = scmp.ne.s32.totalorder %s161, %s162
      %p174 = scmp.eq.s32.totalorder %s28, 5
      %p175 = por %p173, %p174
      %p177 = scmp.ne.s32.totalorder %s162, %s176
      %p178 = scmp.eq.s32.totalorder %s28, 0
      %p179 = por %p177, %p178
      %s180 = ssub.s32 %s29, %s41
      %s181 = ssub.s32 %s30, %s37
      %s182 = sor.u32 %s180, %s181
      %p183 = scmp.eq.s32.totalorder %s182, 0
      %s185 = sadd.s32 %s184, 1
      %s186 = scalar_select %p183, %s184, %s185
      %p189 = pneg %p183
      %p190 = scmp.eq.s32.totalorder %s22, 5
      %p191 = por %p189, %p190
      %p192 = scmp.ne.s32.totalorder %s184, %s187
      %p193 = scmp.eq.s32.totalorder %s22, 0
      %p194 = por %p192, %p193
      %p195 = scmp.ne.s32.totalorder %s184, %s187
      %p196 = scmp.eq.s32.totalorder %s27, 5
      %p197 = por %p195, %p196
      %p198 = scmp.ne.s32.totalorder %s187, %s188
      %p199 = scmp.eq.s32.totalorder %s27, 0
      %p200 = por %p198, %p199
      %p201 = scmp.ne.s32.totalorder %s187, %s188
      %p202 = scmp.eq.s32.totalorder %s28, 5
      %p203 = por %p201, %p202
      %p205 = scmp.ne.s32.totalorder %s188, %s204
      %p206 = scmp.eq.s32.totalorder %s28, 0
      %p207 = por %p205, %p206
      %p208 = scmp.le.s32.totalorder 1, %s22
      %p209 = scmp.lt.s32.totalorder %s22, 7
      %p210 = pnand %p208, %p209
      %p211 = pneg %p210
      // Predicated region
      $region9: #{tpu_custom_call.1} parent=5 // pred_check
        _
      $region10: #{tpu_custom_call.1} parent=5 // pred_check_branch
        %213 = sbr.rel (%p210) target = $region12
      $region11: #{tpu_custom_call.1} parent=5 // pred_region
        %s214 = ssub.s32 %s22, 1
        // Predicated region
        $region13: #{tpu_custom_call.1} parent=11 // pred_check
          %p215 = pneg %p109
        $region14: #{tpu_custom_call.1} parent=11 // pred_check_branch
          %217 = sbr.rel (%p215) target = $region16
        $region15: #{tpu_custom_call.1} parent=11 // pred_region
          %219 = vsyncadd [#allocation9], 0
          %s220 = sshll.u32 %s2, 4
          %s221 = int_to_ptr.hbm [resolvable:$true] %s220
          %s222 = sshll.u32 [#allocation10], 4
          %s223 = int_to_ptr.vmem [resolvable:$true] %s222
          %228 = dma.hbm_to_vmem [thread:$0]  %s221, 2048, %s223, [#allocation9], 128, 128, 8
        $region16: #{tpu_custom_call.1} parent=11 // pred_fallthru
          _
        // Predicated region
        $region17: #{tpu_custom_call.1} parent=11 // pred_check
          %p229 = pneg %p130
        $region18: #{tpu_custom_call.1} parent=11 // pred_check_branch
          %231 = sbr.rel (%p229) target = $region20
        $region19: #{tpu_custom_call.1} parent=11 // pred_region
          %233 = vsyncadd [#allocation12], 0
          %s234 = sshll.u32 %s3, 4
          %s235 = int_to_ptr.hbm [resolvable:$true] %s234
          %s236 = sshll.u32 [#allocation11], 4
          %s237 = int_to_ptr.vmem [resolvable:$true] %s236
          %242 = dma.hbm_to_vmem [thread:$0]  %s235, 2048, %s237, [#allocation12], 128, 128, 8
        $region20: #{tpu_custom_call.1} parent=11 // pred_fallthru
          _
        // Predicated region
        $region21: #{tpu_custom_call.1} parent=11 // pred_check
          %p243 = pneg %p151
        $region22: #{tpu_custom_call.1} parent=11 // pred_check_branch
          %245 = sbr.rel (%p243) target = $region24
        $region23: #{tpu_custom_call.1} parent=11 // pred_region
          %247 = vsyncadd [#allocation12], 0
          %s248 = sshll.u32 %s4, 4
          %s249 = int_to_ptr.hbm [resolvable:$true] %s248
          %s250 = sshll.u32 [#allocation13], 4
          %s251 = int_to_ptr.vmem [resolvable:$true] %s250
          %256 = dma.hbm_to_vmem [thread:$0]  %s249, 4096, %s251, [#allocation12], 128, 128, 8
        $region24: #{tpu_custom_call.1} parent=11 // pred_fallthru
          _
        // Predicated region
        $region25: #{tpu_custom_call.1} parent=11 // pred_check
          %p257 = pneg %p172
        $region26: #{tpu_custom_call.1} parent=11 // pred_check_branch
          %259 = sbr.rel (%p257) target = $region28
        $region27: #{tpu_custom_call.1} parent=11 // pred_region
          _
        $region28: #{tpu_custom_call.1} parent=11 // pred_fallthru
          _
      $region12: #{tpu_custom_call.1} parent=5 // pred_fallthru
        _
      %p260 = scmp.lt.s32.totalorder %s22, 6
      // Predicated region
      $region29: #{tpu_custom_call.1} parent=5 // pred_check
        %p261 = pneg %p260
      $region30: #{tpu_custom_call.1} parent=5 // pred_check_branch
        %263 = sbr.rel (%p261) target = $region32
      $region31: #{tpu_custom_call.1} parent=5 // pred_region
        // Predicated region
        $region33: #{tpu_custom_call.1} parent=31 // pred_check
          %p264 = pneg %p56
        $region34: #{tpu_custom_call.1} parent=31 // pred_check_branch
          %266 = sbr.rel (%p264) target = $region36
        $region35: #{tpu_custom_call.1} parent=31 // pred_region
          #allocation16 [shape = 'u32[6]{0}', space=smem, size = 0x18, scoped, tag = 'DMA stride descriptor']
          %s267 = sand.u32 %s46, 1
          %s268 = scalar_lea.sflag [#allocation6], %s267
          %s269 = sand.u32 %s46, 1
          %s270 = smul.addr %s269, 128
          %s271 = scalar_lea.vmem [#allocation5], %s270
          %s272 = smul.u32 8, %s29
          %s273 = smul.u32 2, %s30
          %275 = vsyncadd %s268, 0
          %s276 = smul.addr %s272, 6
          %s277 = sadd.s32 %s273, %s276
          %s278 = smul.addr %s277, 8
          %s279 = scalar_lea.hbm %s0, %s278
          %s281 = sshll.u32 1, 14
          %s282 = sxor.u32 4294967295, %s281
          %s284 = sld [smem:[#allocation0]]
          %s285 = sadd.s32 2, %s284
          %s287 = sshll.u32 7, 26
          %s288 = sxor.u32 4294967295, %s287
          %s289 = sand.u32 0, %s288
          %s290 = sshll.u32 %s285, 26
          %s291 = sor.u32 %s289, %s290
          %s292 = sshll.u32 %s279, 4
          %s293 = int_to_ptr.hbm [resolvable:$true] %s292
          %s294 = sshll.u32 %s271, 4
          %s295 = int_to_ptr.vmem [resolvable:$true] %s294
          %301 = sst [smem:[#allocation16]] 768
          %s302 = scalar_lea.smem [#allocation16], 1
          %303 = sst [smem:[%s302]] 256
          %s304 = scalar_lea.smem [#allocation16], 2
          %305 = sst [smem:[%s304]] 2
          %s306 = scalar_lea.smem [#allocation16], 3
          %307 = sst [smem:[%s306]] 128
          %s308 = scalar_lea.smem [#allocation16], 4
          %309 = sst [smem:[%s308]] 128
          %s310 = scalar_lea.smem [#allocation16], 5
          %311 = sst [smem:[%s310]] 8
          %313 = dma.general %s293, 2048, %s295, %s268, [#allocation15], [#allocation16], %s291, 0
        $region36: #{tpu_custom_call.1} parent=31 // pred_fallthru
          _
        // Predicated region
        $region37: #{tpu_custom_call.1} parent=31 // pred_check
          %p314 = pneg %p82
        $region38: #{tpu_custom_call.1} parent=31 // pred_check_branch
          %316 = sbr.rel (%p314) target = $region40
        $region39: #{tpu_custom_call.1} parent=31 // pred_region
          %s317 = sand.u32 %s22, 1
          %s318 = scalar_lea.sflag [#allocation9], %s317
          %s319 = sand.u32 %s72, 1
          %s320 = smul.addr %s319, 16
          %s321 = scalar_lea.vmem [#allocation8], %s320
          %323 = vsyncadd %s318, 0
          %s324 = smul.addr %s29, 8
          %s325 = scalar_lea.hbm %s1, %s324
          %s326 = sshll.u32 %s325, 4
          %s327 = int_to_ptr.hbm [resolvable:$true] %s326
          %s328 = sshll.u32 %s321, 4
          %s329 = int_to_ptr.vmem [resolvable:$true] %s328
          %334 = dma.hbm_to_vmem [thread:$0]  %s327, 256, %s329, %s318, 256, 128, 8
        $region40: #{tpu_custom_call.1} parent=31 // pred_fallthru
          _
      $region32: #{tpu_custom_call.1} parent=5 // pred_fallthru
        _
      %p335 = scmp.le.s32.totalorder 1, %s22
      %p336 = scmp.lt.s32.totalorder %s22, 7
      %p337 = pnand %p335, %p336
      %p338 = pneg %p337
      // Predicated region
      $region41: #{tpu_custom_call.1} parent=5 // pred_check
        _
      $region42: #{tpu_custom_call.1} parent=5 // pred_check_branch
        %340 = sbr.rel (%p337) target = $region44
      $region43: #{tpu_custom_call.1} parent=5 // pred_region
        %s341 = ssub.s32 %s22, 1
        %s342 = sand.u32 %s49, 1
        %s343 = scalar_lea.sflag [#allocation6], %s342
        %s344 = sand.u32 %s49, 1
        %s345 = smul.addr %s344, 128
        %s346 = scalar_lea.vmem [#allocation5], %s345
        // Predicated region
        $region45: #{tpu_custom_call.1} parent=43 // pred_check
          %p347 = pneg %p62
        $region46: #{tpu_custom_call.1} parent=43 // pred_check_branch
          %349 = sbr.rel (%p347) target = $region48
        $region47: #{tpu_custom_call.1} parent=43 // pred_region
          %351 = dma.done %s343, 2048
        $region48: #{tpu_custom_call.1} parent=43 // pred_fallthru
          _
        %s352 = sand.u32 %s27, 1
        %s353 = scalar_lea.sflag [#allocation9], %s352
        %s354 = sand.u32 %s75, 1
        %s355 = smul.addr %s354, 16
        %s356 = scalar_lea.vmem [#allocation8], %s355
        // Predicated region
        $region49: #{tpu_custom_call.1} parent=43 // pred_check
          %p357 = pneg %p88
        $region50: #{tpu_custom_call.1} parent=43 // pred_check_branch
          %359 = sbr.rel (%p357) target = $region52
        $region51: #{tpu_custom_call.1} parent=43 // pred_region
          %361 = dma.done %s353, 256
        $region52: #{tpu_custom_call.1} parent=43 // pred_fallthru
          _
        // Predicated region
        $region53: #{tpu_custom_call.1} parent=43 // pred_check
          %p362 = pneg %p109
        $region54: #{tpu_custom_call.1} parent=43 // pred_check_branch
          %364 = sbr.rel (%p362) target = $region56
        $region55: #{tpu_custom_call.1} parent=43 // pred_region
          %366 = dma.done [#allocation9], 2048
        $region56: #{tpu_custom_call.1} parent=43 // pred_fallthru
          _
        // Predicated region
        $region57: #{tpu_custom_call.1} parent=43 // pred_check
          %p367 = pneg %p130
        $region58: #{tpu_custom_call.1} parent=43 // pred_check_branch
          %369 = sbr.rel (%p367) target = $region60
        $region59: #{tpu_custom_call.1} parent=43 // pred_region
          %371 = dma.done [#allocation12], 2048
        $region60: #{tpu_custom_call.1} parent=43 // pred_fallthru
          _
        // Predicated region
        $region61: #{tpu_custom_call.1} parent=43 // pred_check
          %p372 = pneg %p151
        $region62: #{tpu_custom_call.1} parent=43 // pred_check_branch
          %374 = sbr.rel (%p372) target = $region64
        $region63: #{tpu_custom_call.1} parent=43 // pred_region
          %376 = dma.done [#allocation12], 4096
        $region64: #{tpu_custom_call.1} parent=43 // pred_fallthru
          _
        %s377 = sand.u32 %s49, 1
        %s378 = scalar_lea.sflag [#allocation6], %s377
        %s379 = sand.u32 %s49, 1
        %s380 = smul.addr %s379, 128
        %s381 = scalar_lea.vmem [#allocation5], %s380
        %p382 = pneg %p62
        %p383 = pneg %p59
        %s384 = sand.u32 %s27, 1
        %s385 = scalar_lea.sflag [#allocation9], %s384
        %s386 = sand.u32 %s75, 1
        %s387 = smul.addr %s386, 16
        %s388 = scalar_lea.vmem [#allocation8], %s387
        %p389 = pneg %p88
        %p390 = pneg %p85
        %p391 = pneg %p109
        %p392 = pneg %p106
        %p393 = pneg %p130
        %p394 = pneg %p127
        %p395 = pneg %p151
        %p396 = pneg %p148
        %p397 = pneg %p172
        %p398 = pneg %p169
        %p399 = pneg %p200
        %p400 = pneg %p197
        %s401 = sand.u32 %s187, 1
        %s402 = scalar_lea.sflag [#allocation7], %s401
        %s403 = sand.u32 %s187, 1
        %s404 = smul.addr %s403, 128
        %s405 = scalar_lea.vmem [#allocation14], %s404
        %s406 = smul.u32 8, %s31
        %s407 = smul.u32 2, %s32
        %s408 = smul.u32 8, %s31
        %s409 = smul.u32 2, %s32
        %p410 = scmp.eq.s32.totalorder %s32, 0
        // Predicated region
        $region65: #{tpu_custom_call.1} parent=43 // pred_check
          %p411 = pneg %p410
        $region66: #{tpu_custom_call.1} parent=43 // pred_check_branch
          %413 = sbr.rel (%p411) target = $region68
        $region67: #{tpu_custom_call.1} parent=43 // pred_region
          %v414 = vld [vmem:[%s356] sm:$0xff]
          %v415 = vld [vmem:[%s356 + $0x8] sm:$0xff]
          %416 = vst [vmem:[#allocation2] sm:$0xff] %v414
          %417 = vst [vmem:[#allocation2 + $0x8] sm:$0xff] %v415
        $region68: #{tpu_custom_call.1} parent=43 // pred_fallthru
          _
        %v418 = vld [vmem:[%s346] sm:$0xff]
        %v419 = vld [vmem:[%s346 + $0x8] sm:$0xff]
        %v420 = vld [vmem:[%s346 + $0x10] sm:$0xff]
        %v421 = vld [vmem:[%s346 + $0x18] sm:$0xff]
        %v422 = vld [vmem:[%s346 + $0x20] sm:$0xff]
        %v423 = vld [vmem:[%s346 + $0x28] sm:$0xff]
        %v424 = vld [vmem:[%s346 + $0x30] sm:$0xff]
        %v425 = vld [vmem:[%s346 + $0x38] sm:$0xff]
        %v426 = vld [vmem:[%s346 + $0x40] sm:$0xff]
        %v427 = vld [vmem:[%s346 + $0x48] sm:$0xff]
        %v428 = vld [vmem:[%s346 + $0x50] sm:$0xff]
        %v429 = vld [vmem:[%s346 + $0x58] sm:$0xff]
        %v430 = vld [vmem:[%s346 + $0x60] sm:$0xff]
        %v431 = vld [vmem:[%s346 + $0x68] sm:$0xff]
        %v432 = vld [vmem:[%s346 + $0x70] sm:$0xff]
        %v433 = vld [vmem:[%s346 + $0x78] sm:$0xff]
        %v434 = vld [vmem:[#allocation10] sm:$0xff]
        %v435 = vld [vmem:[#allocation10 + $0x8] sm:$0xff]
        %v436 = vld [vmem:[#allocation10 + $0x10] sm:$0xff]
        %v437 = vld [vmem:[#allocation10 + $0x18] sm:$0xff]
        %v438 = vld [vmem:[#allocation10 + $0x20] sm:$0xff]
        %v439 = vld [vmem:[#allocation10 + $0x28] sm:$0xff]
        %v440 = vld [vmem:[#allocation10 + $0x30] sm:$0xff]
        %v441 = vld [vmem:[#allocation10 + $0x38] sm:$0xff]
        %v442 = vld [vmem:[#allocation10 + $0x40] sm:$0xff]
        %v443 = vld [vmem:[#allocation10 + $0x48] sm:$0xff]
        %v444 = vld [vmem:[#allocation10 + $0x50] sm:$0xff]
        %v445 = vld [vmem:[#allocation10 + $0x58] sm:$0xff]
        %v446 = vld [vmem:[#allocation10 + $0x60] sm:$0xff]
        %v447 = vld [vmem:[#allocation10 + $0x68] sm:$0xff]
        %v448 = vld [vmem:[#allocation10 + $0x70] sm:$0xff]
        %v449 = vld [vmem:[#allocation10 + $0x78] sm:$0xff]
        %v450 = vld [vmem:[%s5] sm:$0x1]
        %v452 = vperm.slane %v450, 0
        %454 = vmatpush.msra.mxu0 %v449
        %455 = vmatpush.msra.mxu0 %v448
        %456 = vmatpush.msra.mxu0 %v447
        %457 = vmatpush.msra.mxu0 %v446
        %458 = vmatpush.msra.mxu0 %v445
        %459 = vmatpush.msra.mxu0 %v444
        %460 = vmatpush.msra.mxu0 %v443
        %461 = vmatpush.msra.mxu0 %v442
        %462 = vmatpush.msra.mxu0 %v441
        %463 = vmatpush.msra.mxu0 %v440
        %464 = vmatpush.msra.mxu0 %v439
        %465 = vmatpush.msra.mxu0 %v438
        %466 = vmatpush.msra.mxu0 %v437
        %467 = vmatpush.msra.mxu0 %v436
        %468 = vmatpush.msra.mxu0 %v435
        %469 = vmatpush.msra.mxu0 %v434
        %470 = vmatmul.f32.gmra.mxu0 %v418
        %v471 = vpop.f32.mrf.mxu0
        %v472 = vadd.f32 %v452, %v471
        %473 = vmatmul.f32.gmra.mxu0 %v419
        %v474 = vpop.f32.mrf.mxu0
        %v475 = vadd.f32 %v452, %v474
        %476 = vmatmul.f32.gmra.mxu0 %v420
        %v477 = vpop.f32.mrf.mxu0
        %v478 = vadd.f32 %v452, %v477
        %479 = vmatmul.f32.gmra.mxu0 %v421
        %v480 = vpop.f32.mrf.mxu0
        %v481 = vadd.f32 %v452, %v480
        %482 = vmatmul.f32.gmra.mxu0 %v422
        %v483 = vpop.f32.mrf.mxu0
        %v484 = vadd.f32 %v452, %v483
        %485 = vmatmul.f32.gmra.mxu0 %v423
        %v486 = vpop.f32.mrf.mxu0
        %v487 = vadd.f32 %v452, %v486
        %488 = vmatmul.f32.gmra.mxu0 %v424
        %v489 = vpop.f32.mrf.mxu0
        %v490 = vadd.f32 %v452, %v489
        %491 = vmatmul.f32.gmra.mxu0 %v425
        %v492 = vpop.f32.mrf.mxu0
        %v493 = vadd.f32 %v452, %v492
        %494 = vmatmul.f32.gmra.mxu0 %v426
        %v495 = vpop.f32.mrf.mxu0
        %v496 = vadd.f32 %v452, %v495
        %497 = vmatmul.f32.gmra.mxu0 %v427
        %v498 = vpop.f32.mrf.mxu0
        %v499 = vadd.f32 %v452, %v498
        %500 = vmatmul.f32.gmra.mxu0 %v428
        %v501 = vpop.f32.mrf.mxu0
        %v502 = vadd.f32 %v452, %v501
        %503 = vmatmul.f32.gmra.mxu0 %v429
        %v504 = vpop.f32.mrf.mxu0
        %v505 = vadd.f32 %v452, %v504
        %506 = vmatmul.f32.gmra.mxu0 %v430
        %v507 = vpop.f32.mrf.mxu0
        %v508 = vadd.f32 %v452, %v507
        %509 = vmatmul.f32.gmra.mxu0 %v431
        %v510 = vpop.f32.mrf.mxu0
        %v511 = vadd.f32 %v452, %v510
        %512 = vmatmul.f32.gmra.mxu0 %v432
        %v513 = vpop.f32.mrf.mxu0
        %v514 = vadd.f32 %v452, %v513
        %515 = vmatmul.f32.gmra.mxu0 %v433
        %v516 = vpop.f32.mrf.mxu0
        %v517 = vadd.f32 %v452, %v516
        %518 = vdwg.mxu0
        %v519 = vld [vmem:[#allocation13] sm:$0xff]
        %v520 = vld [vmem:[#allocation13 + $0x8] sm:$0xff]
        %v521 = vld [vmem:[#allocation13 + $0x10] sm:$0xff]
        %v522 = vld [vmem:[#allocation13 + $0x18] sm:$0xff]
        %v523 = vld [vmem:[#allocation13 + $0x20] sm:$0xff]
        %v524 = vld [vmem:[#allocation13 + $0x28] sm:$0xff]
        %v525 = vld [vmem:[#allocation13 + $0x30] sm:$0xff]
        %v526 = vld [vmem:[#allocation13 + $0x38] sm:$0xff]
        %v527 = vld [vmem:[#allocation13 + $0x40] sm:$0xff]
        %v528 = vld [vmem:[#allocation13 + $0x48] sm:$0xff]
        %v529 = vld [vmem:[#allocation13 + $0x50] sm:$0xff]
        %v530 = vld [vmem:[#allocation13 + $0x58] sm:$0xff]
        %v531 = vld [vmem:[#allocation13 + $0x60] sm:$0xff]
        %v532 = vld [vmem:[#allocation13 + $0x68] sm:$0xff]
        %v533 = vld [vmem:[#allocation13 + $0x70] sm:$0xff]
        %v534 = vld [vmem:[#allocation13 + $0x78] sm:$0xff]
        %v535 = vld [vmem:[#allocation2] sm:$0xff]
        %536 = vmatpush.msra.mxu0 %v534
        %537 = vmatpush.msra.mxu0 %v533
        %538 = vmatpush.msra.mxu0 %v532
        %539 = vmatpush.msra.mxu0 %v531
        %540 = vmatpush.msra.mxu0 %v530
        %541 = vmatpush.msra.mxu0 %v529
        %542 = vmatpush.msra.mxu0 %v528
        %543 = vmatpush.msra.mxu0 %v527
        %544 = vmatpush.msra.mxu0 %v526
        %545 = vmatpush.msra.mxu0 %v525
        %546 = vmatpush.msra.mxu0 %v524
        %547 = vmatpush.msra.mxu0 %v523
        %548 = vmatpush.msra.mxu0 %v522
        %549 = vmatpush.msra.mxu0 %v521
        %550 = vmatpush.msra.mxu0 %v520
        %551 = vmatpush.msra.mxu0 %v519
        %552 = vmatmul.f32.gmra.mxu0 %v535
        %v553 = vpop.f32.mrf.mxu0
        %v554 = vadd.f32 0.0, %v553
        %555 = vdwg.mxu0
        %v557 = vrot.slane %v554, 1
        %v558 = vrot.slane %v554, 2
        %v559 = vrot.slane %v554, 3
        %v560 = vrot.slane %v554, 4
        %v561 = vrot.slane %v554, 5
        %v562 = vrot.slane %v554, 6
        %v563 = vrot.slane %v554, 7
        %v572 = vadd.f32 %v472, %v554
        %v573 = vadd.f32 %v478, %v557
        %v574 = vadd.f32 %v484, %v558
        %v575 = vadd.f32 %v490, %v559
        %v576 = vadd.f32 %v496, %v560
        %v577 = vadd.f32 %v502, %v561
        %v578 = vadd.f32 %v508, %v562
        %v579 = vadd.f32 %v514, %v563
        %v580 = vtanh.pop %v572
        %v581 = vtanh.pop %v573
        %v582 = vtanh.pop %v574
        %v583 = vtanh.pop %v575
        %v584 = vtanh.pop %v576
        %v585 = vtanh.pop %v577
        %v586 = vtanh.pop %v578
        %v587 = vtanh.pop %v579
        %588 = vst [vmem:[#allocation3] sm:$0x1] %v580
        %589 = vst [vmem:[#allocation3 + $0x10] sm:$0x1] %v581
        %590 = vst [vmem:[#allocation3 + $0x20] sm:$0x1] %v582
        %591 = vst [vmem:[#allocation3 + $0x30] sm:$0x1] %v583
        %592 = vst [vmem:[#allocation3 + $0x40] sm:$0x1] %v584
        %593 = vst [vmem:[#allocation3 + $0x50] sm:$0x1] %v585
        %594 = vst [vmem:[#allocation3 + $0x60] sm:$0x1] %v586
        %595 = vst [vmem:[#allocation3 + $0x70] sm:$0x1] %v587
        %v604 = vrot.slane %v581, 7
        %vm605 = vcmask 1041409
        %v606 = vsel %vm605, %v604, %v580
        %v607 = vrot.slane %v582, 6
        %vm608 = vcmask 1042434
        %v609 = vsel %vm608, %v607, %v606
        %v610 = vrot.slane %v583, 5
        %vm611 = vcmask 1043459
        %v612 = vsel %vm611, %v610, %v609
        %v613 = vrot.slane %v584, 4
        %vm614 = vcmask 1044484
        %v615 = vsel %vm614, %v613, %v612
        %v616 = vrot.slane %v585, 3
        %vm617 = vcmask 1045509
        %v618 = vsel %vm617, %v616, %v615
        %v619 = vrot.slane %v586, 2
        %vm620 = vcmask 1046534
        %v621 = vsel %vm620, %v619, %v618
        %v622 = vrot.slane %v587, 1
        %vm623 = vcmask 1047559
        %v624 = vsel %vm623, %v622, %v621
        %626 = vmatpush.msra.mxu0 %v534
        %627 = vmatpush.msra.mxu0 %v533
        %628 = vmatpush.msra.mxu0 %v532
        %629 = vmatpush.msra.mxu0 %v531
        %630 = vmatpush.msra.mxu0 %v530
        %631 = vmatpush.msra.mxu0 %v529
        %632 = vmatpush.msra.mxu0 %v528
        %633 = vmatpush.msra.mxu0 %v527
        %634 = vmatpush.msra.mxu0 %v526
        %635 = vmatpush.msra.mxu0 %v525
        %636 = vmatpush.msra.mxu0 %v524
        %637 = vmatpush.msra.mxu0 %v523
        %638 = vmatpush.msra.mxu0 %v522
        %639 = vmatpush.msra.mxu0 %v521
        %640 = vmatpush.msra.mxu0 %v520
        %641 = vmatpush.msra.mxu0 %v519
        %642 = vmatmul.f32.gmra.mxu0 %v624
        %v643 = vpop.f32.mrf.mxu0
        %v644 = vadd.f32 0.0, %v643
        %645 = vdwg.mxu0
        %v647 = vrot.slane %v644, 7
        %v648 = vrot.slane %v644, 1
        %v649 = vrot.slane %v644, 2
        %v650 = vrot.slane %v644, 3
        %v651 = vrot.slane %v644, 4
        %v652 = vrot.slane %v644, 5
        %v653 = vrot.slane %v644, 6
        %v662 = vadd.f32 %v472, %v647
        %v663 = vadd.f32 %v478, %v644
        %v664 = vadd.f32 %v484, %v648
        %v665 = vadd.f32 %v490, %v649
        %v666 = vadd.f32 %v496, %v650
        %v667 = vadd.f32 %v502, %v651
        %v668 = vadd.f32 %v508, %v652
        %v669 = vadd.f32 %v514, %v653
        %v670 = vtanh.pop %v662
        %v671 = vtanh.pop %v663
        %v672 = vtanh.pop %v664
        %v673 = vtanh.pop %v665
        %v674 = vtanh.pop %v666
        %v675 = vtanh.pop %v667
        %v676 = vtanh.pop %v668
        %v677 = vtanh.pop %v669
        %678 = vst [vmem:[#allocation3] sm:$0x2] %v670
        %679 = vst [vmem:[#allocation3 + $0x10] sm:$0x2] %v671
        %680 = vst [vmem:[#allocation3 + $0x20] sm:$0x2] %v672
        %681 = vst [vmem:[#allocation3 + $0x30] sm:$0x2] %v673
        %682 = vst [vmem:[#allocation3 + $0x40] sm:$0x2] %v674
        %683 = vst [vmem:[#allocation3 + $0x50] sm:$0x2] %v675
        %684 = vst [vmem:[#allocation3 + $0x60] sm:$0x2] %v676
        %685 = vst [vmem:[#allocation3 + $0x70] sm:$0x2] %v677
        %v694 = vrot.slane %v670, 1
        %v695 = vsel %vm605, %v671, %v694
        %v696 = vrot.slane %v672, 7
        %v697 = vsel %vm608, %v696, %v695
        %v698 = vrot.slane %v673, 6
        %v699 = vsel %vm611, %v698, %v697
        %v700 = vrot.slane %v674, 5
        %v701 = vsel %vm614, %v700, %v699
        %v702 = vrot.slane %v675, 4
        %v703 = vsel %vm617, %v702, %v701
        %v704 = vrot.slane %v676, 3
        %v705 = vsel %vm620, %v704, %v703
        %v706 = vrot.slane %v677, 2
        %v707 = vsel %vm623, %v706, %v705
        %709 = vmatpush.msra.mxu0 %v534
        %710 = vmatpush.msra.mxu0 %v533
        %711 = vmatpush.msra.mxu0 %v532
        %712 = vmatpush.msra.mxu0 %v531
        %713 = vmatpush.msra.mxu0 %v530
        %714 = vmatpush.msra.mxu0 %v529
        %715 = vmatpush.msra.mxu0 %v528
        %716 = vmatpush.msra.mxu0 %v527
        %717 = vmatpush.msra.mxu0 %v526
        %718 = vmatpush.msra.mxu0 %v525
        %719 = vmatpush.msra.mxu0 %v524
        %720 = vmatpush.msra.mxu0 %v523
        %721 = vmatpush.msra.mxu0 %v522
        %722 = vmatpush.msra.mxu0 %v521
        %723 = vmatpush.msra.mxu0 %v520
        %724 = vmatpush.msra.mxu0 %v519
        %725 = vmatmul.f32.gmra.mxu0 %v707
        %v726 = vpop.f32.mrf.mxu0
        %v727 = vadd.f32 0.0, %v726
        %728 = vdwg.mxu0
        %v730 = vrot.slane %v727, 6
        %v731 = vrot.slane %v727, 7
        %v732 = vrot.slane %v727, 1
        %v733 = vrot.slane %v727, 2
        %v734 = vrot.slane %v727, 3
        %v735 = vrot.slane %v727, 4
        %v736 = vrot.slane %v727, 5
        %v745 = vadd.f32 %v472, %v730
        %v746 = vadd.f32 %v478, %v731
        %v747 = vadd.f32 %v484, %v727
        %v748 = vadd.f32 %v490, %v732
        %v749 = vadd.f32 %v496, %v733
        %v750 = vadd.f32 %v502, %v734
        %v751 = vadd.f32 %v508, %v735
        %v752 = vadd.f32 %v514, %v736
        %v753 = vtanh.pop %v745
        %v754 = vtanh.pop %v746
        %v755 = vtanh.pop %v747
        %v756 = vtanh.pop %v748
        %v757 = vtanh.pop %v749
        %v758 = vtanh.pop %v750
        %v759 = vtanh.pop %v751
        %v760 = vtanh.pop %v752
        %761 = vst [vmem:[#allocation3] sm:$0x4] %v753
        %762 = vst [vmem:[#allocation3 + $0x10] sm:$0x4] %v754
        %763 = vst [vmem:[#allocation3 + $0x20] sm:$0x4] %v755
        %764 = vst [vmem:[#allocation3 + $0x30] sm:$0x4] %v756
        %765 = vst [vmem:[#allocation3 + $0x40] sm:$0x4] %v757
        %766 = vst [vmem:[#allocation3 + $0x50] sm:$0x4] %v758
        %767 = vst [vmem:[#allocation3 + $0x60] sm:$0x4] %v759
        %768 = vst [vmem:[#allocation3 + $0x70] sm:$0x4] %v760
        %v777 = vrot.slane %v753, 2
        %v778 = vrot.slane %v754, 1
        %v779 = vsel %vm605, %v778, %v777
        %v780 = vsel %vm608, %v755, %v779
        %v781 = vrot.slane %v756, 7
        %v782 = vsel %vm611, %v781, %v780
        %v783 = vrot.slane %v757, 6
        %v784 = vsel %vm614, %v783, %v782
        %v785 = vrot.slane %v758, 5
        %v786 = vsel %vm617, %v785, %v784
        %v787 = vrot.slane %v759, 4
        %v788 = vsel %vm620, %v787, %v786
        %v789 = vrot.slane %v760, 3
        %v790 = vsel %vm623, %v789, %v788
        %792 = vmatpush.msra.mxu0 %v534
        %793 = vmatpush.msra.mxu0 %v533
        %794 = vmatpush.msra.mxu0 %v532
        %795 = vmatpush.msra.mxu0 %v531
        %796 = vmatpush.msra.mxu0 %v530
        %797 = vmatpush.msra.mxu0 %v529
        %798 = vmatpush.msra.mxu0 %v528
        %799 = vmatpush.msra.mxu0 %v527
        %800 = vmatpush.msra.mxu0 %v526
        %801 = vmatpush.msra.mxu0 %v525
        %802 = vmatpush.msra.mxu0 %v524
        %803 = vmatpush.msra.mxu0 %v523
        %804 = vmatpush.msra.mxu0 %v522
        %805 = vmatpush.msra.mxu0 %v521
        %806 = vmatpush.msra.mxu0 %v520
        %807 = vmatpush.msra.mxu0 %v519
        %808 = vmatmul.f32.gmra.mxu0 %v790
        %v809 = vpop.f32.mrf.mxu0
        %v810 = vadd.f32 0.0, %v809
        %811 = vdwg.mxu0
        %v813 = vrot.slane %v810, 5
        %v814 = vrot.slane %v810, 6
        %v815 = vrot.slane %v810, 7
        %v816 = vrot.slane %v810, 1
        %v817 = vrot.slane %v810, 2
        %v818 = vrot.slane %v810, 3
        %v819 = vrot.slane %v810, 4
        %v828 = vadd.f32 %v472, %v813
        %v829 = vadd.f32 %v478, %v814
        %v830 = vadd.f32 %v484, %v815
        %v831 = vadd.f32 %v490, %v810
        %v832 = vadd.f32 %v496, %v816
        %v833 = vadd.f32 %v502, %v817
        %v834 = vadd.f32 %v508, %v818
        %v835 = vadd.f32 %v514, %v819
        %v836 = vtanh.pop %v828
        %v837 = vtanh.pop %v829
        %v838 = vtanh.pop %v830
        %v839 = vtanh.pop %v831
        %v840 = vtanh.pop %v832
        %v841 = vtanh.pop %v833
        %v842 = vtanh.pop %v834
        %v843 = vtanh.pop %v835
        %844 = vst [vmem:[#allocation3] sm:$0x8] %v836
        %845 = vst [vmem:[#allocation3 + $0x10] sm:$0x8] %v837
        %846 = vst [vmem:[#allocation3 + $0x20] sm:$0x8] %v838
        %847 = vst [vmem:[#allocation3 + $0x30] sm:$0x8] %v839
        %848 = vst [vmem:[#allocation3 + $0x40] sm:$0x8] %v840
        %849 = vst [vmem:[#allocation3 + $0x50] sm:$0x8] %v841
        %850 = vst [vmem:[#allocation3 + $0x60] sm:$0x8] %v842
        %851 = vst [vmem:[#allocation3 + $0x70] sm:$0x8] %v843
        %v860 = vrot.slane %v836, 3
        %v861 = vrot.slane %v837, 2
        %v862 = vsel %vm605, %v861, %v860
        %v863 = vrot.slane %v838, 1
        %v864 = vsel %vm608, %v863, %v862
        %v865 = vsel %vm611, %v839, %v864
        %v866 = vrot.slane %v840, 7
        %v867 = vsel %vm614, %v866, %v865
        %v868 = vrot.slane %v841, 6
        %v869 = vsel %vm617, %v868, %v867
        %v870 = vrot.slane %v842, 5
        %v871 = vsel %vm620, %v870, %v869
        %v872 = vrot.slane %v843, 4
        %v873 = vsel %vm623, %v872, %v871
        %875 = vmatpush.msra.mxu0 %v534
        %876 = vmatpush.msra.mxu0 %v533
        %877 = vmatpush.msra.mxu0 %v532
        %878 = vmatpush.msra.mxu0 %v531
        %879 = vmatpush.msra.mxu0 %v530
        %880 = vmatpush.msra.mxu0 %v529
        %881 = vmatpush.msra.mxu0 %v528
        %882 = vmatpush.msra.mxu0 %v527
        %883 = vmatpush.msra.mxu0 %v526
        %884 = vmatpush.msra.mxu0 %v525
        %885 = vmatpush.msra.mxu0 %v524
        %886 = vmatpush.msra.mxu0 %v523
        %887 = vmatpush.msra.mxu0 %v522
        %888 = vmatpush.msra.mxu0 %v521
        %889 = vmatpush.msra.mxu0 %v520
        %890 = vmatpush.msra.mxu0 %v519
        %891 = vmatmul.f32.gmra.mxu0 %v873
        %v892 = vpop.f32.mrf.mxu0
        %v893 = vadd.f32 0.0, %v892
        %894 = vdwg.mxu0
        %v896 = vrot.slane %v893, 4
        %v897 = vrot.slane %v893, 5
        %v898 = vrot.slane %v893, 6
        %v899 = vrot.slane %v893, 7
        %v900 = vrot.slane %v893, 1
        %v901 = vrot.slane %v893, 2
        %v902 = vrot.slane %v893, 3
        %v911 = vadd.f32 %v472, %v896
        %v912 = vadd.f32 %v478, %v897
        %v913 = vadd.f32 %v484, %v898
        %v914 = vadd.f32 %v490, %v899
        %v915 = vadd.f32 %v496, %v893
        %v916 = vadd.f32 %v502, %v900
        %v917 = vadd.f32 %v508, %v901
        %v918 = vadd.f32 %v514, %v902
        %v919 = vtanh.pop %v911
        %v920 = vtanh.pop %v912
        %v921 = vtanh.pop %v913
        %v922 = vtanh.pop %v914
        %v923 = vtanh.pop %v915
        %v924 = vtanh.pop %v916
        %v925 = vtanh.pop %v917
        %v926 = vtanh.pop %v918
        %927 = vst [vmem:[#allocation3] sm:$0x10] %v919
        %928 = vst [vmem:[#allocation3 + $0x10] sm:$0x10] %v920
        %929 = vst [vmem:[#allocation3 + $0x20] sm:$0x10] %v921
        %930 = vst [vmem:[#allocation3 + $0x30] sm:$0x10] %v922
        %931 = vst [vmem:[#allocation3 + $0x40] sm:$0x10] %v923
        %932 = vst [vmem:[#allocation3 + $0x50] sm:$0x10] %v924
        %933 = vst [vmem:[#allocation3 + $0x60] sm:$0x10] %v925
        %934 = vst [vmem:[#allocation3 + $0x70] sm:$0x10] %v926
        %v943 = vrot.slane %v919, 4
        %v944 = vrot.slane %v920, 3
        %v945 = vsel %vm605, %v944, %v943
        %v946 = vrot.slane %v921, 2
        %v947 = vsel %vm608, %v946, %v945
        %v948 = vrot.slane %v922, 1
        %v949 = vsel %vm611, %v948, %v947
        %v950 = vsel %vm614, %v923, %v949
        %v951 = vrot.slane %v924, 7
        %v952 = vsel %vm617, %v951, %v950
        %v953 = vrot.slane %v925, 6
        %v954 = vsel %vm620, %v953, %v952
        %v955 = vrot.slane %v926, 5
        %v956 = vsel %vm623, %v955, %v954
        %958 = vmatpush.msra.mxu0 %v534
        %959 = vmatpush.msra.mxu0 %v533
        %960 = vmatpush.msra.mxu0 %v532
        %961 = vmatpush.msra.mxu0 %v531
        %962 = vmatpush.msra.mxu0 %v530
        %963 = vmatpush.msra.mxu0 %v529
        %964 = vmatpush.msra.mxu0 %v528
        %965 = vmatpush.msra.mxu0 %v527
        %966 = vmatpush.msra.mxu0 %v526
        %967 = vmatpush.msra.mxu0 %v525
        %968 = vmatpush.msra.mxu0 %v524
        %969 = vmatpush.msra.mxu0 %v523
        %970 = vmatpush.msra.mxu0 %v522
        %971 = vmatpush.msra.mxu0 %v521
        %972 = vmatpush.msra.mxu0 %v520
        %973 = vmatpush.msra.mxu0 %v519
        %974 = vmatmul.f32.gmra.mxu0 %v956
        %v975 = vpop.f32.mrf.mxu0
        %v976 = vadd.f32 0.0, %v975
        %977 = vdwg.mxu0
        %v979 = vrot.slane %v976, 3
        %v980 = vrot.slane %v976, 4
        %v981 = vrot.slane %v976, 5
        %v982 = vrot.slane %v976, 6
        %v983 = vrot.slane %v976, 7
        %v984 = vrot.slane %v976, 1
        %v985 = vrot.slane %v976, 2
        %v994 = vadd.f32 %v472, %v979
        %v995 = vadd.f32 %v478, %v980
        %v996 = vadd.f32 %v484, %v981
        %v997 = vadd.f32 %v490, %v982
        %v998 = vadd.f32 %v496, %v983
        %v999 = vadd.f32 %v502, %v976
        %v1000 = vadd.f32 %v508, %v984
        %v1001 = vadd.f32 %v514, %v985
        %v1002 = vtanh.pop %v994
        %v1003 = vtanh.pop %v995
        %v1004 = vtanh.pop %v996
        %v1005 = vtanh.pop %v997
        %v1006 = vtanh.pop %v998
        %v1007 = vtanh.pop %v999
        %v1008 = vtanh.pop %v1000
        %v1009 = vtanh.pop %v1001
        %1010 = vst [vmem:[#allocation3] sm:$0x20] %v1002
        %1011 = vst [vmem:[#allocation3 + $0x10] sm:$0x20] %v1003
        %1012 = vst [vmem:[#allocation3 + $0x20] sm:$0x20] %v1004
        %1013 = vst [vmem:[#allocation3 + $0x30] sm:$0x20] %v1005
        %1014 = vst [vmem:[#allocation3 + $0x40] sm:$0x20] %v1006
        %1015 = vst [vmem:[#allocation3 + $0x50] sm:$0x20] %v1007
        %1016 = vst [vmem:[#allocation3 + $0x60] sm:$0x20] %v1008
        %1017 = vst [vmem:[#allocation3 + $0x70] sm:$0x20] %v1009
        %v1026 = vrot.slane %v1002, 5
        %v1027 = vrot.slane %v1003, 4
        %v1028 = vsel %vm605, %v1027, %v1026
        %v1029 = vrot.slane %v1004, 3
        %v1030 = vsel %vm608, %v1029, %v1028
        %v1031 = vrot.slane %v1005, 2
        %v1032 = vsel %vm611, %v1031, %v1030
        %v1033 = vrot.slane %v1006, 1
        %v1034 = vsel %vm614, %v1033, %v1032
        %v1035 = vsel %vm617, %v1007, %v1034
        %v1036 = vrot.slane %v1008, 7
        %v1037 = vsel %vm620, %v1036, %v1035
        %v1038 = vrot.slane %v1009, 6
        %v1039 = vsel %vm623, %v1038, %v1037
        %1041 = vmatpush.msra.mxu0 %v534
        %1042 = vmatpush.msra.mxu0 %v533
        %1043 = vmatpush.msra.mxu0 %v532
        %1044 = vmatpush.msra.mxu0 %v531
        %1045 = vmatpush.msra.mxu0 %v530
        %1046 = vmatpush.msra.mxu0 %v529
        %1047 = vmatpush.msra.mxu0 %v528
        %1048 = vmatpush.msra.mxu0 %v527
        %1049 = vmatpush.msra.mxu0 %v526
        %1050 = vmatpush.msra.mxu0 %v525
        %1051 = vmatpush.msra.mxu0 %v524
        %1052 = vmatpush.msra.mxu0 %v523
        %1053 = vmatpush.msra.mxu0 %v522
        %1054 = vmatpush.msra.mxu0 %v521
        %1055 = vmatpush.msra.mxu0 %v520
        %1056 = vmatpush.msra.mxu0 %v519
        %1057 = vmatmul.f32.gmra.mxu0 %v1039
        %v1058 = vpop.f32.mrf.mxu0
        %v1059 = vadd.f32 0.0, %v1058
        %1060 = vdwg.mxu0
        %v1062 = vrot.slane %v1059, 2
        %v1063 = vrot.slane %v1059, 3
        %v1064 = vrot.slane %v1059, 4
        %v1065 = vrot.slane %v1059, 5
        %v1066 = vrot.slane %v1059, 6
        %v1067 = vrot.slane %v1059, 7
        %v1068 = vrot.slane %v1059, 1
        %v1077 = vadd.f32 %v472, %v1062
        %v1078 = vadd.f32 %v478, %v1063
        %v1079 = vadd.f32 %v484, %v1064
        %v1080 = vadd.f32 %v490, %v1065
        %v1081 = vadd.f32 %v496, %v1066
        %v1082 = vadd.f32 %v502, %v1067
        %v1083 = vadd.f32 %v508, %v1059
        %v1084 = vadd.f32 %v514, %v1068
        %v1085 = vtanh.pop %v1077
        %v1086 = vtanh.pop %v1078
        %v1087 = vtanh.pop %v1079
        %v1088 = vtanh.pop %v1080
        %v1089 = vtanh.pop %v1081
        %v1090 = vtanh.pop %v1082
        %v1091 = vtanh.pop %v1083
        %v1092 = vtanh.pop %v1084
        %1093 = vst [vmem:[#allocation3] sm:$0x40] %v1085
        %1094 = vst [vmem:[#allocation3 + $0x10] sm:$0x40] %v1086
        %1095 = vst [vmem:[#allocation3 + $0x20] sm:$0x40] %v1087
        %1096 = vst [vmem:[#allocation3 + $0x30] sm:$0x40] %v1088
        %1097 = vst [vmem:[#allocation3 + $0x40] sm:$0x40] %v1089
        %1098 = vst [vmem:[#allocation3 + $0x50] sm:$0x40] %v1090
        %1099 = vst [vmem:[#allocation3 + $0x60] sm:$0x40] %v1091
        %1100 = vst [vmem:[#allocation3 + $0x70] sm:$0x40] %v1092
        %v1109 = vrot.slane %v1085, 6
        %v1110 = vrot.slane %v1086, 5
        %v1111 = vsel %vm605, %v1110, %v1109
        %v1112 = vrot.slane %v1087, 4
        %v1113 = vsel %vm608, %v1112, %v1111
        %v1114 = vrot.slane %v1088, 3
        %v1115 = vsel %vm611, %v1114, %v1113
        %v1116 = vrot.slane %v1089, 2
        %v1117 = vsel %vm614, %v1116, %v1115
        %v1118 = vrot.slane %v1090, 1
        %v1119 = vsel %vm617, %v1118, %v1117
        %v1120 = vsel %vm620, %v1091, %v1119
        %v1121 = vrot.slane %v1092, 7
        %v1122 = vsel %vm623, %v1121, %v1120
        %1124 = vmatpush.msra.mxu0 %v534
        %1125 = vmatpush.msra.mxu0 %v533
        %1126 = vmatpush.msra.mxu0 %v532
        %1127 = vmatpush.msra.mxu0 %v531
        %1128 = vmatpush.msra.mxu0 %v530
        %1129 = vmatpush.msra.mxu0 %v529
        %1130 = vmatpush.msra.mxu0 %v528
        %1131 = vmatpush.msra.mxu0 %v527
        %1132 = vmatpush.msra.mxu0 %v526
        %1133 = vmatpush.msra.mxu0 %v525
        %1134 = vmatpush.msra.mxu0 %v524
        %1135 = vmatpush.msra.mxu0 %v523
        %1136 = vmatpush.msra.mxu0 %v522
        %1137 = vmatpush.msra.mxu0 %v521
        %1138 = vmatpush.msra.mxu0 %v520
        %1139 = vmatpush.msra.mxu0 %v519
        %1140 = vmatmul.f32.gmra.mxu0 %v1122
        %v1141 = vpop.f32.mrf.mxu0
        %v1142 = vadd.f32 0.0, %v1141
        %1143 = vdwg.mxu0
        %v1145 = vrot.slane %v1142, 1
        %v1146 = vrot.slane %v1142, 2
        %v1147 = vrot.slane %v1142, 3
        %v1148 = vrot.slane %v1142, 4
        %v1149 = vrot.slane %v1142, 5
        %v1150 = vrot.slane %v1142, 6
        %v1151 = vrot.slane %v1142, 7
        %v1160 = vadd.f32 %v472, %v1145
        %v1161 = vadd.f32 %v478, %v1146
        %v1162 = vadd.f32 %v484, %v1147
        %v1163 = vadd.f32 %v490, %v1148
        %v1164 = vadd.f32 %v496, %v1149
        %v1165 = vadd.f32 %v502, %v1150
        %v1166 = vadd.f32 %v508, %v1151
        %v1167 = vadd.f32 %v514, %v1142
        %v1168 = vtanh.pop %v1160
        %v1169 = vtanh.pop %v1161
        %v1170 = vtanh.pop %v1162
        %v1171 = vtanh.pop %v1163
        %v1172 = vtanh.pop %v1164
        %v1173 = vtanh.pop %v1165
        %v1174 = vtanh.pop %v1166
        %v1175 = vtanh.pop %v1167
        %1176 = vst [vmem:[#allocation3] sm:$0x80] %v1168
        %1177 = vst [vmem:[#allocation3 + $0x10] sm:$0x80] %v1169
        %1178 = vst [vmem:[#allocation3 + $0x20] sm:$0x80] %v1170
        %1179 = vst [vmem:[#allocation3 + $0x30] sm:$0x80] %v1171
        %1180 = vst [vmem:[#allocation3 + $0x40] sm:$0x80] %v1172
        %1181 = vst [vmem:[#allocation3 + $0x50] sm:$0x80] %v1173
        %1182 = vst [vmem:[#allocation3 + $0x60] sm:$0x80] %v1174
        %1183 = vst [vmem:[#allocation3 + $0x70] sm:$0x80] %v1175
        %v1192 = vrot.slane %v1168, 7
        %v1193 = vrot.slane %v1169, 6
        %v1194 = vsel %vm605, %v1193, %v1192
        %v1195 = vrot.slane %v1170, 5
        %v1196 = vsel %vm608, %v1195, %v1194
        %v1197 = vrot.slane %v1171, 4
        %v1198 = vsel %vm611, %v1197, %v1196
        %v1199 = vrot.slane %v1172, 3
        %v1200 = vsel %vm614, %v1199, %v1198
        %v1201 = vrot.slane %v1173, 2
        %v1202 = vsel %vm617, %v1201, %v1200
        %v1203 = vrot.slane %v1174, 1
        %v1204 = vsel %vm620, %v1203, %v1202
        %v1205 = vsel %vm623, %v1175, %v1204
        %1207 = vmatpush.msra.mxu0 %v534
        %1208 = vmatpush.msra.mxu0 %v533
        %1209 = vmatpush.msra.mxu0 %v532
        %1210 = vmatpush.msra.mxu0 %v531
        %1211 = vmatpush.msra.mxu0 %v530
        %1212 = vmatpush.msra.mxu0 %v529
        %1213 = vmatpush.msra.mxu0 %v528
        %1214 = vmatpush.msra.mxu0 %v527
        %1215 = vmatpush.msra.mxu0 %v526
        %1216 = vmatpush.msra.mxu0 %v525
        %1217 = vmatpush.msra.mxu0 %v524
        %1218 = vmatpush.msra.mxu0 %v523
        %1219 = vmatpush.msra.mxu0 %v522
        %1220 = vmatpush.msra.mxu0 %v521
        %1221 = vmatpush.msra.mxu0 %v520
        %1222 = vmatpush.msra.mxu0 %v519
        %1223 = vmatmul.f32.gmra.mxu0 %v1205
        %v1224 = vpop.f32.mrf.mxu0
        %v1225 = vadd.f32 0.0, %v1224
        %1226 = vdwg.mxu0
        %v1228 = vrot.slane %v1225, 1
        %v1229 = vrot.slane %v1225, 2
        %v1230 = vrot.slane %v1225, 3
        %v1231 = vrot.slane %v1225, 4
        %v1232 = vrot.slane %v1225, 5
        %v1233 = vrot.slane %v1225, 6
        %v1234 = vrot.slane %v1225, 7
        %v1243 = vadd.f32 %v475, %v1225
        %v1244 = vadd.f32 %v481, %v1228
        %v1245 = vadd.f32 %v487, %v1229
        %v1246 = vadd.f32 %v493, %v1230
        %v1247 = vadd.f32 %v499, %v1231
        %v1248 = vadd.f32 %v505, %v1232
        %v1249 = vadd.f32 %v511, %v1233
        %v1250 = vadd.f32 %v517, %v1234
        %v1251 = vtanh.pop %v1243
        %v1252 = vtanh.pop %v1244
        %v1253 = vtanh.pop %v1245
        %v1254 = vtanh.pop %v1246
        %v1255 = vtanh.pop %v1247
        %v1256 = vtanh.pop %v1248
        %v1257 = vtanh.pop %v1249
        %v1258 = vtanh.pop %v1250
        %1259 = vst [vmem:[#allocation3 + $0x8] sm:$0x1] %v1251
        %1260 = vst [vmem:[#allocation3 + $0x18] sm:$0x1] %v1252
        %1261 = vst [vmem:[#allocation3 + $0x28] sm:$0x1] %v1253
        %1262 = vst [vmem:[#allocation3 + $0x38] sm:$0x1] %v1254
        %1263 = vst [vmem:[#allocation3 + $0x48] sm:$0x1] %v1255
        %1264 = vst [vmem:[#allocation3 + $0x58] sm:$0x1] %v1256
        %1265 = vst [vmem:[#allocation3 + $0x68] sm:$0x1] %v1257
        %1266 = vst [vmem:[#allocation3 + $0x78] sm:$0x1] %v1258
        %v1275 = vrot.slane %v1252, 7
        %v1276 = vsel %vm605, %v1275, %v1251
        %v1277 = vrot.slane %v1253, 6
        %v1278 = vsel %vm608, %v1277, %v1276
        %v1279 = vrot.slane %v1254, 5
        %v1280 = vsel %vm611, %v1279, %v1278
        %v1281 = vrot.slane %v1255, 4
        %v1282 = vsel %vm614, %v1281, %v1280
        %v1283 = vrot.slane %v1256, 3
        %v1284 = vsel %vm617, %v1283, %v1282
        %v1285 = vrot.slane %v1257, 2
        %v1286 = vsel %vm620, %v1285, %v1284
        %v1287 = vrot.slane %v1258, 1
        %v1288 = vsel %vm623, %v1287, %v1286
        %1290 = vmatpush.msra.mxu0 %v534
        %1291 = vmatpush.msra.mxu0 %v533
        %1292 = vmatpush.msra.mxu0 %v532
        %1293 = vmatpush.msra.mxu0 %v531
        %1294 = vmatpush.msra.mxu0 %v530
        %1295 = vmatpush.msra.mxu0 %v529
        %1296 = vmatpush.msra.mxu0 %v528
        %1297 = vmatpush.msra.mxu0 %v527
        %1298 = vmatpush.msra.mxu0 %v526
        %1299 = vmatpush.msra.mxu0 %v525
        %1300 = vmatpush.msra.mxu0 %v524
        %1301 = vmatpush.msra.mxu0 %v523
        %1302 = vmatpush.msra.mxu0 %v522
        %1303 = vmatpush.msra.mxu0 %v521
        %1304 = vmatpush.msra.mxu0 %v520
        %1305 = vmatpush.msra.mxu0 %v519
        %1306 = vmatmul.f32.gmra.mxu0 %v1288
        %v1307 = vpop.f32.mrf.mxu0
        %v1308 = vadd.f32 0.0, %v1307
        %1309 = vdwg.mxu0
        %v1311 = vrot.slane %v1308, 7
        %v1312 = vrot.slane %v1308, 1
        %v1313 = vrot.slane %v1308, 2
        %v1314 = vrot.slane %v1308, 3
        %v1315 = vrot.slane %v1308, 4
        %v1316 = vrot.slane %v1308, 5
        %v1317 = vrot.slane %v1308, 6
        %v1326 = vadd.f32 %v475, %v1311
        %v1327 = vadd.f32 %v481, %v1308
        %v1328 = vadd.f32 %v487, %v1312
        %v1329 = vadd.f32 %v493, %v1313
        %v1330 = vadd.f32 %v499, %v1314
        %v1331 = vadd.f32 %v505, %v1315
        %v1332 = vadd.f32 %v511, %v1316
        %v1333 = vadd.f32 %v517, %v1317
        %v1334 = vtanh.pop %v1326
        %v1335 = vtanh.pop %v1327
        %v1336 = vtanh.pop %v1328
        %v1337 = vtanh.pop %v1329
        %v1338 = vtanh.pop %v1330
        %v1339 = vtanh.pop %v1331
        %v1340 = vtanh.pop %v1332
        %v1341 = vtanh.pop %v1333
        %1342 = vst [vmem:[#allocation3 + $0x8] sm:$0x2] %v1334
        %1343 = vst [vmem:[#allocation3 + $0x18] sm:$0x2] %v1335
        %1344 = vst [vmem:[#allocation3 + $0x28] sm:$0x2] %v1336
        %1345 = vst [vmem:[#allocation3 + $0x38] sm:$0x2] %v1337
        %1346 = vst [vmem:[#allocation3 + $0x48] sm:$0x2] %v1338
        %1347 = vst [vmem:[#allocation3 + $0x58] sm:$0x2] %v1339
        %1348 = vst [vmem:[#allocation3 + $0x68] sm:$0x2] %v1340
        %1349 = vst [vmem:[#allocation3 + $0x78] sm:$0x2] %v1341
        %v1358 = vrot.slane %v1334, 1
        %v1359 = vsel %vm605, %v1335, %v1358
        %v1360 = vrot.slane %v1336, 7
        %v1361 = vsel %vm608, %v1360, %v1359
        %v1362 = vrot.slane %v1337, 6
        %v1363 = vsel %vm611, %v1362, %v1361
        %v1364 = vrot.slane %v1338, 5
        %v1365 = vsel %vm614, %v1364, %v1363
        %v1366 = vrot.slane %v1339, 4
        %v1367 = vsel %vm617, %v1366, %v1365
        %v1368 = vrot.slane %v1340, 3
        %v1369 = vsel %vm620, %v1368, %v1367
        %v1370 = vrot.slane %v1341, 2
        %v1371 = vsel %vm623, %v1370, %v1369
        %1373 = vmatpush.msra.mxu0 %v534
        %1374 = vmatpush.msra.mxu0 %v533
        %1375 = vmatpush.msra.mxu0 %v532
        %1376 = vmatpush.msra.mxu0 %v531
        %1377 = vmatpush.msra.mxu0 %v530
        %1378 = vmatpush.msra.mxu0 %v529
        %1379 = vmatpush.msra.mxu0 %v528
        %1380 = vmatpush.msra.mxu0 %v527
        %1381 = vmatpush.msra.mxu0 %v526
        %1382 = vmatpush.msra.mxu0 %v525
        %1383 = vmatpush.msra.mxu0 %v524
        %1384 = vmatpush.msra.mxu0 %v523
        %1385 = vmatpush.msra.mxu0 %v522
        %1386 = vmatpush.msra.mxu0 %v521
        %1387 = vmatpush.msra.mxu0 %v520
        %1388 = vmatpush.msra.mxu0 %v519
        %1389 = vmatmul.f32.gmra.mxu0 %v1371
        %v1390 = vpop.f32.mrf.mxu0
        %v1391 = vadd.f32 0.0, %v1390
        %1392 = vdwg.mxu0
        %v1394 = vrot.slane %v1391, 6
        %v1395 = vrot.slane %v1391, 7
        %v1396 = vrot.slane %v1391, 1
        %v1397 = vrot.slane %v1391, 2
        %v1398 = vrot.slane %v1391, 3
        %v1399 = vrot.slane %v1391, 4
        %v1400 = vrot.slane %v1391, 5
        %v1409 = vadd.f32 %v475, %v1394
        %v1410 = vadd.f32 %v481, %v1395
        %v1411 = vadd.f32 %v487, %v1391
        %v1412 = vadd.f32 %v493, %v1396
        %v1413 = vadd.f32 %v499, %v1397
        %v1414 = vadd.f32 %v505, %v1398
        %v1415 = vadd.f32 %v511, %v1399
        %v1416 = vadd.f32 %v517, %v1400
        %v1417 = vtanh.pop %v1409
        %v1418 = vtanh.pop %v1410
        %v1419 = vtanh.pop %v1411
        %v1420 = vtanh.pop %v1412
        %v1421 = vtanh.pop %v1413
        %v1422 = vtanh.pop %v1414
        %v1423 = vtanh.pop %v1415
        %v1424 = vtanh.pop %v1416
        %1425 = vst [vmem:[#allocation3 + $0x8] sm:$0x4] %v1417
        %1426 = vst [vmem:[#allocation3 + $0x18] sm:$0x4] %v1418
        %1427 = vst [vmem:[#allocation3 + $0x28] sm:$0x4] %v1419
        %1428 = vst [vmem:[#allocation3 + $0x38] sm:$0x4] %v1420
        %1429 = vst [vmem:[#allocation3 + $0x48] sm:$0x4] %v1421
        %1430 = vst [vmem:[#allocation3 + $0x58] sm:$0x4] %v1422
        %1431 = vst [vmem:[#allocation3 + $0x68] sm:$0x4] %v1423
        %1432 = vst [vmem:[#allocation3 + $0x78] sm:$0x4] %v1424
        %v1441 = vrot.slane %v1417, 2
        %v1442 = vrot.slane %v1418, 1
        %v1443 = vsel %vm605, %v1442, %v1441
        %v1444 = vsel %vm608, %v1419, %v1443
        %v1445 = vrot.slane %v1420, 7
        %v1446 = vsel %vm611, %v1445, %v1444
        %v1447 = vrot.slane %v1421, 6
        %v1448 = vsel %vm614, %v1447, %v1446
        %v1449 = vrot.slane %v1422, 5
        %v1450 = vsel %vm617, %v1449, %v1448
        %v1451 = vrot.slane %v1423, 4
        %v1452 = vsel %vm620, %v1451, %v1450
        %v1453 = vrot.slane %v1424, 3
        %v1454 = vsel %vm623, %v1453, %v1452
        %1456 = vmatpush.msra.mxu0 %v534
        %1457 = vmatpush.msra.mxu0 %v533
        %1458 = vmatpush.msra.mxu0 %v532
        %1459 = vmatpush.msra.mxu0 %v531
        %1460 = vmatpush.msra.mxu0 %v530
        %1461 = vmatpush.msra.mxu0 %v529
        %1462 = vmatpush.msra.mxu0 %v528
        %1463 = vmatpush.msra.mxu0 %v527
        %1464 = vmatpush.msra.mxu0 %v526
        %1465 = vmatpush.msra.mxu0 %v525
        %1466 = vmatpush.msra.mxu0 %v524
        %1467 = vmatpush.msra.mxu0 %v523
        %1468 = vmatpush.msra.mxu0 %v522
        %1469 = vmatpush.msra.mxu0 %v521
        %1470 = vmatpush.msra.mxu0 %v520
        %1471 = vmatpush.msra.mxu0 %v519
        %1472 = vmatmul.f32.gmra.mxu0 %v1454
        %v1473 = vpop.f32.mrf.mxu0
        %v1474 = vadd.f32 0.0, %v1473
        %1475 = vdwg.mxu0
        %v1477 = vrot.slane %v1474, 5
        %v1478 = vrot.slane %v1474, 6
        %v1479 = vrot.slane %v1474, 7
        %v1480 = vrot.slane %v1474, 1
        %v1481 = vrot.slane %v1474, 2
        %v1482 = vrot.slane %v1474, 3
        %v1483 = vrot.slane %v1474, 4
        %v1492 = vadd.f32 %v475, %v1477
        %v1493 = vadd.f32 %v481, %v1478
        %v1494 = vadd.f32 %v487, %v1479
        %v1495 = vadd.f32 %v493, %v1474
        %v1496 = vadd.f32 %v499, %v1480
        %v1497 = vadd.f32 %v505, %v1481
        %v1498 = vadd.f32 %v511, %v1482
        %v1499 = vadd.f32 %v517, %v1483
        %v1500 = vtanh.pop %v1492
        %v1501 = vtanh.pop %v1493
        %v1502 = vtanh.pop %v1494
        %v1503 = vtanh.pop %v1495
        %v1504 = vtanh.pop %v1496
        %v1505 = vtanh.pop %v1497
        %v1506 = vtanh.pop %v1498
        %v1507 = vtanh.pop %v1499
        %1508 = vst [vmem:[#allocation3 + $0x8] sm:$0x8] %v1500
        %1509 = vst [vmem:[#allocation3 + $0x18] sm:$0x8] %v1501
        %1510 = vst [vmem:[#allocation3 + $0x28] sm:$0x8] %v1502
        %1511 = vst [vmem:[#allocation3 + $0x38] sm:$0x8] %v1503
        %1512 = vst [vmem:[#allocation3 + $0x48] sm:$0x8] %v1504
        %1513 = vst [vmem:[#allocation3 + $0x58] sm:$0x8] %v1505
        %1514 = vst [vmem:[#allocation3 + $0x68] sm:$0x8] %v1506
        %1515 = vst [vmem:[#allocation3 + $0x78] sm:$0x8] %v1507
        %v1524 = vrot.slane %v1500, 3
        %v1525 = vrot.slane %v1501, 2
        %v1526 = vsel %vm605, %v1525, %v1524
        %v1527 = vrot.slane %v1502, 1
        %v1528 = vsel %vm608, %v1527, %v1526
        %v1529 = vsel %vm611, %v1503, %v1528
        %v1530 = vrot.slane %v1504, 7
        %v1531 = vsel %vm614, %v1530, %v1529
        %v1532 = vrot.slane %v1505, 6
        %v1533 = vsel %vm617, %v1532, %v1531
        %v1534 = vrot.slane %v1506, 5
        %v1535 = vsel %vm620, %v1534, %v1533
        %v1536 = vrot.slane %v1507, 4
        %v1537 = vsel %vm623, %v1536, %v1535
        %1539 = vmatpush.msra.mxu0 %v534
        %1540 = vmatpush.msra.mxu0 %v533
        %1541 = vmatpush.msra.mxu0 %v532
        %1542 = vmatpush.msra.mxu0 %v531
        %1543 = vmatpush.msra.mxu0 %v530
        %1544 = vmatpush.msra.mxu0 %v529
        %1545 = vmatpush.msra.mxu0 %v528
        %1546 = vmatpush.msra.mxu0 %v527
        %1547 = vmatpush.msra.mxu0 %v526
        %1548 = vmatpush.msra.mxu0 %v525
        %1549 = vmatpush.msra.mxu0 %v524
        %1550 = vmatpush.msra.mxu0 %v523
        %1551 = vmatpush.msra.mxu0 %v522
        %1552 = vmatpush.msra.mxu0 %v521
        %1553 = vmatpush.msra.mxu0 %v520
        %1554 = vmatpush.msra.mxu0 %v519
        %1555 = vmatmul.f32.gmra.mxu0 %v1537
        %v1556 = vpop.f32.mrf.mxu0
        %v1557 = vadd.f32 0.0, %v1556
        %1558 = vdwg.mxu0
        %v1560 = vrot.slane %v1557, 4
        %v1561 = vrot.slane %v1557, 5
        %v1562 = vrot.slane %v1557, 6
        %v1563 = vrot.slane %v1557, 7
        %v1564 = vrot.slane %v1557, 1
        %v1565 = vrot.slane %v1557, 2
        %v1566 = vrot.slane %v1557, 3
        %v1575 = vadd.f32 %v475, %v1560
        %v1576 = vadd.f32 %v481, %v1561
        %v1577 = vadd.f32 %v487, %v1562
        %v1578 = vadd.f32 %v493, %v1563
        %v1579 = vadd.f32 %v499, %v1557
        %v1580 = vadd.f32 %v505, %v1564
        %v1581 = vadd.f32 %v511, %v1565
        %v1582 = vadd.f32 %v517, %v1566
        %v1583 = vtanh.pop %v1575
        %v1584 = vtanh.pop %v1576
        %v1585 = vtanh.pop %v1577
        %v1586 = vtanh.pop %v1578
        %v1587 = vtanh.pop %v1579
        %v1588 = vtanh.pop %v1580
        %v1589 = vtanh.pop %v1581
        %v1590 = vtanh.pop %v1582
        %1591 = vst [vmem:[#allocation3 + $0x8] sm:$0x10] %v1583
        %1592 = vst [vmem:[#allocation3 + $0x18] sm:$0x10] %v1584
        %1593 = vst [vmem:[#allocation3 + $0x28] sm:$0x10] %v1585
        %1594 = vst [vmem:[#allocation3 + $0x38] sm:$0x10] %v1586
        %1595 = vst [vmem:[#allocation3 + $0x48] sm:$0x10] %v1587
        %1596 = vst [vmem:[#allocation3 + $0x58] sm:$0x10] %v1588
        %1597 = vst [vmem:[#allocation3 + $0x68] sm:$0x10] %v1589
        %1598 = vst [vmem:[#allocation3 + $0x78] sm:$0x10] %v1590
        %v1607 = vrot.slane %v1583, 4
        %v1608 = vrot.slane %v1584, 3
        %v1609 = vsel %vm605, %v1608, %v1607
        %v1610 = vrot.slane %v1585, 2
        %v1611 = vsel %vm608, %v1610, %v1609
        %v1612 = vrot.slane %v1586, 1
        %v1613 = vsel %vm611, %v1612, %v1611
        %v1614 = vsel %vm614, %v1587, %v1613
        %v1615 = vrot.slane %v1588, 7
        %v1616 = vsel %vm617, %v1615, %v1614
        %v1617 = vrot.slane %v1589, 6
        %v1618 = vsel %vm620, %v1617, %v1616
        %v1619 = vrot.slane %v1590, 5
        %v1620 = vsel %vm623, %v1619, %v1618
        %1622 = vmatpush.msra.mxu0 %v534
        %1623 = vmatpush.msra.mxu0 %v533
        %1624 = vmatpush.msra.mxu0 %v532
        %1625 = vmatpush.msra.mxu0 %v531
        %1626 = vmatpush.msra.mxu0 %v530
        %1627 = vmatpush.msra.mxu0 %v529
        %1628 = vmatpush.msra.mxu0 %v528
        %1629 = vmatpush.msra.mxu0 %v527
        %1630 = vmatpush.msra.mxu0 %v526
        %1631 = vmatpush.msra.mxu0 %v525
        %1632 = vmatpush.msra.mxu0 %v524
        %1633 = vmatpush.msra.mxu0 %v523
        %1634 = vmatpush.msra.mxu0 %v522
        %1635 = vmatpush.msra.mxu0 %v521
        %1636 = vmatpush.msra.mxu0 %v520
        %1637 = vmatpush.msra.mxu0 %v519
        %1638 = vmatmul.f32.gmra.mxu0 %v1620
        %v1639 = vpop.f32.mrf.mxu0
        %v1640 = vadd.f32 0.0, %v1639
        %1641 = vdwg.mxu0
        %v1643 = vrot.slane %v1640, 3
        %v1644 = vrot.slane %v1640, 4
        %v1645 = vrot.slane %v1640, 5
        %v1646 = vrot.slane %v1640, 6
        %v1647 = vrot.slane %v1640, 7
        %v1648 = vrot.slane %v1640, 1
        %v1649 = vrot.slane %v1640, 2
        %v1658 = vadd.f32 %v475, %v1643
        %v1659 = vadd.f32 %v481, %v1644
        %v1660 = vadd.f32 %v487, %v1645
        %v1661 = vadd.f32 %v493, %v1646
        %v1662 = vadd.f32 %v499, %v1647
        %v1663 = vadd.f32 %v505, %v1640
        %v1664 = vadd.f32 %v511, %v1648
        %v1665 = vadd.f32 %v517, %v1649
        %v1666 = vtanh.pop %v1658
        %v1667 = vtanh.pop %v1659
        %v1668 = vtanh.pop %v1660
        %v1669 = vtanh.pop %v1661
        %v1670 = vtanh.pop %v1662
        %v1671 = vtanh.pop %v1663
        %v1672 = vtanh.pop %v1664
        %v1673 = vtanh.pop %v1665
        %1674 = vst [vmem:[#allocation3 + $0x8] sm:$0x20] %v1666
        %1675 = vst [vmem:[#allocation3 + $0x18] sm:$0x20] %v1667
        %1676 = vst [vmem:[#allocation3 + $0x28] sm:$0x20] %v1668
        %1677 = vst [vmem:[#allocation3 + $0x38] sm:$0x20] %v1669
        %1678 = vst [vmem:[#allocation3 + $0x48] sm:$0x20] %v1670
        %1679 = vst [vmem:[#allocation3 + $0x58] sm:$0x20] %v1671
        %1680 = vst [vmem:[#allocation3 + $0x68] sm:$0x20] %v1672
        %1681 = vst [vmem:[#allocation3 + $0x78] sm:$0x20] %v1673
        %v1690 = vrot.slane %v1666, 5
        %v1691 = vrot.slane %v1667, 4
        %v1692 = vsel %vm605, %v1691, %v1690
        %v1693 = vrot.slane %v1668, 3
        %v1694 = vsel %vm608, %v1693, %v1692
        %v1695 = vrot.slane %v1669, 2
        %v1696 = vsel %vm611, %v1695, %v1694
        %v1697 = vrot.slane %v1670, 1
        %v1698 = vsel %vm614, %v1697, %v1696
        %v1699 = vsel %vm617, %v1671, %v1698
        %v1700 = vrot.slane %v1672, 7
        %v1701 = vsel %vm620, %v1700, %v1699
        %v1702 = vrot.slane %v1673, 6
        %v1703 = vsel %vm623, %v1702, %v1701
        %1705 = vmatpush.msra.mxu0 %v534
        %1706 = vmatpush.msra.mxu0 %v533
        %1707 = vmatpush.msra.mxu0 %v532
        %1708 = vmatpush.msra.mxu0 %v531
        %1709 = vmatpush.msra.mxu0 %v530
        %1710 = vmatpush.msra.mxu0 %v529
        %1711 = vmatpush.msra.mxu0 %v528
        %1712 = vmatpush.msra.mxu0 %v527
        %1713 = vmatpush.msra.mxu0 %v526
        %1714 = vmatpush.msra.mxu0 %v525
        %1715 = vmatpush.msra.mxu0 %v524
        %1716 = vmatpush.msra.mxu0 %v523
        %1717 = vmatpush.msra.mxu0 %v522
        %1718 = vmatpush.msra.mxu0 %v521
        %1719 = vmatpush.msra.mxu0 %v520
        %1720 = vmatpush.msra.mxu0 %v519
        %1721 = vmatmul.f32.gmra.mxu0 %v1703
        %v1722 = vpop.f32.mrf.mxu0
        %v1723 = vadd.f32 0.0, %v1722
        %1724 = vdwg.mxu0
        %v1726 = vrot.slane %v1723, 2
        %v1727 = vrot.slane %v1723, 3
        %v1728 = vrot.slane %v1723, 4
        %v1729 = vrot.slane %v1723, 5
        %v1730 = vrot.slane %v1723, 6
        %v1731 = vrot.slane %v1723, 7
        %v1732 = vrot.slane %v1723, 1
        %v1741 = vadd.f32 %v475, %v1726
        %v1742 = vadd.f32 %v481, %v1727
        %v1743 = vadd.f32 %v487, %v1728
        %v1744 = vadd.f32 %v493, %v1729
        %v1745 = vadd.f32 %v499, %v1730
        %v1746 = vadd.f32 %v505, %v1731
        %v1747 = vadd.f32 %v511, %v1723
        %v1748 = vadd.f32 %v517, %v1732
        %v1749 = vtanh.pop %v1741
        %v1750 = vtanh.pop %v1742
        %v1751 = vtanh.pop %v1743
        %v1752 = vtanh.pop %v1744
        %v1753 = vtanh.pop %v1745
        %v1754 = vtanh.pop %v1746
        %v1755 = vtanh.pop %v1747
        %v1756 = vtanh.pop %v1748
        %1757 = vst [vmem:[#allocation3 + $0x8] sm:$0x40] %v1749
        %1758 = vst [vmem:[#allocation3 + $0x18] sm:$0x40] %v1750
        %1759 = vst [vmem:[#allocation3 + $0x28] sm:$0x40] %v1751
        %1760 = vst [vmem:[#allocation3 + $0x38] sm:$0x40] %v1752
        %1761 = vst [vmem:[#allocation3 + $0x48] sm:$0x40] %v1753
        %1762 = vst [vmem:[#allocation3 + $0x58] sm:$0x40] %v1754
        %1763 = vst [vmem:[#allocation3 + $0x68] sm:$0x40] %v1755
        %1764 = vst [vmem:[#allocation3 + $0x78] sm:$0x40] %v1756
        %v1773 = vrot.slane %v1749, 6
        %v1774 = vrot.slane %v1750, 5
        %v1775 = vsel %vm605, %v1774, %v1773
        %v1776 = vrot.slane %v1751, 4
        %v1777 = vsel %vm608, %v1776, %v1775
        %v1778 = vrot.slane %v1752, 3
        %v1779 = vsel %vm611, %v1778, %v1777
        %v1780 = vrot.slane %v1753, 2
        %v1781 = vsel %vm614, %v1780, %v1779
        %v1782 = vrot.slane %v1754, 1
        %v1783 = vsel %vm617, %v1782, %v1781
        %v1784 = vsel %vm620, %v1755, %v1783
        %v1785 = vrot.slane %v1756, 7
        %v1786 = vsel %vm623, %v1785, %v1784
        %1788 = vmatpush.msra.mxu0 %v534
        %1789 = vmatpush.msra.mxu0 %v533
        %1790 = vmatpush.msra.mxu0 %v532
        %1791 = vmatpush.msra.mxu0 %v531
        %1792 = vmatpush.msra.mxu0 %v530
        %1793 = vmatpush.msra.mxu0 %v529
        %1794 = vmatpush.msra.mxu0 %v528
        %1795 = vmatpush.msra.mxu0 %v527
        %1796 = vmatpush.msra.mxu0 %v526
        %1797 = vmatpush.msra.mxu0 %v525
        %1798 = vmatpush.msra.mxu0 %v524
        %1799 = vmatpush.msra.mxu0 %v523
        %1800 = vmatpush.msra.mxu0 %v522
        %1801 = vmatpush.msra.mxu0 %v521
        %1802 = vmatpush.msra.mxu0 %v520
        %1803 = vmatpush.msra.mxu0 %v519
        %1804 = vmatmul.f32.gmra.mxu0 %v1786
        %v1805 = vpop.f32.mrf.mxu0
        %v1806 = vadd.f32 0.0, %v1805
        %1807 = vdwg.mxu0
        %v1809 = vrot.slane %v1806, 1
        %v1810 = vrot.slane %v1806, 2
        %v1811 = vrot.slane %v1806, 3
        %v1812 = vrot.slane %v1806, 4
        %v1813 = vrot.slane %v1806, 5
        %v1814 = vrot.slane %v1806, 6
        %v1815 = vrot.slane %v1806, 7
        %v1824 = vadd.f32 %v475, %v1809
        %v1825 = vadd.f32 %v481, %v1810
        %v1826 = vadd.f32 %v487, %v1811
        %v1827 = vadd.f32 %v493, %v1812
        %v1828 = vadd.f32 %v499, %v1813
        %v1829 = vadd.f32 %v505, %v1814
        %v1830 = vadd.f32 %v511, %v1815
        %v1831 = vadd.f32 %v517, %v1806
        %v1832 = vtanh.pop %v1824
        %v1833 = vtanh.pop %v1825
        %v1834 = vtanh.pop %v1826
        %v1835 = vtanh.pop %v1827
        %v1836 = vtanh.pop %v1828
        %v1837 = vtanh.pop %v1829
        %v1838 = vtanh.pop %v1830
        %v1839 = vtanh.pop %v1831
        %1840 = vst [vmem:[#allocation3 + $0x8] sm:$0x80] %v1832
        %1841 = vst [vmem:[#allocation3 + $0x18] sm:$0x80] %v1833
        %1842 = vst [vmem:[#allocation3 + $0x28] sm:$0x80] %v1834
        %1843 = vst [vmem:[#allocation3 + $0x38] sm:$0x80] %v1835
        %1844 = vst [vmem:[#allocation3 + $0x48] sm:$0x80] %v1836
        %1845 = vst [vmem:[#allocation3 + $0x58] sm:$0x80] %v1837
        %1846 = vst [vmem:[#allocation3 + $0x68] sm:$0x80] %v1838
        %1847 = vst [vmem:[#allocation3 + $0x78] sm:$0x80] %v1839
        %v1856 = vrot.slane %v1833, 7
        %v1857 = vrot.slane %v1834, 6
        %v1858 = vsel %vm605, %v1857, %v1856
        %v1859 = vrot.slane %v1835, 5
        %v1860 = vsel %vm608, %v1859, %v1858
        %v1861 = vrot.slane %v1836, 4
        %v1862 = vsel %vm611, %v1861, %v1860
        %v1863 = vrot.slane %v1837, 3
        %v1864 = vsel %vm614, %v1863, %v1862
        %v1865 = vrot.slane %v1838, 2
        %v1866 = vsel %vm617, %v1865, %v1864
        %v1867 = vrot.slane %v1839, 1
        %v1868 = vsel %vm620, %v1867, %v1866
        %1871 = vst [vmem:[#allocation2 - $0x7] sm:$0x80] %v1832
        %1872 = vst [vmem:[#allocation2 + $0x1] sm:$0x7f] %v1868
        %v1873 = vld [vmem:[#allocation3] sm:$0xff]
        %v1874 = vld [vmem:[#allocation3 + $0x8] sm:$0xff]
        %v1875 = vld [vmem:[#allocation3 + $0x10] sm:$0xff]
        %v1876 = vld [vmem:[#allocation3 + $0x18] sm:$0xff]
        %v1877 = vld [vmem:[#allocation3 + $0x20] sm:$0xff]
        %v1878 = vld [vmem:[#allocation3 + $0x28] sm:$0xff]
        %v1879 = vld [vmem:[#allocation3 + $0x30] sm:$0xff]
        %v1880 = vld [vmem:[#allocation3 + $0x38] sm:$0xff]
        %v1881 = vld [vmem:[#allocation3 + $0x40] sm:$0xff]
        %v1882 = vld [vmem:[#allocation3 + $0x48] sm:$0xff]
        %v1883 = vld [vmem:[#allocation3 + $0x50] sm:$0xff]
        %v1884 = vld [vmem:[#allocation3 + $0x58] sm:$0xff]
        %v1885 = vld [vmem:[#allocation3 + $0x60] sm:$0xff]
        %v1886 = vld [vmem:[#allocation3 + $0x68] sm:$0xff]
        %v1887 = vld [vmem:[#allocation3 + $0x70] sm:$0xff]
        %v1888 = vld [vmem:[#allocation3 + $0x78] sm:$0xff]
        %v1889 = vld [vmem:[#allocation11] sm:$0xff]
        %v1890 = vld [vmem:[#allocation11 + $0x8] sm:$0xff]
        %v1891 = vld [vmem:[#allocation11 + $0x10] sm:$0xff]
        %v1892 = vld [vmem:[#allocation11 + $0x18] sm:$0xff]
        %v1893 = vld [vmem:[#allocation11 + $0x20] sm:$0xff]
        %v1894 = vld [vmem:[#allocation11 + $0x28] sm:$0xff]
        %v1895 = vld [vmem:[#allocation11 + $0x30] sm:$0xff]
        %v1896 = vld [vmem:[#allocation11 + $0x38] sm:$0xff]
        %v1897 = vld [vmem:[#allocation11 + $0x40] sm:$0xff]
        %v1898 = vld [vmem:[#allocation11 + $0x48] sm:$0xff]
        %v1899 = vld [vmem:[#allocation11 + $0x50] sm:$0xff]
        %v1900 = vld [vmem:[#allocation11 + $0x58] sm:$0xff]
        %v1901 = vld [vmem:[#allocation11 + $0x60] sm:$0xff]
        %v1902 = vld [vmem:[#allocation11 + $0x68] sm:$0xff]
        %v1903 = vld [vmem:[#allocation11 + $0x70] sm:$0xff]
        %v1904 = vld [vmem:[#allocation11 + $0x78] sm:$0xff]
        %s1905 = scalar_lea.vmem %s5, 1
        %v1906 = vld [vmem:[%s1905] sm:$0x1]
        %v1908 = vperm.slane %v1906, 0
        %1910 = vmatpush.msra.mxu0 %v1904
        %1911 = vmatpush.msra.mxu0 %v1903
        %1912 = vmatpush.msra.mxu0 %v1902
        %1913 = vmatpush.msra.mxu0 %v1901
        %1914 = vmatpush.msra.mxu0 %v1900
        %1915 = vmatpush.msra.mxu0 %v1899
        %1916 = vmatpush.msra.mxu0 %v1898
        %1917 = vmatpush.msra.mxu0 %v1897
        %1918 = vmatpush.msra.mxu0 %v1896
        %1919 = vmatpush.msra.mxu0 %v1895
        %1920 = vmatpush.msra.mxu0 %v1894
        %1921 = vmatpush.msra.mxu0 %v1893
        %1922 = vmatpush.msra.mxu0 %v1892
        %1923 = vmatpush.msra.mxu0 %v1891
        %1924 = vmatpush.msra.mxu0 %v1890
        %1925 = vmatpush.msra.mxu0 %v1889
        %1926 = vmatmul.f32.gmra.mxu0 %v1873
        %v1927 = vpop.f32.mrf.mxu0
        %v1928 = vadd.f32 %v1908, %v1927
        %1929 = vmatmul.f32.gmra.mxu0 %v1874
        %v1930 = vpop.f32.mrf.mxu0
        %v1931 = vadd.f32 %v1908, %v1930
        %1932 = vmatmul.f32.gmra.mxu0 %v1875
        %v1933 = vpop.f32.mrf.mxu0
        %v1934 = vadd.f32 %v1908, %v1933
        %1935 = vmatmul.f32.gmra.mxu0 %v1876
        %v1936 = vpop.f32.mrf.mxu0
        %v1937 = vadd.f32 %v1908, %v1936
        %1938 = vmatmul.f32.gmra.mxu0 %v1877
        %v1939 = vpop.f32.mrf.mxu0
        %v1940 = vadd.f32 %v1908, %v1939
        %1941 = vmatmul.f32.gmra.mxu0 %v1878
        %v1942 = vpop.f32.mrf.mxu0
        %v1943 = vadd.f32 %v1908, %v1942
        %1944 = vmatmul.f32.gmra.mxu0 %v1879
        %v1945 = vpop.f32.mrf.mxu0
        %v1946 = vadd.f32 %v1908, %v1945
        %1947 = vmatmul.f32.gmra.mxu0 %v1880
        %v1948 = vpop.f32.mrf.mxu0
        %v1949 = vadd.f32 %v1908, %v1948
        %1950 = vmatmul.f32.gmra.mxu0 %v1881
        %v1951 = vpop.f32.mrf.mxu0
        %v1952 = vadd.f32 %v1908, %v1951
        %1953 = vmatmul.f32.gmra.mxu0 %v1882
        %v1954 = vpop.f32.mrf.mxu0
        %v1955 = vadd.f32 %v1908, %v1954
        %1956 = vmatmul.f32.gmra.mxu0 %v1883
        %v1957 = vpop.f32.mrf.mxu0
        %v1958 = vadd.f32 %v1908, %v1957
        %1959 = vmatmul.f32.gmra.mxu0 %v1884
        %v1960 = vpop.f32.mrf.mxu0
        %v1961 = vadd.f32 %v1908, %v1960
        %1962 = vmatmul.f32.gmra.mxu0 %v1885
        %v1963 = vpop.f32.mrf.mxu0
        %v1964 = vadd.f32 %v1908, %v1963
        %1965 = vmatmul.f32.gmra.mxu0 %v1886
        %v1966 = vpop.f32.mrf.mxu0
        %v1967 = vadd.f32 %v1908, %v1966
        %1968 = vmatmul.f32.gmra.mxu0 %v1887
        %v1969 = vpop.f32.mrf.mxu0
        %v1970 = vadd.f32 %v1908, %v1969
        %1971 = vmatmul.f32.gmra.mxu0 %v1888
        %v1972 = vpop.f32.mrf.mxu0
        %v1973 = vadd.f32 %v1908, %v1972
        %1974 = vdwg.mxu0
        %s1975 = scalar_lea.vmem [#allocation13], 128
        %v1976 = vld [vmem:[%s1975] sm:$0xff]
        %v1977 = vld [vmem:[%s1975 + $0x8] sm:$0xff]
        %v1978 = vld [vmem:[%s1975 + $0x10] sm:$0xff]
        %v1979 = vld [vmem:[%s1975 + $0x18] sm:$0xff]
        %v1980 = vld [vmem:[%s1975 + $0x20] sm:$0xff]
        %v1981 = vld [vmem:[%s1975 + $0x28] sm:$0xff]
        %v1982 = vld [vmem:[%s1975 + $0x30] sm:$0xff]
        %v1983 = vld [vmem:[%s1975 + $0x38] sm:$0xff]
        %v1984 = vld [vmem:[%s1975 + $0x40] sm:$0xff]
        %v1985 = vld [vmem:[%s1975 + $0x48] sm:$0xff]
        %v1986 = vld [vmem:[%s1975 + $0x50] sm:$0xff]
        %v1987 = vld [vmem:[%s1975 + $0x58] sm:$0xff]
        %v1988 = vld [vmem:[%s1975 + $0x60] sm:$0xff]
        %v1989 = vld [vmem:[%s1975 + $0x68] sm:$0xff]
        %v1990 = vld [vmem:[%s1975 + $0x70] sm:$0xff]
        %v1991 = vld [vmem:[%s1975 + $0x78] sm:$0xff]
        %s1992 = scalar_lea.vmem [#allocation2], 8
        %v1993 = vld [vmem:[%s1992] sm:$0xff]
        %1994 = vmatpush.msra.mxu0 %v1991
        %1995 = vmatpush.msra.mxu0 %v1990
        %1996 = vmatpush.msra.mxu0 %v1989
        %1997 = vmatpush.msra.mxu0 %v1988
        %1998 = vmatpush.msra.mxu0 %v1987
        %1999 = vmatpush.msra.mxu0 %v1986
        %2000 = vmatpush.msra.mxu0 %v1985
        %2001 = vmatpush.msra.mxu0 %v1984
        %2002 = vmatpush.msra.mxu0 %v1983
        %2003 = vmatpush.msra.mxu0 %v1982
        %2004 = vmatpush.msra.mxu0 %v1981
        %2005 = vmatpush.msra.mxu0 %v1980
        %2006 = vmatpush.msra.mxu0 %v1979
        %2007 = vmatpush.msra.mxu0 %v1978
        %2008 = vmatpush.msra.mxu0 %v1977
        %2009 = vmatpush.msra.mxu0 %v1976
        %2010 = vmatmul.f32.gmra.mxu0 %v1993
        %v2011 = vpop.f32.mrf.mxu0
        %v2012 = vadd.f32 0.0, %v2011
        %2013 = vdwg.mxu0
        %v2015 = vrot.slane %v2012, 1
        %v2016 = vrot.slane %v2012, 2
        %v2017 = vrot.slane %v2012, 3
        %v2018 = vrot.slane %v2012, 4
        %v2019 = vrot.slane %v2012, 5
        %v2020 = vrot.slane %v2012, 6
        %v2021 = vrot.slane %v2012, 7
        %v2030 = vadd.f32 %v1928, %v2012
        %v2031 = vadd.f32 %v1934, %v2015
        %v2032 = vadd.f32 %v1940, %v2016
        %v2033 = vadd.f32 %v1946, %v2017
        %v2034 = vadd.f32 %v1952, %v2018
        %v2035 = vadd.f32 %v1958, %v2019
        %v2036 = vadd.f32 %v1964, %v2020
        %v2037 = vadd.f32 %v1970, %v2021
        %v2038 = vtanh.pop %v2030
        %v2039 = vtanh.pop %v2031
        %v2040 = vtanh.pop %v2032
        %v2041 = vtanh.pop %v2033
        %v2042 = vtanh.pop %v2034
        %v2043 = vtanh.pop %v2035
        %v2044 = vtanh.pop %v2036
        %v2045 = vtanh.pop %v2037
        %2046 = vst [vmem:[%s405] sm:$0x1] %v2038
        %2047 = vst [vmem:[%s405 + $0x10] sm:$0x1] %v2039
        %2048 = vst [vmem:[%s405 + $0x20] sm:$0x1] %v2040
        %2049 = vst [vmem:[%s405 + $0x30] sm:$0x1] %v2041
        %2050 = vst [vmem:[%s405 + $0x40] sm:$0x1] %v2042
        %2051 = vst [vmem:[%s405 + $0x50] sm:$0x1] %v2043
        %2052 = vst [vmem:[%s405 + $0x60] sm:$0x1] %v2044
        %2053 = vst [vmem:[%s405 + $0x70] sm:$0x1] %v2045
        %v2062 = vrot.slane %v2039, 7
        %v2063 = vsel %vm605, %v2062, %v2038
        %v2064 = vrot.slane %v2040, 6
        %v2065 = vsel %vm608, %v2064, %v2063
        %v2066 = vrot.slane %v2041, 5
        %v2067 = vsel %vm611, %v2066, %v2065
        %v2068 = vrot.slane %v2042, 4
        %v2069 = vsel %vm614, %v2068, %v2067
        %v2070 = vrot.slane %v2043, 3
        %v2071 = vsel %vm617, %v2070, %v2069
        %v2072 = vrot.slane %v2044, 2
        %v2073 = vsel %vm620, %v2072, %v2071
        %v2074 = vrot.slane %v2045, 1
        %v2075 = vsel %vm623, %v2074, %v2073
        %2077 = vmatpush.msra.mxu0 %v1991
        %2078 = vmatpush.msra.mxu0 %v1990
        %2079 = vmatpush.msra.mxu0 %v1989
        %2080 = vmatpush.msra.mxu0 %v1988
        %2081 = vmatpush.msra.mxu0 %v1987
        %2082 = vmatpush.msra.mxu0 %v1986
        %2083 = vmatpush.msra.mxu0 %v1985
        %2084 = vmatpush.msra.mxu0 %v1984
        %2085 = vmatpush.msra.mxu0 %v1983
        %2086 = vmatpush.msra.mxu0 %v1982
        %2087 = vmatpush.msra.mxu0 %v1981
        %2088 = vmatpush.msra.mxu0 %v1980
        %2089 = vmatpush.msra.mxu0 %v1979
        %2090 = vmatpush.msra.mxu0 %v1978
        %2091 = vmatpush.msra.mxu0 %v1977
        %2092 = vmatpush.msra.mxu0 %v1976
        %2093 = vmatmul.f32.gmra.mxu0 %v2075
        %v2094 = vpop.f32.mrf.mxu0
        %v2095 = vadd.f32 0.0, %v2094
        %2096 = vdwg.mxu0
        %v2098 = vrot.slane %v2095, 7
        %v2099 = vrot.slane %v2095, 1
        %v2100 = vrot.slane %v2095, 2
        %v2101 = vrot.slane %v2095, 3
        %v2102 = vrot.slane %v2095, 4
        %v2103 = vrot.slane %v2095, 5
        %v2104 = vrot.slane %v2095, 6
        %v2113 = vadd.f32 %v1928, %v2098
        %v2114 = vadd.f32 %v1934, %v2095
        %v2115 = vadd.f32 %v1940, %v2099
        %v2116 = vadd.f32 %v1946, %v2100
        %v2117 = vadd.f32 %v1952, %v2101
        %v2118 = vadd.f32 %v1958, %v2102
        %v2119 = vadd.f32 %v1964, %v2103
        %v2120 = vadd.f32 %v1970, %v2104
        %v2121 = vtanh.pop %v2113
        %v2122 = vtanh.pop %v2114
        %v2123 = vtanh.pop %v2115
        %v2124 = vtanh.pop %v2116
        %v2125 = vtanh.pop %v2117
        %v2126 = vtanh.pop %v2118
        %v2127 = vtanh.pop %v2119
        %v2128 = vtanh.pop %v2120
        %2129 = vst [vmem:[%s405] sm:$0x2] %v2121
        %2130 = vst [vmem:[%s405 + $0x10] sm:$0x2] %v2122
        %2131 = vst [vmem:[%s405 + $0x20] sm:$0x2] %v2123
        %2132 = vst [vmem:[%s405 + $0x30] sm:$0x2] %v2124
        %2133 = vst [vmem:[%s405 + $0x40] sm:$0x2] %v2125
        %2134 = vst [vmem:[%s405 + $0x50] sm:$0x2] %v2126
        %2135 = vst [vmem:[%s405 + $0x60] sm:$0x2] %v2127
        %2136 = vst [vmem:[%s405 + $0x70] sm:$0x2] %v2128
        %v2145 = vrot.slane %v2121, 1
        %v2146 = vsel %vm605, %v2122, %v2145
        %v2147 = vrot.slane %v2123, 7
        %v2148 = vsel %vm608, %v2147, %v2146
        %v2149 = vrot.slane %v2124, 6
        %v2150 = vsel %vm611, %v2149, %v2148
        %v2151 = vrot.slane %v2125, 5
        %v2152 = vsel %vm614, %v2151, %v2150
        %v2153 = vrot.slane %v2126, 4
        %v2154 = vsel %vm617, %v2153, %v2152
        %v2155 = vrot.slane %v2127, 3
        %v2156 = vsel %vm620, %v2155, %v2154
        %v2157 = vrot.slane %v2128, 2
        %v2158 = vsel %vm623, %v2157, %v2156
        %2160 = vmatpush.msra.mxu0 %v1991
        %2161 = vmatpush.msra.mxu0 %v1990
        %2162 = vmatpush.msra.mxu0 %v1989
        %2163 = vmatpush.msra.mxu0 %v1988
        %2164 = vmatpush.msra.mxu0 %v1987
        %2165 = vmatpush.msra.mxu0 %v1986
        %2166 = vmatpush.msra.mxu0 %v1985
        %2167 = vmatpush.msra.mxu0 %v1984
        %2168 = vmatpush.msra.mxu0 %v1983
        %2169 = vmatpush.msra.mxu0 %v1982
        %2170 = vmatpush.msra.mxu0 %v1981
        %2171 = vmatpush.msra.mxu0 %v1980
        %2172 = vmatpush.msra.mxu0 %v1979
        %2173 = vmatpush.msra.mxu0 %v1978
        %2174 = vmatpush.msra.mxu0 %v1977
        %2175 = vmatpush.msra.mxu0 %v1976
        %2176 = vmatmul.f32.gmra.mxu0 %v2158
        %v2177 = vpop.f32.mrf.mxu0
        %v2178 = vadd.f32 0.0, %v2177
        %2179 = vdwg.mxu0
        %v2181 = vrot.slane %v2178, 6
        %v2182 = vrot.slane %v2178, 7
        %v2183 = vrot.slane %v2178, 1
        %v2184 = vrot.slane %v2178, 2
        %v2185 = vrot.slane %v2178, 3
        %v2186 = vrot.slane %v2178, 4
        %v2187 = vrot.slane %v2178, 5
        %v2196 = vadd.f32 %v1928, %v2181
        %v2197 = vadd.f32 %v1934, %v2182
        %v2198 = vadd.f32 %v1940, %v2178
        %v2199 = vadd.f32 %v1946, %v2183
        %v2200 = vadd.f32 %v1952, %v2184
        %v2201 = vadd.f32 %v1958, %v2185
        %v2202 = vadd.f32 %v1964, %v2186
        %v2203 = vadd.f32 %v1970, %v2187
        %v2204 = vtanh.pop %v2196
        %v2205 = vtanh.pop %v2197
        %v2206 = vtanh.pop %v2198
        %v2207 = vtanh.pop %v2199
        %v2208 = vtanh.pop %v2200
        %v2209 = vtanh.pop %v2201
        %v2210 = vtanh.pop %v2202
        %v2211 = vtanh.pop %v2203
        %2212 = vst [vmem:[%s405] sm:$0x4] %v2204
        %2213 = vst [vmem:[%s405 + $0x10] sm:$0x4] %v2205
        %2214 = vst [vmem:[%s405 + $0x20] sm:$0x4] %v2206
        %2215 = vst [vmem:[%s405 + $0x30] sm:$0x4] %v2207
        %2216 = vst [vmem:[%s405 + $0x40] sm:$0x4] %v2208
        %2217 = vst [vmem:[%s405 + $0x50] sm:$0x4] %v2209
        %2218 = vst [vmem:[%s405 + $0x60] sm:$0x4] %v2210
        %2219 = vst [vmem:[%s405 + $0x70] sm:$0x4] %v2211
        %v2228 = vrot.slane %v2204, 2
        %v2229 = vrot.slane %v2205, 1
        %v2230 = vsel %vm605, %v2229, %v2228
        %v2231 = vsel %vm608, %v2206, %v2230
        %v2232 = vrot.slane %v2207, 7
        %v2233 = vsel %vm611, %v2232, %v2231
        %v2234 = vrot.slane %v2208, 6
        %v2235 = vsel %vm614, %v2234, %v2233
        %v2236 = vrot.slane %v2209, 5
        %v2237 = vsel %vm617, %v2236, %v2235
        %v2238 = vrot.slane %v2210, 4
        %v2239 = vsel %vm620, %v2238, %v2237
        %v2240 = vrot.slane %v2211, 3
        %v2241 = vsel %vm623, %v2240, %v2239
        %2243 = vmatpush.msra.mxu0 %v1991
        %2244 = vmatpush.msra.mxu0 %v1990
        %2245 = vmatpush.msra.mxu0 %v1989
        %2246 = vmatpush.msra.mxu0 %v1988
        %2247 = vmatpush.msra.mxu0 %v1987
        %2248 = vmatpush.msra.mxu0 %v1986
        %2249 = vmatpush.msra.mxu0 %v1985
        %2250 = vmatpush.msra.mxu0 %v1984
        %2251 = vmatpush.msra.mxu0 %v1983
        %2252 = vmatpush.msra.mxu0 %v1982
        %2253 = vmatpush.msra.mxu0 %v1981
        %2254 = vmatpush.msra.mxu0 %v1980
        %2255 = vmatpush.msra.mxu0 %v1979
        %2256 = vmatpush.msra.mxu0 %v1978
        %2257 = vmatpush.msra.mxu0 %v1977
        %2258 = vmatpush.msra.mxu0 %v1976
        %2259 = vmatmul.f32.gmra.mxu0 %v2241
        %v2260 = vpop.f32.mrf.mxu0
        %v2261 = vadd.f32 0.0, %v2260
        %2262 = vdwg.mxu0
        %v2264 = vrot.slane %v2261, 5
        %v2265 = vrot.slane %v2261, 6
        %v2266 = vrot.slane %v2261, 7
        %v2267 = vrot.slane %v2261, 1
        %v2268 = vrot.slane %v2261, 2
        %v2269 = vrot.slane %v2261, 3
        %v2270 = vrot.slane %v2261, 4
        %v2279 = vadd.f32 %v1928, %v2264
        %v2280 = vadd.f32 %v1934, %v2265
        %v2281 = vadd.f32 %v1940, %v2266
        %v2282 = vadd.f32 %v1946, %v2261
        %v2283 = vadd.f32 %v1952, %v2267
        %v2284 = vadd.f32 %v1958, %v2268
        %v2285 = vadd.f32 %v1964, %v2269
        %v2286 = vadd.f32 %v1970, %v2270
        %v2287 = vtanh.pop %v2279
        %v2288 = vtanh.pop %v2280
        %v2289 = vtanh.pop %v2281
        %v2290 = vtanh.pop %v2282
        %v2291 = vtanh.pop %v2283
        %v2292 = vtanh.pop %v2284
        %v2293 = vtanh.pop %v2285
        %v2294 = vtanh.pop %v2286
        %2295 = vst [vmem:[%s405] sm:$0x8] %v2287
        %2296 = vst [vmem:[%s405 + $0x10] sm:$0x8] %v2288
        %2297 = vst [vmem:[%s405 + $0x20] sm:$0x8] %v2289
        %2298 = vst [vmem:[%s405 + $0x30] sm:$0x8] %v2290
        %2299 = vst [vmem:[%s405 + $0x40] sm:$0x8] %v2291
        %2300 = vst [vmem:[%s405 + $0x50] sm:$0x8] %v2292
        %2301 = vst [vmem:[%s405 + $0x60] sm:$0x8] %v2293
        %2302 = vst [vmem:[%s405 + $0x70] sm:$0x8] %v2294
        %v2311 = vrot.slane %v2287, 3
        %v2312 = vrot.slane %v2288, 2
        %v2313 = vsel %vm605, %v2312, %v2311
        %v2314 = vrot.slane %v2289, 1
        %v2315 = vsel %vm608, %v2314, %v2313
        %v2316 = vsel %vm611, %v2290, %v2315
        %v2317 = vrot.slane %v2291, 7
        %v2318 = vsel %vm614, %v2317, %v2316
        %v2319 = vrot.slane %v2292, 6
        %v2320 = vsel %vm617, %v2319, %v2318
        %v2321 = vrot.slane %v2293, 5
        %v2322 = vsel %vm620, %v2321, %v2320
        %v2323 = vrot.slane %v2294, 4
        %v2324 = vsel %vm623, %v2323, %v2322
        %2326 = vmatpush.msra.mxu0 %v1991
        %2327 = vmatpush.msra.mxu0 %v1990
        %2328 = vmatpush.msra.mxu0 %v1989
        %2329 = vmatpush.msra.mxu0 %v1988
        %2330 = vmatpush.msra.mxu0 %v1987
        %2331 = vmatpush.msra.mxu0 %v1986
        %2332 = vmatpush.msra.mxu0 %v1985
        %2333 = vmatpush.msra.mxu0 %v1984
        %2334 = vmatpush.msra.mxu0 %v1983
        %2335 = vmatpush.msra.mxu0 %v1982
        %2336 = vmatpush.msra.mxu0 %v1981
        %2337 = vmatpush.msra.mxu0 %v1980
        %2338 = vmatpush.msra.mxu0 %v1979
        %2339 = vmatpush.msra.mxu0 %v1978
        %2340 = vmatpush.msra.mxu0 %v1977
        %2341 = vmatpush.msra.mxu0 %v1976
        %2342 = vmatmul.f32.gmra.mxu0 %v2324
        %v2343 = vpop.f32.mrf.mxu0
        %v2344 = vadd.f32 0.0, %v2343
        %2345 = vdwg.mxu0
        %v2347 = vrot.slane %v2344, 4
        %v2348 = vrot.slane %v2344, 5
        %v2349 = vrot.slane %v2344, 6
        %v2350 = vrot.slane %v2344, 7
        %v2351 = vrot.slane %v2344, 1
        %v2352 = vrot.slane %v2344, 2
        %v2353 = vrot.slane %v2344, 3
        %v2362 = vadd.f32 %v1928, %v2347
        %v2363 = vadd.f32 %v1934, %v2348
        %v2364 = vadd.f32 %v1940, %v2349
        %v2365 = vadd.f32 %v1946, %v2350
        %v2366 = vadd.f32 %v1952, %v2344
        %v2367 = vadd.f32 %v1958, %v2351
        %v2368 = vadd.f32 %v1964, %v2352
        %v2369 = vadd.f32 %v1970, %v2353
        %v2370 = vtanh.pop %v2362
        %v2371 = vtanh.pop %v2363
        %v2372 = vtanh.pop %v2364
        %v2373 = vtanh.pop %v2365
        %v2374 = vtanh.pop %v2366
        %v2375 = vtanh.pop %v2367
        %v2376 = vtanh.pop %v2368
        %v2377 = vtanh.pop %v2369
        %2378 = vst [vmem:[%s405] sm:$0x10] %v2370
        %2379 = vst [vmem:[%s405 + $0x10] sm:$0x10] %v2371
        %2380 = vst [vmem:[%s405 + $0x20] sm:$0x10] %v2372
        %2381 = vst [vmem:[%s405 + $0x30] sm:$0x10] %v2373
        %2382 = vst [vmem:[%s405 + $0x40] sm:$0x10] %v2374
        %2383 = vst [vmem:[%s405 + $0x50] sm:$0x10] %v2375
        %2384 = vst [vmem:[%s405 + $0x60] sm:$0x10] %v2376
        %2385 = vst [vmem:[%s405 + $0x70] sm:$0x10] %v2377
        %v2394 = vrot.slane %v2370, 4
        %v2395 = vrot.slane %v2371, 3
        %v2396 = vsel %vm605, %v2395, %v2394
        %v2397 = vrot.slane %v2372, 2
        %v2398 = vsel %vm608, %v2397, %v2396
        %v2399 = vrot.slane %v2373, 1
        %v2400 = vsel %vm611, %v2399, %v2398
        %v2401 = vsel %vm614, %v2374, %v2400
        %v2402 = vrot.slane %v2375, 7
        %v2403 = vsel %vm617, %v2402, %v2401
        %v2404 = vrot.slane %v2376, 6
        %v2405 = vsel %vm620, %v2404, %v2403
        %v2406 = vrot.slane %v2377, 5
        %v2407 = vsel %vm623, %v2406, %v2405
        %2409 = vmatpush.msra.mxu0 %v1991
        %2410 = vmatpush.msra.mxu0 %v1990
        %2411 = vmatpush.msra.mxu0 %v1989
        %2412 = vmatpush.msra.mxu0 %v1988
        %2413 = vmatpush.msra.mxu0 %v1987
        %2414 = vmatpush.msra.mxu0 %v1986
        %2415 = vmatpush.msra.mxu0 %v1985
        %2416 = vmatpush.msra.mxu0 %v1984
        %2417 = vmatpush.msra.mxu0 %v1983
        %2418 = vmatpush.msra.mxu0 %v1982
        %2419 = vmatpush.msra.mxu0 %v1981
        %2420 = vmatpush.msra.mxu0 %v1980
        %2421 = vmatpush.msra.mxu0 %v1979
        %2422 = vmatpush.msra.mxu0 %v1978
        %2423 = vmatpush.msra.mxu0 %v1977
        %2424 = vmatpush.msra.mxu0 %v1976
        %2425 = vmatmul.f32.gmra.mxu0 %v2407
        %v2426 = vpop.f32.mrf.mxu0
        %v2427 = vadd.f32 0.0, %v2426
        %2428 = vdwg.mxu0
        %v2430 = vrot.slane %v2427, 3
        %v2431 = vrot.slane %v2427, 4
        %v2432 = vrot.slane %v2427, 5
        %v2433 = vrot.slane %v2427, 6
        %v2434 = vrot.slane %v2427, 7
        %v2435 = vrot.slane %v2427, 1
        %v2436 = vrot.slane %v2427, 2
        %v2445 = vadd.f32 %v1928, %v2430
        %v2446 = vadd.f32 %v1934, %v2431
        %v2447 = vadd.f32 %v1940, %v2432
        %v2448 = vadd.f32 %v1946, %v2433
        %v2449 = vadd.f32 %v1952, %v2434
        %v2450 = vadd.f32 %v1958, %v2427
        %v2451 = vadd.f32 %v1964, %v2435
        %v2452 = vadd.f32 %v1970, %v2436
        %v2453 = vtanh.pop %v2445
        %v2454 = vtanh.pop %v2446
        %v2455 = vtanh.pop %v2447
        %v2456 = vtanh.pop %v2448
        %v2457 = vtanh.pop %v2449
        %v2458 = vtanh.pop %v2450
        %v2459 = vtanh.pop %v2451
        %v2460 = vtanh.pop %v2452
        %2461 = vst [vmem:[%s405] sm:$0x20] %v2453
        %2462 = vst [vmem:[%s405 + $0x10] sm:$0x20] %v2454
        %2463 = vst [vmem:[%s405 + $0x20] sm:$0x20] %v2455
        %2464 = vst [vmem:[%s405 + $0x30] sm:$0x20] %v2456
        %2465 = vst [vmem:[%s405 + $0x40] sm:$0x20] %v2457
        %2466 = vst [vmem:[%s405 + $0x50] sm:$0x20] %v2458
        %2467 = vst [vmem:[%s405 + $0x60] sm:$0x20] %v2459
        %2468 = vst [vmem:[%s405 + $0x70] sm:$0x20] %v2460
        %v2477 = vrot.slane %v2453, 5
        %v2478 = vrot.slane %v2454, 4
        %v2479 = vsel %vm605, %v2478, %v2477
        %v2480 = vrot.slane %v2455, 3
        %v2481 = vsel %vm608, %v2480, %v2479
        %v2482 = vrot.slane %v2456, 2
        %v2483 = vsel %vm611, %v2482, %v2481
        %v2484 = vrot.slane %v2457, 1
        %v2485 = vsel %vm614, %v2484, %v2483
        %v2486 = vsel %vm617, %v2458, %v2485
        %v2487 = vrot.slane %v2459, 7
        %v2488 = vsel %vm620, %v2487, %v2486
        %v2489 = vrot.slane %v2460, 6
        %v2490 = vsel %vm623, %v2489, %v2488
        %2492 = vmatpush.msra.mxu0 %v1991
        %2493 = vmatpush.msra.mxu0 %v1990
        %2494 = vmatpush.msra.mxu0 %v1989
        %2495 = vmatpush.msra.mxu0 %v1988
        %2496 = vmatpush.msra.mxu0 %v1987
        %2497 = vmatpush.msra.mxu0 %v1986
        %2498 = vmatpush.msra.mxu0 %v1985
        %2499 = vmatpush.msra.mxu0 %v1984
        %2500 = vmatpush.msra.mxu0 %v1983
        %2501 = vmatpush.msra.mxu0 %v1982
        %2502 = vmatpush.msra.mxu0 %v1981
        %2503 = vmatpush.msra.mxu0 %v1980
        %2504 = vmatpush.msra.mxu0 %v1979
        %2505 = vmatpush.msra.mxu0 %v1978
        %2506 = vmatpush.msra.mxu0 %v1977
        %2507 = vmatpush.msra.mxu0 %v1976
        %2508 = vmatmul.f32.gmra.mxu0 %v2490
        %v2509 = vpop.f32.mrf.mxu0
        %v2510 = vadd.f32 0.0, %v2509
        %2511 = vdwg.mxu0
        %v2513 = vrot.slane %v2510, 2
        %v2514 = vrot.slane %v2510, 3
        %v2515 = vrot.slane %v2510, 4
        %v2516 = vrot.slane %v2510, 5
        %v2517 = vrot.slane %v2510, 6
        %v2518 = vrot.slane %v2510, 7
        %v2519 = vrot.slane %v2510, 1
        %v2528 = vadd.f32 %v1928, %v2513
        %v2529 = vadd.f32 %v1934, %v2514
        %v2530 = vadd.f32 %v1940, %v2515
        %v2531 = vadd.f32 %v1946, %v2516
        %v2532 = vadd.f32 %v1952, %v2517
        %v2533 = vadd.f32 %v1958, %v2518
        %v2534 = vadd.f32 %v1964, %v2510
        %v2535 = vadd.f32 %v1970, %v2519
        %v2536 = vtanh.pop %v2528
        %v2537 = vtanh.pop %v2529
        %v2538 = vtanh.pop %v2530
        %v2539 = vtanh.pop %v2531
        %v2540 = vtanh.pop %v2532
        %v2541 = vtanh.pop %v2533
        %v2542 = vtanh.pop %v2534
        %v2543 = vtanh.pop %v2535
        %2544 = vst [vmem:[%s405] sm:$0x40] %v2536
        %2545 = vst [vmem:[%s405 + $0x10] sm:$0x40] %v2537
        %2546 = vst [vmem:[%s405 + $0x20] sm:$0x40] %v2538
        %2547 = vst [vmem:[%s405 + $0x30] sm:$0x40] %v2539
        %2548 = vst [vmem:[%s405 + $0x40] sm:$0x40] %v2540
        %2549 = vst [vmem:[%s405 + $0x50] sm:$0x40] %v2541
        %2550 = vst [vmem:[%s405 + $0x60] sm:$0x40] %v2542
        %2551 = vst [vmem:[%s405 + $0x70] sm:$0x40] %v2543
        %v2560 = vrot.slane %v2536, 6
        %v2561 = vrot.slane %v2537, 5
        %v2562 = vsel %vm605, %v2561, %v2560
        %v2563 = vrot.slane %v2538, 4
        %v2564 = vsel %vm608, %v2563, %v2562
        %v2565 = vrot.slane %v2539, 3
        %v2566 = vsel %vm611, %v2565, %v2564
        %v2567 = vrot.slane %v2540, 2
        %v2568 = vsel %vm614, %v2567, %v2566
        %v2569 = vrot.slane %v2541, 1
        %v2570 = vsel %vm617, %v2569, %v2568
        %v2571 = vsel %vm620, %v2542, %v2570
        %v2572 = vrot.slane %v2543, 7
        %v2573 = vsel %vm623, %v2572, %v2571
        %2575 = vmatpush.msra.mxu0 %v1991
        %2576 = vmatpush.msra.mxu0 %v1990
        %2577 = vmatpush.msra.mxu0 %v1989
        %2578 = vmatpush.msra.mxu0 %v1988
        %2579 = vmatpush.msra.mxu0 %v1987
        %2580 = vmatpush.msra.mxu0 %v1986
        %2581 = vmatpush.msra.mxu0 %v1985
        %2582 = vmatpush.msra.mxu0 %v1984
        %2583 = vmatpush.msra.mxu0 %v1983
        %2584 = vmatpush.msra.mxu0 %v1982
        %2585 = vmatpush.msra.mxu0 %v1981
        %2586 = vmatpush.msra.mxu0 %v1980
        %2587 = vmatpush.msra.mxu0 %v1979
        %2588 = vmatpush.msra.mxu0 %v1978
        %2589 = vmatpush.msra.mxu0 %v1977
        %2590 = vmatpush.msra.mxu0 %v1976
        %2591 = vmatmul.f32.gmra.mxu0 %v2573
        %v2592 = vpop.f32.mrf.mxu0
        %v2593 = vadd.f32 0.0, %v2592
        %2594 = vdwg.mxu0
        %v2596 = vrot.slane %v2593, 1
        %v2597 = vrot.slane %v2593, 2
        %v2598 = vrot.slane %v2593, 3
        %v2599 = vrot.slane %v2593, 4
        %v2600 = vrot.slane %v2593, 5
        %v2601 = vrot.slane %v2593, 6
        %v2602 = vrot.slane %v2593, 7
        %v2611 = vadd.f32 %v1928, %v2596
        %v2612 = vadd.f32 %v1934, %v2597
        %v2613 = vadd.f32 %v1940, %v2598
        %v2614 = vadd.f32 %v1946, %v2599
        %v2615 = vadd.f32 %v1952, %v2600
        %v2616 = vadd.f32 %v1958, %v2601
        %v2617 = vadd.f32 %v1964, %v2602
        %v2618 = vadd.f32 %v1970, %v2593
        %v2619 = vtanh.pop %v2611
        %v2620 = vtanh.pop %v2612
        %v2621 = vtanh.pop %v2613
        %v2622 = vtanh.pop %v2614
        %v2623 = vtanh.pop %v2615
        %v2624 = vtanh.pop %v2616
        %v2625 = vtanh.pop %v2617
        %v2626 = vtanh.pop %v2618
        %2627 = vst [vmem:[%s405] sm:$0x80] %v2619
        %2628 = vst [vmem:[%s405 + $0x10] sm:$0x80] %v2620
        %2629 = vst [vmem:[%s405 + $0x20] sm:$0x80] %v2621
        %2630 = vst [vmem:[%s405 + $0x30] sm:$0x80] %v2622
        %2631 = vst [vmem:[%s405 + $0x40] sm:$0x80] %v2623
        %2632 = vst [vmem:[%s405 + $0x50] sm:$0x80] %v2624
        %2633 = vst [vmem:[%s405 + $0x60] sm:$0x80] %v2625
        %2634 = vst [vmem:[%s405 + $0x70] sm:$0x80] %v2626
        %v2643 = vrot.slane %v2619, 7
        %v2644 = vrot.slane %v2620, 6
        %v2645 = vsel %vm605, %v2644, %v2643
        %v2646 = vrot.slane %v2621, 5
        %v2647 = vsel %vm608, %v2646, %v2645
        %v2648 = vrot.slane %v2622, 4
        %v2649 = vsel %vm611, %v2648, %v2647
        %v2650 = vrot.slane %v2623, 3
        %v2651 = vsel %vm614, %v2650, %v2649
        %v2652 = vrot.slane %v2624, 2
        %v2653 = vsel %vm617, %v2652, %v2651
        %v2654 = vrot.slane %v2625, 1
        %v2655 = vsel %vm620, %v2654, %v2653
        %v2656 = vsel %vm623, %v2626, %v2655
        %2658 = vmatpush.msra.mxu0 %v1991
        %2659 = vmatpush.msra.mxu0 %v1990
        %2660 = vmatpush.msra.mxu0 %v1989
        %2661 = vmatpush.msra.mxu0 %v1988
        %2662 = vmatpush.msra.mxu0 %v1987
        %2663 = vmatpush.msra.mxu0 %v1986
        %2664 = vmatpush.msra.mxu0 %v1985
        %2665 = vmatpush.msra.mxu0 %v1984
        %2666 = vmatpush.msra.mxu0 %v1983
        %2667 = vmatpush.msra.mxu0 %v1982
        %2668 = vmatpush.msra.mxu0 %v1981
        %2669 = vmatpush.msra.mxu0 %v1980
        %2670 = vmatpush.msra.mxu0 %v1979
        %2671 = vmatpush.msra.mxu0 %v1978
        %2672 = vmatpush.msra.mxu0 %v1977
        %2673 = vmatpush.msra.mxu0 %v1976
        %2674 = vmatmul.f32.gmra.mxu0 %v2656
        %v2675 = vpop.f32.mrf.mxu0
        %v2676 = vadd.f32 0.0, %v2675
        %2677 = vdwg.mxu0
        %v2679 = vrot.slane %v2676, 1
        %v2680 = vrot.slane %v2676, 2
        %v2681 = vrot.slane %v2676, 3
        %v2682 = vrot.slane %v2676, 4
        %v2683 = vrot.slane %v2676, 5
        %v2684 = vrot.slane %v2676, 6
        %v2685 = vrot.slane %v2676, 7
        %v2694 = vadd.f32 %v1931, %v2676
        %v2695 = vadd.f32 %v1937, %v2679
        %v2696 = vadd.f32 %v1943, %v2680
        %v2697 = vadd.f32 %v1949, %v2681
        %v2698 = vadd.f32 %v1955, %v2682
        %v2699 = vadd.f32 %v1961, %v2683
        %v2700 = vadd.f32 %v1967, %v2684
        %v2701 = vadd.f32 %v1973, %v2685
        %v2702 = vtanh.pop %v2694
        %v2703 = vtanh.pop %v2695
        %v2704 = vtanh.pop %v2696
        %v2705 = vtanh.pop %v2697
        %v2706 = vtanh.pop %v2698
        %v2707 = vtanh.pop %v2699
        %v2708 = vtanh.pop %v2700
        %v2709 = vtanh.pop %v2701
        %2710 = vst [vmem:[%s405 + $0x8] sm:$0x1] %v2702
        %2711 = vst [vmem:[%s405 + $0x18] sm:$0x1] %v2703
        %2712 = vst [vmem:[%s405 + $0x28] sm:$0x1] %v2704
        %2713 = vst [vmem:[%s405 + $0x38] sm:$0x1] %v2705
        %2714 = vst [vmem:[%s405 + $0x48] sm:$0x1] %v2706
        %2715 = vst [vmem:[%s405 + $0x58] sm:$0x1] %v2707
        %2716 = vst [vmem:[%s405 + $0x68] sm:$0x1] %v2708
        %2717 = vst [vmem:[%s405 + $0x78] sm:$0x1] %v2709
        %v2726 = vrot.slane %v2703, 7
        %v2727 = vsel %vm605, %v2726, %v2702
        %v2728 = vrot.slane %v2704, 6
        %v2729 = vsel %vm608, %v2728, %v2727
        %v2730 = vrot.slane %v2705, 5
        %v2731 = vsel %vm611, %v2730, %v2729
        %v2732 = vrot.slane %v2706, 4
        %v2733 = vsel %vm614, %v2732, %v2731
        %v2734 = vrot.slane %v2707, 3
        %v2735 = vsel %vm617, %v2734, %v2733
        %v2736 = vrot.slane %v2708, 2
        %v2737 = vsel %vm620, %v2736, %v2735
        %v2738 = vrot.slane %v2709, 1
        %v2739 = vsel %vm623, %v2738, %v2737
        %2741 = vmatpush.msra.mxu0 %v1991
        %2742 = vmatpush.msra.mxu0 %v1990
        %2743 = vmatpush.msra.mxu0 %v1989
        %2744 = vmatpush.msra.mxu0 %v1988
        %2745 = vmatpush.msra.mxu0 %v1987
        %2746 = vmatpush.msra.mxu0 %v1986
        %2747 = vmatpush.msra.mxu0 %v1985
        %2748 = vmatpush.msra.mxu0 %v1984
        %2749 = vmatpush.msra.mxu0 %v1983
        %2750 = vmatpush.msra.mxu0 %v1982
        %2751 = vmatpush.msra.mxu0 %v1981
        %2752 = vmatpush.msra.mxu0 %v1980
        %2753 = vmatpush.msra.mxu0 %v1979
        %2754 = vmatpush.msra.mxu0 %v1978
        %2755 = vmatpush.msra.mxu0 %v1977
        %2756 = vmatpush.msra.mxu0 %v1976
        %2757 = vmatmul.f32.gmra.mxu0 %v2739
        %v2758 = vpop.f32.mrf.mxu0
        %v2759 = vadd.f32 0.0, %v2758
        %2760 = vdwg.mxu0
        %v2762 = vrot.slane %v2759, 7
        %v2763 = vrot.slane %v2759, 1
        %v2764 = vrot.slane %v2759, 2
        %v2765 = vrot.slane %v2759, 3
        %v2766 = vrot.slane %v2759, 4
        %v2767 = vrot.slane %v2759, 5
        %v2768 = vrot.slane %v2759, 6
        %v2777 = vadd.f32 %v1931, %v2762
        %v2778 = vadd.f32 %v1937, %v2759
        %v2779 = vadd.f32 %v1943, %v2763
        %v2780 = vadd.f32 %v1949, %v2764
        %v2781 = vadd.f32 %v1955, %v2765
        %v2782 = vadd.f32 %v1961, %v2766
        %v2783 = vadd.f32 %v1967, %v2767
        %v2784 = vadd.f32 %v1973, %v2768
        %v2785 = vtanh.pop %v2777
        %v2786 = vtanh.pop %v2778
        %v2787 = vtanh.pop %v2779
        %v2788 = vtanh.pop %v2780
        %v2789 = vtanh.pop %v2781
        %v2790 = vtanh.pop %v2782
        %v2791 = vtanh.pop %v2783
        %v2792 = vtanh.pop %v2784
        %2793 = vst [vmem:[%s405 + $0x8] sm:$0x2] %v2785
        %2794 = vst [vmem:[%s405 + $0x18] sm:$0x2] %v2786
        %2795 = vst [vmem:[%s405 + $0x28] sm:$0x2] %v2787
        %2796 = vst [vmem:[%s405 + $0x38] sm:$0x2] %v2788
        %2797 = vst [vmem:[%s405 + $0x48] sm:$0x2] %v2789
        %2798 = vst [vmem:[%s405 + $0x58] sm:$0x2] %v2790
        %2799 = vst [vmem:[%s405 + $0x68] sm:$0x2] %v2791
        %2800 = vst [vmem:[%s405 + $0x78] sm:$0x2] %v2792
        %v2809 = vrot.slane %v2785, 1
        %v2810 = vsel %vm605, %v2786, %v2809
        %v2811 = vrot.slane %v2787, 7
        %v2812 = vsel %vm608, %v2811, %v2810
        %v2813 = vrot.slane %v2788, 6
        %v2814 = vsel %vm611, %v2813, %v2812
        %v2815 = vrot.slane %v2789, 5
        %v2816 = vsel %vm614, %v2815, %v2814
        %v2817 = vrot.slane %v2790, 4
        %v2818 = vsel %vm617, %v2817, %v2816
        %v2819 = vrot.slane %v2791, 3
        %v2820 = vsel %vm620, %v2819, %v2818
        %v2821 = vrot.slane %v2792, 2
        %v2822 = vsel %vm623, %v2821, %v2820
        %2824 = vmatpush.msra.mxu0 %v1991
        %2825 = vmatpush.msra.mxu0 %v1990
        %2826 = vmatpush.msra.mxu0 %v1989
        %2827 = vmatpush.msra.mxu0 %v1988
        %2828 = vmatpush.msra.mxu0 %v1987
        %2829 = vmatpush.msra.mxu0 %v1986
        %2830 = vmatpush.msra.mxu0 %v1985
        %2831 = vmatpush.msra.mxu0 %v1984
        %2832 = vmatpush.msra.mxu0 %v1983
        %2833 = vmatpush.msra.mxu0 %v1982
        %2834 = vmatpush.msra.mxu0 %v1981
        %2835 = vmatpush.msra.mxu0 %v1980
        %2836 = vmatpush.msra.mxu0 %v1979
        %2837 = vmatpush.msra.mxu0 %v1978
        %2838 = vmatpush.msra.mxu0 %v1977
        %2839 = vmatpush.msra.mxu0 %v1976
        %2840 = vmatmul.f32.gmra.mxu0 %v2822
        %v2841 = vpop.f32.mrf.mxu0
        %v2842 = vadd.f32 0.0, %v2841
        %2843 = vdwg.mxu0
        %v2845 = vrot.slane %v2842, 6
        %v2846 = vrot.slane %v2842, 7
        %v2847 = vrot.slane %v2842, 1
        %v2848 = vrot.slane %v2842, 2
        %v2849 = vrot.slane %v2842, 3
        %v2850 = vrot.slane %v2842, 4
        %v2851 = vrot.slane %v2842, 5
        %v2860 = vadd.f32 %v1931, %v2845
        %v2861 = vadd.f32 %v1937, %v2846
        %v2862 = vadd.f32 %v1943, %v2842
        %v2863 = vadd.f32 %v1949, %v2847
        %v2864 = vadd.f32 %v1955, %v2848
        %v2865 = vadd.f32 %v1961, %v2849
        %v2866 = vadd.f32 %v1967, %v2850
        %v2867 = vadd.f32 %v1973, %v2851
        %v2868 = vtanh.pop %v2860
        %v2869 = vtanh.pop %v2861
        %v2870 = vtanh.pop %v2862
        %v2871 = vtanh.pop %v2863
        %v2872 = vtanh.pop %v2864
        %v2873 = vtanh.pop %v2865
        %v2874 = vtanh.pop %v2866
        %v2875 = vtanh.pop %v2867
        %2876 = vst [vmem:[%s405 + $0x8] sm:$0x4] %v2868
        %2877 = vst [vmem:[%s405 + $0x18] sm:$0x4] %v2869
        %2878 = vst [vmem:[%s405 + $0x28] sm:$0x4] %v2870
        %2879 = vst [vmem:[%s405 + $0x38] sm:$0x4] %v2871
        %2880 = vst [vmem:[%s405 + $0x48] sm:$0x4] %v2872
        %2881 = vst [vmem:[%s405 + $0x58] sm:$0x4] %v2873
        %2882 = vst [vmem:[%s405 + $0x68] sm:$0x4] %v2874
        %2883 = vst [vmem:[%s405 + $0x78] sm:$0x4] %v2875
        %v2892 = vrot.slane %v2868, 2
        %v2893 = vrot.slane %v2869, 1
        %v2894 = vsel %vm605, %v2893, %v2892
        %v2895 = vsel %vm608, %v2870, %v2894
        %v2896 = vrot.slane %v2871, 7
        %v2897 = vsel %vm611, %v2896, %v2895
        %v2898 = vrot.slane %v2872, 6
        %v2899 = vsel %vm614, %v2898, %v2897
        %v2900 = vrot.slane %v2873, 5
        %v2901 = vsel %vm617, %v2900, %v2899
        %v2902 = vrot.slane %v2874, 4
        %v2903 = vsel %vm620, %v2902, %v2901
        %v2904 = vrot.slane %v2875, 3
        %v2905 = vsel %vm623, %v2904, %v2903
        %2907 = vmatpush.msra.mxu0 %v1991
        %2908 = vmatpush.msra.mxu0 %v1990
        %2909 = vmatpush.msra.mxu0 %v1989
        %2910 = vmatpush.msra.mxu0 %v1988
        %2911 = vmatpush.msra.mxu0 %v1987
        %2912 = vmatpush.msra.mxu0 %v1986
        %2913 = vmatpush.msra.mxu0 %v1985
        %2914 = vmatpush.msra.mxu0 %v1984
        %2915 = vmatpush.msra.mxu0 %v1983
        %2916 = vmatpush.msra.mxu0 %v1982
        %2917 = vmatpush.msra.mxu0 %v1981
        %2918 = vmatpush.msra.mxu0 %v1980
        %2919 = vmatpush.msra.mxu0 %v1979
        %2920 = vmatpush.msra.mxu0 %v1978
        %2921 = vmatpush.msra.mxu0 %v1977
        %2922 = vmatpush.msra.mxu0 %v1976
        %2923 = vmatmul.f32.gmra.mxu0 %v2905
        %v2924 = vpop.f32.mrf.mxu0
        %v2925 = vadd.f32 0.0, %v2924
        %2926 = vdwg.mxu0
        %v2928 = vrot.slane %v2925, 5
        %v2929 = vrot.slane %v2925, 6
        %v2930 = vrot.slane %v2925, 7
        %v2931 = vrot.slane %v2925, 1
        %v2932 = vrot.slane %v2925, 2
        %v2933 = vrot.slane %v2925, 3
        %v2934 = vrot.slane %v2925, 4
        %v2943 = vadd.f32 %v1931, %v2928
        %v2944 = vadd.f32 %v1937, %v2929
        %v2945 = vadd.f32 %v1943, %v2930
        %v2946 = vadd.f32 %v1949, %v2925
        %v2947 = vadd.f32 %v1955, %v2931
        %v2948 = vadd.f32 %v1961, %v2932
        %v2949 = vadd.f32 %v1967, %v2933
        %v2950 = vadd.f32 %v1973, %v2934
        %v2951 = vtanh.pop %v2943
        %v2952 = vtanh.pop %v2944
        %v2953 = vtanh.pop %v2945
        %v2954 = vtanh.pop %v2946
        %v2955 = vtanh.pop %v2947
        %v2956 = vtanh.pop %v2948
        %v2957 = vtanh.pop %v2949
        %v2958 = vtanh.pop %v2950
        %2959 = vst [vmem:[%s405 + $0x8] sm:$0x8] %v2951
        %2960 = vst [vmem:[%s405 + $0x18] sm:$0x8] %v2952
        %2961 = vst [vmem:[%s405 + $0x28] sm:$0x8] %v2953
        %2962 = vst [vmem:[%s405 + $0x38] sm:$0x8] %v2954
        %2963 = vst [vmem:[%s405 + $0x48] sm:$0x8] %v2955
        %2964 = vst [vmem:[%s405 + $0x58] sm:$0x8] %v2956
        %2965 = vst [vmem:[%s405 + $0x68] sm:$0x8] %v2957
        %2966 = vst [vmem:[%s405 + $0x78] sm:$0x8] %v2958
        %v2975 = vrot.slane %v2951, 3
        %v2976 = vrot.slane %v2952, 2
        %v2977 = vsel %vm605, %v2976, %v2975
        %v2978 = vrot.slane %v2953, 1
        %v2979 = vsel %vm608, %v2978, %v2977
        %v2980 = vsel %vm611, %v2954, %v2979
        %v2981 = vrot.slane %v2955, 7
        %v2982 = vsel %vm614, %v2981, %v2980
        %v2983 = vrot.slane %v2956, 6
        %v2984 = vsel %vm617, %v2983, %v2982
        %v2985 = vrot.slane %v2957, 5
        %v2986 = vsel %vm620, %v2985, %v2984
        %v2987 = vrot.slane %v2958, 4
        %v2988 = vsel %vm623, %v2987, %v2986
        %2990 = vmatpush.msra.mxu0 %v1991
        %2991 = vmatpush.msra.mxu0 %v1990
        %2992 = vmatpush.msra.mxu0 %v1989
        %2993 = vmatpush.msra.mxu0 %v1988
        %2994 = vmatpush.msra.mxu0 %v1987
        %2995 = vmatpush.msra.mxu0 %v1986
        %2996 = vmatpush.msra.mxu0 %v1985
        %2997 = vmatpush.msra.mxu0 %v1984
        %2998 = vmatpush.msra.mxu0 %v1983
        %2999 = vmatpush.msra.mxu0 %v1982
        %3000 = vmatpush.msra.mxu0 %v1981
        %3001 = vmatpush.msra.mxu0 %v1980
        %3002 = vmatpush.msra.mxu0 %v1979
        %3003 = vmatpush.msra.mxu0 %v1978
        %3004 = vmatpush.msra.mxu0 %v1977
        %3005 = vmatpush.msra.mxu0 %v1976
        %3006 = vmatmul.f32.gmra.mxu0 %v2988
        %v3007 = vpop.f32.mrf.mxu0
        %v3008 = vadd.f32 0.0, %v3007
        %3009 = vdwg.mxu0
        %v3011 = vrot.slane %v3008, 4
        %v3012 = vrot.slane %v3008, 5
        %v3013 = vrot.slane %v3008, 6
        %v3014 = vrot.slane %v3008, 7
        %v3015 = vrot.slane %v3008, 1
        %v3016 = vrot.slane %v3008, 2
        %v3017 = vrot.slane %v3008, 3
        %v3026 = vadd.f32 %v1931, %v3011
        %v3027 = vadd.f32 %v1937, %v3012
        %v3028 = vadd.f32 %v1943, %v3013
        %v3029 = vadd.f32 %v1949, %v3014
        %v3030 = vadd.f32 %v1955, %v3008
        %v3031 = vadd.f32 %v1961, %v3015
        %v3032 = vadd.f32 %v1967, %v3016
        %v3033 = vadd.f32 %v1973, %v3017
        %v3034 = vtanh.pop %v3026
        %v3035 = vtanh.pop %v3027
        %v3036 = vtanh.pop %v3028
        %v3037 = vtanh.pop %v3029
        %v3038 = vtanh.pop %v3030
        %v3039 = vtanh.pop %v3031
        %v3040 = vtanh.pop %v3032
        %v3041 = vtanh.pop %v3033
        %3042 = vst [vmem:[%s405 + $0x8] sm:$0x10] %v3034
        %3043 = vst [vmem:[%s405 + $0x18] sm:$0x10] %v3035
        %3044 = vst [vmem:[%s405 + $0x28] sm:$0x10] %v3036
        %3045 = vst [vmem:[%s405 + $0x38] sm:$0x10] %v3037
        %3046 = vst [vmem:[%s405 + $0x48] sm:$0x10] %v3038
        %3047 = vst [vmem:[%s405 + $0x58] sm:$0x10] %v3039
        %3048 = vst [vmem:[%s405 + $0x68] sm:$0x10] %v3040
        %3049 = vst [vmem:[%s405 + $0x78] sm:$0x10] %v3041
        %v3058 = vrot.slane %v3034, 4
        %v3059 = vrot.slane %v3035, 3
        %v3060 = vsel %vm605, %v3059, %v3058
        %v3061 = vrot.slane %v3036, 2
        %v3062 = vsel %vm608, %v3061, %v3060
        %v3063 = vrot.slane %v3037, 1
        %v3064 = vsel %vm611, %v3063, %v3062
        %v3065 = vsel %vm614, %v3038, %v3064
        %v3066 = vrot.slane %v3039, 7
        %v3067 = vsel %vm617, %v3066, %v3065
        %v3068 = vrot.slane %v3040, 6
        %v3069 = vsel %vm620, %v3068, %v3067
        %v3070 = vrot.slane %v3041, 5
        %v3071 = vsel %vm623, %v3070, %v3069
        %3073 = vmatpush.msra.mxu0 %v1991
        %3074 = vmatpush.msra.mxu0 %v1990
        %3075 = vmatpush.msra.mxu0 %v1989
        %3076 = vmatpush.msra.mxu0 %v1988
        %3077 = vmatpush.msra.mxu0 %v1987
        %3078 = vmatpush.msra.mxu0 %v1986
        %3079 = vmatpush.msra.mxu0 %v1985
        %3080 = vmatpush.msra.mxu0 %v1984
        %3081 = vmatpush.msra.mxu0 %v1983
        %3082 = vmatpush.msra.mxu0 %v1982
        %3083 = vmatpush.msra.mxu0 %v1981
        %3084 = vmatpush.msra.mxu0 %v1980
        %3085 = vmatpush.msra.mxu0 %v1979
        %3086 = vmatpush.msra.mxu0 %v1978
        %3087 = vmatpush.msra.mxu0 %v1977
        %3088 = vmatpush.msra.mxu0 %v1976
        %3089 = vmatmul.f32.gmra.mxu0 %v3071
        %v3090 = vpop.f32.mrf.mxu0
        %v3091 = vadd.f32 0.0, %v3090
        %3092 = vdwg.mxu0
        %v3094 = vrot.slane %v3091, 3
        %v3095 = vrot.slane %v3091, 4
        %v3096 = vrot.slane %v3091, 5
        %v3097 = vrot.slane %v3091, 6
        %v3098 = vrot.slane %v3091, 7
        %v3099 = vrot.slane %v3091, 1
        %v3100 = vrot.slane %v3091, 2
        %v3109 = vadd.f32 %v1931, %v3094
        %v3110 = vadd.f32 %v1937, %v3095
        %v3111 = vadd.f32 %v1943, %v3096
        %v3112 = vadd.f32 %v1949, %v3097
        %v3113 = vadd.f32 %v1955, %v3098
        %v3114 = vadd.f32 %v1961, %v3091
        %v3115 = vadd.f32 %v1967, %v3099
        %v3116 = vadd.f32 %v1973, %v3100
        %v3117 = vtanh.pop %v3109
        %v3118 = vtanh.pop %v3110
        %v3119 = vtanh.pop %v3111
        %v3120 = vtanh.pop %v3112
        %v3121 = vtanh.pop %v3113
        %v3122 = vtanh.pop %v3114
        %v3123 = vtanh.pop %v3115
        %v3124 = vtanh.pop %v3116
        %3125 = vst [vmem:[%s405 + $0x8] sm:$0x20] %v3117
        %3126 = vst [vmem:[%s405 + $0x18] sm:$0x20] %v3118
        %3127 = vst [vmem:[%s405 + $0x28] sm:$0x20] %v3119
        %3128 = vst [vmem:[%s405 + $0x38] sm:$0x20] %v3120
        %3129 = vst [vmem:[%s405 + $0x48] sm:$0x20] %v3121
        %3130 = vst [vmem:[%s405 + $0x58] sm:$0x20] %v3122
        %3131 = vst [vmem:[%s405 + $0x68] sm:$0x20] %v3123
        %3132 = vst [vmem:[%s405 + $0x78] sm:$0x20] %v3124
        %v3141 = vrot.slane %v3117, 5
        %v3142 = vrot.slane %v3118, 4
        %v3143 = vsel %vm605, %v3142, %v3141
        %v3144 = vrot.slane %v3119, 3
        %v3145 = vsel %vm608, %v3144, %v3143
        %v3146 = vrot.slane %v3120, 2
        %v3147 = vsel %vm611, %v3146, %v3145
        %v3148 = vrot.slane %v3121, 1
        %v3149 = vsel %vm614, %v3148, %v3147
        %v3150 = vsel %vm617, %v3122, %v3149
        %v3151 = vrot.slane %v3123, 7
        %v3152 = vsel %vm620, %v3151, %v3150
        %v3153 = vrot.slane %v3124, 6
        %v3154 = vsel %vm623, %v3153, %v3152
        %3156 = vmatpush.msra.mxu0 %v1991
        %3157 = vmatpush.msra.mxu0 %v1990
        %3158 = vmatpush.msra.mxu0 %v1989
        %3159 = vmatpush.msra.mxu0 %v1988
        %3160 = vmatpush.msra.mxu0 %v1987
        %3161 = vmatpush.msra.mxu0 %v1986
        %3162 = vmatpush.msra.mxu0 %v1985
        %3163 = vmatpush.msra.mxu0 %v1984
        %3164 = vmatpush.msra.mxu0 %v1983
        %3165 = vmatpush.msra.mxu0 %v1982
        %3166 = vmatpush.msra.mxu0 %v1981
        %3167 = vmatpush.msra.mxu0 %v1980
        %3168 = vmatpush.msra.mxu0 %v1979
        %3169 = vmatpush.msra.mxu0 %v1978
        %3170 = vmatpush.msra.mxu0 %v1977
        %3171 = vmatpush.msra.mxu0 %v1976
        %3172 = vmatmul.f32.gmra.mxu0 %v3154
        %v3173 = vpop.f32.mrf.mxu0
        %v3174 = vadd.f32 0.0, %v3173
        %3175 = vdwg.mxu0
        %v3177 = vrot.slane %v3174, 2
        %v3178 = vrot.slane %v3174, 3
        %v3179 = vrot.slane %v3174, 4
        %v3180 = vrot.slane %v3174, 5
        %v3181 = vrot.slane %v3174, 6
        %v3182 = vrot.slane %v3174, 7
        %v3183 = vrot.slane %v3174, 1
        %v3192 = vadd.f32 %v1931, %v3177
        %v3193 = vadd.f32 %v1937, %v3178
        %v3194 = vadd.f32 %v1943, %v3179
        %v3195 = vadd.f32 %v1949, %v3180
        %v3196 = vadd.f32 %v1955, %v3181
        %v3197 = vadd.f32 %v1961, %v3182
        %v3198 = vadd.f32 %v1967, %v3174
        %v3199 = vadd.f32 %v1973, %v3183
        %v3200 = vtanh.pop %v3192
        %v3201 = vtanh.pop %v3193
        %v3202 = vtanh.pop %v3194
        %v3203 = vtanh.pop %v3195
        %v3204 = vtanh.pop %v3196
        %v3205 = vtanh.pop %v3197
        %v3206 = vtanh.pop %v3198
        %v3207 = vtanh.pop %v3199
        %3208 = vst [vmem:[%s405 + $0x8] sm:$0x40] %v3200
        %3209 = vst [vmem:[%s405 + $0x18] sm:$0x40] %v3201
        %3210 = vst [vmem:[%s405 + $0x28] sm:$0x40] %v3202
        %3211 = vst [vmem:[%s405 + $0x38] sm:$0x40] %v3203
        %3212 = vst [vmem:[%s405 + $0x48] sm:$0x40] %v3204
        %3213 = vst [vmem:[%s405 + $0x58] sm:$0x40] %v3205
        %3214 = vst [vmem:[%s405 + $0x68] sm:$0x40] %v3206
        %3215 = vst [vmem:[%s405 + $0x78] sm:$0x40] %v3207
        %v3224 = vrot.slane %v3200, 6
        %v3225 = vrot.slane %v3201, 5
        %v3226 = vsel %vm605, %v3225, %v3224
        %v3227 = vrot.slane %v3202, 4
        %v3228 = vsel %vm608, %v3227, %v3226
        %v3229 = vrot.slane %v3203, 3
        %v3230 = vsel %vm611, %v3229, %v3228
        %v3231 = vrot.slane %v3204, 2
        %v3232 = vsel %vm614, %v3231, %v3230
        %v3233 = vrot.slane %v3205, 1
        %v3234 = vsel %vm617, %v3233, %v3232
        %v3235 = vsel %vm620, %v3206, %v3234
        %v3236 = vrot.slane %v3207, 7
        %v3237 = vsel %vm623, %v3236, %v3235
        %3239 = vmatpush.msra.mxu0 %v1991
        %3240 = vmatpush.msra.mxu0 %v1990
        %3241 = vmatpush.msra.mxu0 %v1989
        %3242 = vmatpush.msra.mxu0 %v1988
        %3243 = vmatpush.msra.mxu0 %v1987
        %3244 = vmatpush.msra.mxu0 %v1986
        %3245 = vmatpush.msra.mxu0 %v1985
        %3246 = vmatpush.msra.mxu0 %v1984
        %3247 = vmatpush.msra.mxu0 %v1983
        %3248 = vmatpush.msra.mxu0 %v1982
        %3249 = vmatpush.msra.mxu0 %v1981
        %3250 = vmatpush.msra.mxu0 %v1980
        %3251 = vmatpush.msra.mxu0 %v1979
        %3252 = vmatpush.msra.mxu0 %v1978
        %3253 = vmatpush.msra.mxu0 %v1977
        %3254 = vmatpush.msra.mxu0 %v1976
        %3255 = vmatmul.f32.gmra.mxu0 %v3237
        %v3256 = vpop.f32.mrf.mxu0
        %v3257 = vadd.f32 0.0, %v3256
        %3258 = vdwg.mxu0
        %v3260 = vrot.slane %v3257, 1
        %v3261 = vrot.slane %v3257, 2
        %v3262 = vrot.slane %v3257, 3
        %v3263 = vrot.slane %v3257, 4
        %v3264 = vrot.slane %v3257, 5
        %v3265 = vrot.slane %v3257, 6
        %v3266 = vrot.slane %v3257, 7
        %v3275 = vadd.f32 %v1931, %v3260
        %v3276 = vadd.f32 %v1937, %v3261
        %v3277 = vadd.f32 %v1943, %v3262
        %v3278 = vadd.f32 %v1949, %v3263
        %v3279 = vadd.f32 %v1955, %v3264
        %v3280 = vadd.f32 %v1961, %v3265
        %v3281 = vadd.f32 %v1967, %v3266
        %v3282 = vadd.f32 %v1973, %v3257
        %v3283 = vtanh.pop %v3275
        %v3284 = vtanh.pop %v3276
        %v3285 = vtanh.pop %v3277
        %v3286 = vtanh.pop %v3278
        %v3287 = vtanh.pop %v3279
        %v3288 = vtanh.pop %v3280
        %v3289 = vtanh.pop %v3281
        %v3290 = vtanh.pop %v3282
        %3291 = vst [vmem:[%s405 + $0x8] sm:$0x80] %v3283
        %3292 = vst [vmem:[%s405 + $0x18] sm:$0x80] %v3284
        %3293 = vst [vmem:[%s405 + $0x28] sm:$0x80] %v3285
        %3294 = vst [vmem:[%s405 + $0x38] sm:$0x80] %v3286
        %3295 = vst [vmem:[%s405 + $0x48] sm:$0x80] %v3287
        %3296 = vst [vmem:[%s405 + $0x58] sm:$0x80] %v3288
        %3297 = vst [vmem:[%s405 + $0x68] sm:$0x80] %v3289
        %3298 = vst [vmem:[%s405 + $0x78] sm:$0x80] %v3290
        %v3307 = vrot.slane %v3284, 7
        %v3308 = vrot.slane %v3285, 6
        %v3309 = vsel %vm605, %v3308, %v3307
        %v3310 = vrot.slane %v3286, 5
        %v3311 = vsel %vm608, %v3310, %v3309
        %v3312 = vrot.slane %v3287, 4
        %v3313 = vsel %vm611, %v3312, %v3311
        %v3314 = vrot.slane %v3288, 3
        %v3315 = vsel %vm614, %v3314, %v3313
        %v3316 = vrot.slane %v3289, 2
        %v3317 = vsel %vm617, %v3316, %v3315
        %v3318 = vrot.slane %v3290, 1
        %v3319 = vsel %vm620, %v3318, %v3317
        %3322 = vst [vmem:[%s1992 - $0x7] sm:$0x80] %v3283
        %3323 = vst [vmem:[%s1992 + $0x1] sm:$0x7f] %v3319
        %s3324 = sand.u32 %s187, 1
        %s3325 = scalar_lea.sflag [#allocation7], %s3324
        %s3326 = sand.u32 %s187, 1
        %s3327 = smul.addr %s3326, 128
        %s3328 = scalar_lea.vmem [#allocation14], %s3327
        // Predicated region
        $region69: #{tpu_custom_call.1} parent=43 // pred_check
          %p3329 = pneg %p197
        $region70: #{tpu_custom_call.1} parent=43 // pred_check_branch
          %3331 = sbr.rel (%p3329) target = $region72
        $region71: #{tpu_custom_call.1} parent=43 // pred_region
          #allocation18 [shape = 'u32[6]{0}', space=smem, size = 0x18, scoped, tag = 'DMA stride descriptor']
          %s3332 = smul.u32 8, %s31
          %s3333 = smul.u32 2, %s32
          %3335 = vsyncadd %s3325, 0
          %s3336 = smul.addr %s3332, 6
          %s3337 = sadd.s32 %s3333, %s3336
          %s3338 = smul.addr %s3337, 8
          %s3339 = scalar_lea.hbm %s6, %s3338
          %s3341 = sshll.u32 1, 14
          %s3342 = sxor.u32 4294967295, %s3341
          %s3345 = sshll.u32 7, 18
          %s3346 = sxor.u32 4294967295, %s3345
          %s3347 = sand.u32 0, %s3346
          %s3349 = sor.u32 %s3347, 0
          %s3350 = sshll.u32 %s3328, 4
          %s3351 = int_to_ptr.vmem [resolvable:$true] %s3350
          %s3352 = sshll.u32 %s3339, 4
          %s3353 = int_to_ptr.hbm [resolvable:$true] %s3352
          %3359 = sst [smem:[#allocation18]] 256
          %s3360 = scalar_lea.smem [#allocation18], 1
          %3361 = sst [smem:[%s3360]] 768
          %s3362 = scalar_lea.smem [#allocation18], 2
          %3363 = sst [smem:[%s3362]] 2
          %s3364 = scalar_lea.smem [#allocation18], 3
          %3365 = sst [smem:[%s3364]] 128
          %s3366 = scalar_lea.smem [#allocation18], 4
          %3367 = sst [smem:[%s3366]] 128
          %s3368 = scalar_lea.smem [#allocation18], 5
          %3369 = sst [smem:[%s3368]] 8
          %3371 = dma.general %s3351, 2048, %s3353, %s3325, [#allocation17], [#allocation18], %s3349, 0
        $region72: #{tpu_custom_call.1} parent=43 // pred_fallthru
          _
      $region44: #{tpu_custom_call.1} parent=5 // pred_fallthru
        _
      %p3372 = scmp.le.s32.totalorder 2, %s22
      // Predicated region
      $region73: #{tpu_custom_call.1} parent=5 // pred_check
        %p3373 = pneg %p3372
      $region74: #{tpu_custom_call.1} parent=5 // pred_check_branch
        %3375 = sbr.rel (%p3373) target = $region76
      $region75: #{tpu_custom_call.1} parent=5 // pred_region
        %s3376 = ssub.s32 %s22, 2
        // Predicated region
        $region77: #{tpu_custom_call.1} parent=75 // pred_check
          %p3377 = pneg %p203
        $region78: #{tpu_custom_call.1} parent=75 // pred_check_branch
          %3379 = sbr.rel (%p3377) target = $region80
        $region79: #{tpu_custom_call.1} parent=75 // pred_region
          %s3380 = sand.u32 %s188, 1
          %s3381 = scalar_lea.sflag [#allocation7], %s3380
          %s3382 = sand.u32 %s188, 1
          %s3383 = smul.addr %s3382, 128
          %s3384 = scalar_lea.vmem [#allocation14], %s3383
          %3386 = dma.done %s3381, 2048
        $region80: #{tpu_custom_call.1} parent=75 // pred_fallthru
          _
      $region76: #{tpu_custom_call.1} parent=5 // pred_fallthru
        _
    $region6: #{tpu_custom_call.1} parent=1 // loop_footer
      %s26 = sadd.s32 1, %s22
    $region7: #{tpu_custom_call.1} parent=1 // loop_footer_branch
      %21 = sbr.rel target = $region3
    $region8: #{tpu_custom_call.1} parent=1 // loop_exit
      _
    %3387 = vsyncpa [#allocation6], 1
    %s3388 = scalar_lea.sflag [#allocation6], 1
    %3389 = vsyncpa %s3388, 1
    %3390 = vsyncpa [#allocation9], 1
    %s3391 = scalar_lea.sflag [#allocation9], 1
    %3392 = vsyncpa %s3391, 1
    %3393 = vsyncpa [#allocation12], 1
    %3394 = vsyncpa [#allocation7], 1
    %s3395 = scalar_lea.sflag [#allocation7], 1
    %3396 = vsyncpa %s3395, 1

</llo_original>
